<compile_context>
chip_gen: v7x
topology: tpu7x:2x2x1
jax: 0.10.0
libtpu: 0.0.40
codegen_flags: <defaults>
</compile_context>

<pallas_src>
import jax
import jax.numpy as jnp
from jax import lax
from jax.experimental import pallas as pl
from jax.experimental.pallas import tpu as pltpu

EPS = 1e-5  # BatchNorm3d default


def conv_stats_kernel(x0_ref, x1_ref, x2_ref, w_ref, y_ref, stats_ref):
    """One (n, d) output depth-plane per grid step.

    x0/x1/x2_ref : (1, 1, H+2, W+2, Cin) bf16 -- padded depth slabs d, d+1, d+2
    w_ref        : (27, Cin, Cout)       bf16 -- conv weights, tap order (kd, kh, kw)
    y_ref        : (1, 1, H*W, Cout)     f32  -- raw conv output tile
    stats_ref    : (1, 1, 2, Cout)       f32  -- per-tile per-channel [sum, sum_of_squares]
    """
    Hp, Wp, Cin = x0_ref.shape[2], x0_ref.shape[3], x0_ref.shape[4]
    HW, Cout = y_ref.shape[2], y_ref.shape[3]
    H, W = Hp - 2, Wp - 2

    # Load the three halo'd slabs once; all 27 taps are sliced from VMEM-resident values.
    slabs = (x0_ref[0, 0], x1_ref[0, 0], x2_ref[0, 0])  # each (H+2, W+2, Cin) bf16

    acc = jnp.zeros((HW, Cout), jnp.float32)
    t = 0
    for kd in range(3):
        slab = slabs[kd]
        for kh in range(3):
            for kw in range(3):
                patch = slab[kh:kh + H, kw:kw + W, :].reshape(HW, Cin)
                acc = acc + jnp.dot(
                    patch, w_ref[t], preferred_element_type=jnp.float32
                )
                t += 1

    # Raw conv output for this tile.
    y_ref[...] = acc.reshape(1, 1, HW, Cout)

    # Fused per-tile BN statistics (kept O(Cout) in VMEM; reduced across tiles in JAX).
    s1 = jnp.sum(acc, axis=0, keepdims=True)        # (1, Cout)
    s2 = jnp.sum(acc * acc, axis=0, keepdims=True)  # (1, Cout)
    stats_ref[...] = jnp.concatenate([s1, s2], axis=0).reshape(1, 1, 2, Cout)


def bn_apply_kernel(y_ref, scale_ref, shift_ref, o_ref):
    """Lane-dense normalize: out = y * scale + shift (per-channel constants pre-folded)."""
    o_ref[...] = y_ref[...] * scale_ref[...] + shift_ref[...]


def conv_bn_3d(x_ncdhw, weight_oidhw, gamma, beta, *, stride=1, pad=1, eps=EPS):
    """ConvBn3D forward. x: (N, Cin, D, H, W), weight: (Cout, Cin, 3, 3, 3). Returns NCDHW."""
    assert stride == 1 and pad == 1, "kernel implemented for module defaults (stride=1, pad=1)"
    N, Cin, D, H, W = x_ncdhw.shape
    Cout, Cin_w, KD, KH, KW = weight_oidhw.shape
    assert Cin == Cin_w and (KD, KH, KW) == (3, 3, 3)

    HW = H * W
    M = N * D * HW
    Hp, Wp = H + 2 * pad, W + 2 * pad

    # ---- glue: channels-last layout + spatial padding; bf16 compute dtype for the MXU ----
    x_cl = jnp.transpose(x_ncdhw, (0, 2, 3, 4, 1))                       # (N, D, H, W, Cin)
    x_pad = jnp.pad(
        x_cl, ((0, 0), (pad, pad), (pad, pad), (pad, pad), (0, 0))
    ).astype(jnp.bfloat16)                                               # (N, D+2, H+2, W+2, Cin)
    w_taps = jnp.transpose(weight_oidhw, (2, 3, 4, 1, 0)).reshape(
        27, Cin, Cout
    ).astype(jnp.bfloat16)                                               # (27, Cin, Cout)

    def x_spec(kd):
        # block size 1 along the padded depth axis => block index == element index (d + kd)
        return pl.BlockSpec(
            (1, 1, Hp, Wp, Cin), lambda n, d, kd=kd: (n, d + kd, 0, 0, 0)
        )

    # ---- pass 1: conv (27 taps from VMEM-resident slabs) + per-tile BN partial sums ----
    y, stats = pl.pallas_call(
        conv_stats_kernel,
        out_shape=(
            jax.ShapeDtypeStruct((N, D, HW, Cout), jnp.float32),
            jax.ShapeDtypeStruct((N, D, 2, Cout), jnp.float32),
        ),
        grid_spec=pltpu.PrefetchScalarGridSpec(
            num_scalar_prefetch=0,
            grid=(N, D),
            in_specs=[
                x_spec(0), x_spec(1), x_spec(2),
                pl.BlockSpec((27, Cin, Cout), lambda n, d: (0, 0, 0)),
            ],
            out_specs=(
                pl.BlockSpec((1, 1, HW, Cout), lambda n, d: (n, d, 0, 0)),
                pl.BlockSpec((1, 1, 2, Cout), lambda n, d: (n, d, 0, 0)),
            ),
        ),
        compiler_params=pltpu.CompilerParams(
            dimension_semantics=("parallel", "parallel"),
        ),
    )(x_pad, x_pad, x_pad, w_taps)

    # ---- tiny cross-tile reduction + fold gamma/beta into per-channel constants (f32) ----
    total = jnp.sum(stats, axis=(0, 1))                    # (2, Cout)
    mean = total[0] / M
    var = jnp.maximum(total[1] / M - mean * mean, 0.0)     # biased variance (training-mode BN)
    inv = lax.rsqrt(var + eps)
    scale = gamma.astype(jnp.float32) * inv                # (Cout,)
    shift = beta.astype(jnp.float32) - mean * scale        # (Cout,)

    # ---- pass 2: lane-dense elementwise normalize ----
    HWC = HW * Cout
    y_rows = y.reshape(N, D, HWC)
    scale_row = jnp.tile(scale, HW).reshape(1, 1, HWC)
    shift_row = jnp.tile(shift, HW).reshape(1, 1, HWC)

    out_rows = pl.pallas_call(
        bn_apply_kernel,
        out_shape=jax.ShapeDtypeStruct((N, D, HWC), jnp.float32),
        grid_spec=pltpu.PrefetchScalarGridSpec(
            num_scalar_prefetch=0,
            grid=(N,),
            in_specs=[
                pl.BlockSpec((1, D, HWC), lambda n: (n, 0, 0)),
                pl.BlockSpec((1, 1, HWC), lambda n: (0, 0, 0)),
                pl.BlockSpec((1, 1, HWC), lambda n: (0, 0, 0)),
            ],
            out_specs=pl.BlockSpec((1, D, HWC), lambda n: (n, 0, 0)),
        ),
        compiler_params=pltpu.CompilerParams(
            dimension_semantics=("parallel",),
        ),
    )(y_rows, scale_row, shift_row)

    # back to PyTorch NCDHW layout
    out = out_rows.reshape(N, D, H, W, Cout)
    return jnp.transpose(out, (0, 4, 1, 2, 3))


def reference_conv_bn_3d(x, w, gamma, beta, *, pad=1, eps=EPS):
    """Pure-JAX reference (lax conv with f32 accumulation + training-mode batchnorm)."""
    y = lax.conv_general_dilated(
        x, w,
        window_strides=(1, 1, 1),
        padding=[(pad, pad)] * 3,
        dimension_numbers=("NCDHW", "OIDHW", "NCDHW"),
        preferred_element_type=jnp.float32,
    )
    mean = jnp.mean(y, axis=(0, 2, 3, 4), keepdims=True)
    var = jnp.mean((y - mean) ** 2, axis=(0, 2, 3, 4), keepdims=True)
    g = gamma.reshape(1, -1, 1, 1, 1)
    b = beta.reshape(1, -1, 1, 1, 1)
    return (y - mean) * lax.rsqrt(var + eps) * g + b


if __name__ == "__main__":
    key = jax.random.PRNGKey(0)
    k_x, k_w, k_g, k_b = jax.random.split(key, 4)

    N, Cin, Cout = 2, 4, 8
    D = H = W = 8

    x = jax.random.normal(k_x, (N, Cin, D, H, W), dtype=jnp.float32)
    # Conv3d weight: (out_channels, in_channels, 3, 3, 3), bias=False
    weight = 0.1 * jax.random.normal(k_w, (Cout, Cin, 3, 3, 3), dtype=jnp.float32)
    # BatchNorm3d affine params
    gamma = 1.0 + 0.1 * jax.random.normal(k_g, (Cout,), dtype=jnp.float32)
    beta = 0.1 * jax.random.normal(k_b, (Cout,), dtype=jnp.float32)

    out = conv_bn_3d(x, weight, gamma, beta)
    out = jax.block_until_ready(out)

    # Reference on the same bf16-rounded operands (kernel casts x/w to bf16 for the MXU but
    # accumulates in f32), so the only residual difference is f32 summation order.
    x_r = x.astype(jnp.bfloat16).astype(jnp.float32)
    w_r = weight.astype(jnp.bfloat16).astype(jnp.float32)
    ref = reference_conv_bn_3d(x_r, w_r, gamma, beta)

    assert out.shape == (N, Cout, D, H, W), out.shape
    err = float(jnp.max(jnp.abs(out - ref)))
    assert jnp.allclose(out, ref, rtol=1e-3, atol=1e-3), err

    print("KERNEL_OK")
</pallas_src>

<mosaic_0001>
module attributes {stable_mosaic.version = 11 : i64} {
  func.func @conv_stats_kernel(%arg0: i32, %arg1: i32, %arg2: memref<1x1x10x10x4xbf16, #tpu.memory_space<vmem>>, %arg3: memref<1x1x10x10x4xbf16, #tpu.memory_space<vmem>>, %arg4: memref<1x1x10x10x4xbf16, #tpu.memory_space<vmem>>, %arg5: memref<27x4x8xbf16, #tpu.memory_space<vmem>>, %arg6: memref<1x1x64x8xf32, #tpu.memory_space<vmem>>, %arg7: memref<1x1x2x8xf32, #tpu.memory_space<vmem>>) attributes {dimension_semantics = [#tpu.dimension_semantics<parallel>, #tpu.dimension_semantics<parallel>], iteration_bounds = array<i64: 2, 8>, scalar_prefetch = 0 : i64, scratch_operands = 0 : i64, tpu.core_type = #tpu.core_type<tc>, window_params = [{transform_indices = @transform_0, window_bounds = array<i64: 1, 1, 10, 10, 4>}, {transform_indices = @transform_1, window_bounds = array<i64: 1, 1, 10, 10, 4>}, {transform_indices = @transform_2, window_bounds = array<i64: 1, 1, 10, 10, 4>}, {pipeline_mode = #tpu.pipeline_mode<synchronous>, transform_indices = @transform_3, window_bounds = array<i64: 27, 4, 8>}, {transform_indices = @transform_4, window_bounds = array<i64: 1, 1, 64, 8>}, {transform_indices = @transform_5, window_bounds = array<i64: 1, 1, 2, 8>}]} {
    %c0 = arith.constant 0 : index
    %c0_0 = arith.constant 0 : index
    %c0_1 = arith.constant 0 : index
    %c0_2 = arith.constant 0 : index
    %c0_3 = arith.constant 0 : index
    %0 = vector.load %arg2[%c0, %c0_0, %c0_1, %c0_2, %c0_3] : memref<1x1x10x10x4xbf16, #tpu.memory_space<vmem>>, vector<1x1x10x10x4xbf16>
    %1 = vector.shape_cast %0 : vector<1x1x10x10x4xbf16> to vector<10x10x4xbf16>
    %c0_4 = arith.constant 0 : index
    %c0_5 = arith.constant 0 : index
    %c0_6 = arith.constant 0 : index
    %c0_7 = arith.constant 0 : index
    %c0_8 = arith.constant 0 : index
    %2 = vector.load %arg3[%c0_4, %c0_5, %c0_6, %c0_7, %c0_8] : memref<1x1x10x10x4xbf16, #tpu.memory_space<vmem>>, vector<1x1x10x10x4xbf16>
    %3 = vector.shape_cast %2 : vector<1x1x10x10x4xbf16> to vector<10x10x4xbf16>
    %c0_9 = arith.constant 0 : index
    %c0_10 = arith.constant 0 : index
    %c0_11 = arith.constant 0 : index
    %c0_12 = arith.constant 0 : index
    %c0_13 = arith.constant 0 : index
    %4 = vector.load %arg4[%c0_9, %c0_10, %c0_11, %c0_12, %c0_13] : memref<1x1x10x10x4xbf16, #tpu.memory_space<vmem>>, vector<1x1x10x10x4xbf16>
    %5 = vector.shape_cast %4 : vector<1x1x10x10x4xbf16> to vector<10x10x4xbf16>
    %cst = arith.constant 0.000000e+00 : f32
    %6 = vector.broadcast %cst : f32 to vector<64x8xf32>
    %7 = vector.extract_strided_slice %1 {offsets = [0, 0, 0], sizes = [8, 8, 4], strides = [1, 1, 1]} : vector<10x10x4xbf16> to vector<8x8x4xbf16>
    %8 = vector.shape_cast %7 : vector<8x8x4xbf16> to vector<64x4xbf16>
    %c0_14 = arith.constant 0 : index
    %c0_15 = arith.constant 0 : index
    %c0_16 = arith.constant 0 : index
    %9 = vector.load %arg5[%c0_14, %c0_15, %c0_16] : memref<27x4x8xbf16, #tpu.memory_space<vmem>>, vector<1x4x8xbf16>
    %10 = vector.shape_cast %9 : vector<1x4x8xbf16> to vector<4x8xbf16>
    %cst_17 = arith.constant dense<0.000000e+00> : vector<64x8xf32>
    %11 = tpu.matmul %8, %10, %cst_17 {dimension_numbers = #tpu.dot_dimension_numbers<[1], [0], [0], [1], [0, 0, 1, 1], [], []>} : vector<64x4xbf16>, vector<4x8xbf16>, vector<64x8xf32> -> vector<64x8xf32>
    %12 = arith.addf %6, %11 : vector<64x8xf32>
    %13 = vector.extract_strided_slice %1 {offsets = [0, 1, 0], sizes = [8, 8, 4], strides = [1, 1, 1]} : vector<10x10x4xbf16> to vector<8x8x4xbf16>
    %14 = vector.shape_cast %13 : vector<8x8x4xbf16> to vector<64x4xbf16>
    %c1 = arith.constant 1 : index
    %c0_18 = arith.constant 0 : index
    %c0_19 = arith.constant 0 : index
    %15 = vector.load %arg5[%c1, %c0_18, %c0_19] : memref<27x4x8xbf16, #tpu.memory_space<vmem>>, vector<1x4x8xbf16>
    %16 = vector.shape_cast %15 : vector<1x4x8xbf16> to vector<4x8xbf16>
    %cst_20 = arith.constant dense<0.000000e+00> : vector<64x8xf32>
    %17 = tpu.matmul %14, %16, %cst_20 {dimension_numbers = #tpu.dot_dimension_numbers<[1], [0], [0], [1], [0, 0, 1, 1], [], []>} : vector<64x4xbf16>, vector<4x8xbf16>, vector<64x8xf32> -> vector<64x8xf32>
    %18 = arith.addf %12, %17 : vector<64x8xf32>
    %19 = vector.extract_strided_slice %1 {offsets = [0, 2, 0], sizes = [8, 8, 4], strides = [1, 1, 1]} : vector<10x10x4xbf16> to vector<8x8x4xbf16>
    %20 = vector.shape_cast %19 : vector<8x8x4xbf16> to vector<64x4xbf16>
    %c2 = arith.constant 2 : index
    %c0_21 = arith.constant 0 : index
    %c0_22 = arith.constant 0 : index
    %21 = vector.load %arg5[%c2, %c0_21, %c0_22] : memref<27x4x8xbf16, #tpu.memory_space<vmem>>, vector<1x4x8xbf16>
    %22 = vector.shape_cast %21 : vector<1x4x8xbf16> to vector<4x8xbf16>
    %cst_23 = arith.constant dense<0.000000e+00> : vector<64x8xf32>
    %23 = tpu.matmul %20, %22, %cst_23 {dimension_numbers = #tpu.dot_dimension_numbers<[1], [0], [0], [1], [0, 0, 1, 1], [], []>} : vector<64x4xbf16>, vector<4x8xbf16>, vector<64x8xf32> -> vector<64x8xf32>
    %24 = arith.addf %18, %23 : vector<64x8xf32>
    %25 = vector.extract_strided_slice %1 {offsets = [1, 0, 0], sizes = [8, 8, 4], strides = [1, 1, 1]} : vector<10x10x4xbf16> to vector<8x8x4xbf16>
    %26 = vector.shape_cast %25 : vector<8x8x4xbf16> to vector<64x4xbf16>
    %c3 = arith.constant 3 : index
    %c0_24 = arith.constant 0 : index
    %c0_25 = arith.constant 0 : index
    %27 = vector.load %arg5[%c3, %c0_24, %c0_25] : memref<27x4x8xbf16, #tpu.memory_space<vmem>>, vector<1x4x8xbf16>
    %28 = vector.shape_cast %27 : vector<1x4x8xbf16> to vector<4x8xbf16>
    %cst_26 = arith.constant dense<0.000000e+00> : vector<64x8xf32>
    %29 = tpu.matmul %26, %28, %cst_26 {dimension_numbers = #tpu.dot_dimension_numbers<[1], [0], [0], [1], [0, 0, 1, 1], [], []>} : vector<64x4xbf16>, vector<4x8xbf16>, vector<64x8xf32> -> vector<64x8xf32>
    %30 = arith.addf %24, %29 : vector<64x8xf32>
    %31 = vector.extract_strided_slice %1 {offsets = [1, 1, 0], sizes = [8, 8, 4], strides = [1, 1, 1]} : vector<10x10x4xbf16> to vector<8x8x4xbf16>
    %32 = vector.shape_cast %31 : vector<8x8x4xbf16> to vector<64x4xbf16>
    %c4 = arith.constant 4 : index
    %c0_27 = arith.constant 0 : index
    %c0_28 = arith.constant 0 : index
    %33 = vector.load %arg5[%c4, %c0_27, %c0_28] : memref<27x4x8xbf16, #tpu.memory_space<vmem>>, vector<1x4x8xbf16>
    %34 = vector.shape_cast %33 : vector<1x4x8xbf16> to vector<4x8xbf16>
    %cst_29 = arith.constant dense<0.000000e+00> : vector<64x8xf32>
    %35 = tpu.matmul %32, %34, %cst_29 {dimension_numbers = #tpu.dot_dimension_numbers<[1], [0], [0], [1], [0, 0, 1, 1], [], []>} : vector<64x4xbf16>, vector<4x8xbf16>, vector<64x8xf32> -> vector<64x8xf32>
    %36 = arith.addf %30, %35 : vector<64x8xf32>
    %37 = vector.extract_strided_slice %1 {offsets = [1, 2, 0], sizes = [8, 8, 4], strides = [1, 1, 1]} : vector<10x10x4xbf16> to vector<8x8x4xbf16>
    %38 = vector.shape_cast %37 : vector<8x8x4xbf16> to vector<64x4xbf16>
    %c5 = arith.constant 5 : index
    %c0_30 = arith.constant 0 : index
    %c0_31 = arith.constant 0 : index
    %39 = vector.load %arg5[%c5, %c0_30, %c0_31] : memref<27x4x8xbf16, #tpu.memory_space<vmem>>, vector<1x4x8xbf16>
    %40 = vector.shape_cast %39 : vector<1x4x8xbf16> to vector<4x8xbf16>
    %cst_32 = arith.constant dense<0.000000e+00> : vector<64x8xf32>
    %41 = tpu.matmul %38, %40, %cst_32 {dimension_numbers = #tpu.dot_dimension_numbers<[1], [0], [0], [1], [0, 0, 1, 1], [], []>} : vector<64x4xbf16>, vector<4x8xbf16>, vector<64x8xf32> -> vector<64x8xf32>
    %42 = arith.addf %36, %41 : vector<64x8xf32>
    %43 = vector.extract_strided_slice %1 {offsets = [2, 0, 0], sizes = [8, 8, 4], strides = [1, 1, 1]} : vector<10x10x4xbf16> to vector<8x8x4xbf16>
    %44 = vector.shape_cast %43 : vector<8x8x4xbf16> to vector<64x4xbf16>
    %c6 = arith.constant 6 : index
    %c0_33 = arith.constant 0 : index
    %c0_34 = arith.constant 0 : index
    %45 = vector.load %arg5[%c6, %c0_33, %c0_34] : memref<27x4x8xbf16, #tpu.memory_space<vmem>>, vector<1x4x8xbf16>
    %46 = vector.shape_cast %45 : vector<1x4x8xbf16> to vector<4x8xbf16>
    %cst_35 = arith.constant dense<0.000000e+00> : vector<64x8xf32>
    %47 = tpu.matmul %44, %46, %cst_35 {dimension_numbers = #tpu.dot_dimension_numbers<[1], [0], [0], [1], [0, 0, 1, 1], [], []>} : vector<64x4xbf16>, vector<4x8xbf16>, vector<64x8xf32> -> vector<64x8xf32>
    %48 = arith.addf %42, %47 : vector<64x8xf32>
    %49 = vector.extract_strided_slice %1 {offsets = [2, 1, 0], sizes = [8, 8, 4], strides = [1, 1, 1]} : vector<10x10x4xbf16> to vector<8x8x4xbf16>
    %50 = vector.shape_cast %49 : vector<8x8x4xbf16> to vector<64x4xbf16>
    %c7 = arith.constant 7 : index
    %c0_36 = arith.constant 0 : index
    %c0_37 = arith.constant 0 : index
    %51 = vector.load %arg5[%c7, %c0_36, %c0_37] : memref<27x4x8xbf16, #tpu.memory_space<vmem>>, vector<1x4x8xbf16>
    %52 = vector.shape_cast %51 : vector<1x4x8xbf16> to vector<4x8xbf16>
    %cst_38 = arith.constant dense<0.000000e+00> : vector<64x8xf32>
    %53 = tpu.matmul %50, %52, %cst_38 {dimension_numbers = #tpu.dot_dimension_numbers<[1], [0], [0], [1], [0, 0, 1, 1], [], []>} : vector<64x4xbf16>, vector<4x8xbf16>, vector<64x8xf32> -> vector<64x8xf32>
    %54 = arith.addf %48, %53 : vector<64x8xf32>
    %55 = vector.extract_strided_slice %1 {offsets = [2, 2, 0], sizes = [8, 8, 4], strides = [1, 1, 1]} : vector<10x10x4xbf16> to vector<8x8x4xbf16>
    %56 = vector.shape_cast %55 : vector<8x8x4xbf16> to vector<64x4xbf16>
    %c8 = arith.constant 8 : index
    %c0_39 = arith.constant 0 : index
    %c0_40 = arith.constant 0 : index
    %57 = vector.load %arg5[%c8, %c0_39, %c0_40] : memref<27x4x8xbf16, #tpu.memory_space<vmem>>, vector<1x4x8xbf16>
    %58 = vector.shape_cast %57 : vector<1x4x8xbf16> to vector<4x8xbf16>
    %cst_41 = arith.constant dense<0.000000e+00> : vector<64x8xf32>
    %59 = tpu.matmul %56, %58, %cst_41 {dimension_numbers = #tpu.dot_dimension_numbers<[1], [0], [0], [1], [0, 0, 1, 1], [], []>} : vector<64x4xbf16>, vector<4x8xbf16>, vector<64x8xf32> -> vector<64x8xf32>
    %60 = arith.addf %54, %59 : vector<64x8xf32>
    %61 = vector.extract_strided_slice %3 {offsets = [0, 0, 0], sizes = [8, 8, 4], strides = [1, 1, 1]} : vector<10x10x4xbf16> to vector<8x8x4xbf16>
    %62 = vector.shape_cast %61 : vector<8x8x4xbf16> to vector<64x4xbf16>
    %c9 = arith.constant 9 : index
    %c0_42 = arith.constant 0 : index
    %c0_43 = arith.constant 0 : index
    %63 = vector.load %arg5[%c9, %c0_42, %c0_43] : memref<27x4x8xbf16, #tpu.memory_space<vmem>>, vector<1x4x8xbf16>
    %64 = vector.shape_cast %63 : vector<1x4x8xbf16> to vector<4x8xbf16>
    %cst_44 = arith.constant dense<0.000000e+00> : vector<64x8xf32>
    %65 = tpu.matmul %62, %64, %cst_44 {dimension_numbers = #tpu.dot_dimension_numbers<[1], [0], [0], [1], [0, 0, 1, 1], [], []>} : vector<64x4xbf16>, vector<4x8xbf16>, vector<64x8xf32> -> vector<64x8xf32>
    %66 = arith.addf %60, %65 : vector<64x8xf32>
    %67 = vector.extract_strided_slice %3 {offsets = [0, 1, 0], sizes = [8, 8, 4], strides = [1, 1, 1]} : vector<10x10x4xbf16> to vector<8x8x4xbf16>
    %68 = vector.shape_cast %67 : vector<8x8x4xbf16> to vector<64x4xbf16>
    %c10 = arith.constant 10 : index
    %c0_45 = arith.constant 0 : index
    %c0_46 = arith.constant 0 : index
    %69 = vector.load %arg5[%c10, %c0_45, %c0_46] : memref<27x4x8xbf16, #tpu.memory_space<vmem>>, vector<1x4x8xbf16>
    %70 = vector.shape_cast %69 : vector<1x4x8xbf16> to vector<4x8xbf16>
    %cst_47 = arith.constant dense<0.000000e+00> : vector<64x8xf32>
    %71 = tpu.matmul %68, %70, %cst_47 {dimension_numbers = #tpu.dot_dimension_numbers<[1], [0], [0], [1], [0, 0, 1, 1], [], []>} : vector<64x4xbf16>, vector<4x8xbf16>, vector<64x8xf32> -> vector<64x8xf32>
    %72 = arith.addf %66, %71 : vector<64x8xf32>
    %73 = vector.extract_strided_slice %3 {offsets = [0, 2, 0], sizes = [8, 8, 4], strides = [1, 1, 1]} : vector<10x10x4xbf16> to vector<8x8x4xbf16>
    %74 = vector.shape_cast %73 : vector<8x8x4xbf16> to vector<64x4xbf16>
    %c11 = arith.constant 11 : index
    %c0_48 = arith.constant 0 : index
    %c0_49 = arith.constant 0 : index
    %75 = vector.load %arg5[%c11, %c0_48, %c0_49] : memref<27x4x8xbf16, #tpu.memory_space<vmem>>, vector<1x4x8xbf16>
    %76 = vector.shape_cast %75 : vector<1x4x8xbf16> to vector<4x8xbf16>
    %cst_50 = arith.constant dense<0.000000e+00> : vector<64x8xf32>
    %77 = tpu.matmul %74, %76, %cst_50 {dimension_numbers = #tpu.dot_dimension_numbers<[1], [0], [0], [1], [0, 0, 1, 1], [], []>} : vector<64x4xbf16>, vector<4x8xbf16>, vector<64x8xf32> -> vector<64x8xf32>
    %78 = arith.addf %72, %77 : vector<64x8xf32>
    %79 = vector.extract_strided_slice %3 {offsets = [1, 0, 0], sizes = [8, 8, 4], strides = [1, 1, 1]} : vector<10x10x4xbf16> to vector<8x8x4xbf16>
    %80 = vector.shape_cast %79 : vector<8x8x4xbf16> to vector<64x4xbf16>
    %c12 = arith.constant 12 : index
    %c0_51 = arith.constant 0 : index
    %c0_52 = arith.constant 0 : index
    %81 = vector.load %arg5[%c12, %c0_51, %c0_52] : memref<27x4x8xbf16, #tpu.memory_space<vmem>>, vector<1x4x8xbf16>
    %82 = vector.shape_cast %81 : vector<1x4x8xbf16> to vector<4x8xbf16>
    %cst_53 = arith.constant dense<0.000000e+00> : vector<64x8xf32>
    %83 = tpu.matmul %80, %82, %cst_53 {dimension_numbers = #tpu.dot_dimension_numbers<[1], [0], [0], [1], [0, 0, 1, 1], [], []>} : vector<64x4xbf16>, vector<4x8xbf16>, vector<64x8xf32> -> vector<64x8xf32>
    %84 = arith.addf %78, %83 : vector<64x8xf32>
    %85 = vector.extract_strided_slice %3 {offsets = [1, 1, 0], sizes = [8, 8, 4], strides = [1, 1, 1]} : vector<10x10x4xbf16> to vector<8x8x4xbf16>
    %86 = vector.shape_cast %85 : vector<8x8x4xbf16> to vector<64x4xbf16>
    %c13 = arith.constant 13 : index
    %c0_54 = arith.constant 0 : index
    %c0_55 = arith.constant 0 : index
    %87 = vector.load %arg5[%c13, %c0_54, %c0_55] : memref<27x4x8xbf16, #tpu.memory_space<vmem>>, vector<1x4x8xbf16>
    %88 = vector.shape_cast %87 : vector<1x4x8xbf16> to vector<4x8xbf16>
    %cst_56 = arith.constant dense<0.000000e+00> : vector<64x8xf32>
    %89 = tpu.matmul %86, %88, %cst_56 {dimension_numbers = #tpu.dot_dimension_numbers<[1], [0], [0], [1], [0, 0, 1, 1], [], []>} : vector<64x4xbf16>, vector<4x8xbf16>, vector<64x8xf32> -> vector<64x8xf32>
    %90 = arith.addf %84, %89 : vector<64x8xf32>
    %91 = vector.extract_strided_slice %3 {offsets = [1, 2, 0], sizes = [8, 8, 4], strides = [1, 1, 1]} : vector<10x10x4xbf16> to vector<8x8x4xbf16>
    %92 = vector.shape_cast %91 : vector<8x8x4xbf16> to vector<64x4xbf16>
    %c14 = arith.constant 14 : index
    %c0_57 = arith.constant 0 : index
    %c0_58 = arith.constant 0 : index
    %93 = vector.load %arg5[%c14, %c0_57, %c0_58] : memref<27x4x8xbf16, #tpu.memory_space<vmem>>, vector<1x4x8xbf16>
    %94 = vector.shape_cast %93 : vector<1x4x8xbf16> to vector<4x8xbf16>
    %cst_59 = arith.constant dense<0.000000e+00> : vector<64x8xf32>
    %95 = tpu.matmul %92, %94, %cst_59 {dimension_numbers = #tpu.dot_dimension_numbers<[1], [0], [0], [1], [0, 0, 1, 1], [], []>} : vector<64x4xbf16>, vector<4x8xbf16>, vector<64x8xf32> -> vector<64x8xf32>
    %96 = arith.addf %90, %95 : vector<64x8xf32>
    %97 = vector.extract_strided_slice %3 {offsets = [2, 0, 0], sizes = [8, 8, 4], strides = [1, 1, 1]} : vector<10x10x4xbf16> to vector<8x8x4xbf16>
    %98 = vector.shape_cast %97 : vector<8x8x4xbf16> to vector<64x4xbf16>
    %c15 = arith.constant 15 : index
    %c0_60 = arith.constant 0 : index
    %c0_61 = arith.constant 0 : index
    %99 = vector.load %arg5[%c15, %c0_60, %c0_61] : memref<27x4x8xbf16, #tpu.memory_space<vmem>>, vector<1x4x8xbf16>
    %100 = vector.shape_cast %99 : vector<1x4x8xbf16> to vector<4x8xbf16>
    %cst_62 = arith.constant dense<0.000000e+00> : vector<64x8xf32>
    %101 = tpu.matmul %98, %100, %cst_62 {dimension_numbers = #tpu.dot_dimension_numbers<[1], [0], [0], [1], [0, 0, 1, 1], [], []>} : vector<64x4xbf16>, vector<4x8xbf16>, vector<64x8xf32> -> vector<64x8xf32>
    %102 = arith.addf %96, %101 : vector<64x8xf32>
    %103 = vector.extract_strided_slice %3 {offsets = [2, 1, 0], sizes = [8, 8, 4], strides = [1, 1, 1]} : vector<10x10x4xbf16> to vector<8x8x4xbf16>
    %104 = vector.shape_cast %103 : vector<8x8x4xbf16> to vector<64x4xbf16>
    %c16 = arith.constant 16 : index
    %c0_63 = arith.constant 0 : index
    %c0_64 = arith.constant 0 : index
    %105 = vector.load %arg5[%c16, %c0_63, %c0_64] : memref<27x4x8xbf16, #tpu.memory_space<vmem>>, vector<1x4x8xbf16>
    %106 = vector.shape_cast %105 : vector<1x4x8xbf16> to vector<4x8xbf16>
    %cst_65 = arith.constant dense<0.000000e+00> : vector<64x8xf32>
    %107 = tpu.matmul %104, %106, %cst_65 {dimension_numbers = #tpu.dot_dimension_numbers<[1], [0], [0], [1], [0, 0, 1, 1], [], []>} : vector<64x4xbf16>, vector<4x8xbf16>, vector<64x8xf32> -> vector<64x8xf32>
    %108 = arith.addf %102, %107 : vector<64x8xf32>
    %109 = vector.extract_strided_slice %3 {offsets = [2, 2, 0], sizes = [8, 8, 4], strides = [1, 1, 1]} : vector<10x10x4xbf16> to vector<8x8x4xbf16>
    %110 = vector.shape_cast %109 : vector<8x8x4xbf16> to vector<64x4xbf16>
    %c17 = arith.constant 17 : index
    %c0_66 = arith.constant 0 : index
    %c0_67 = arith.constant 0 : index
    %111 = vector.load %arg5[%c17, %c0_66, %c0_67] : memref<27x4x8xbf16, #tpu.memory_space<vmem>>, vector<1x4x8xbf16>
    %112 = vector.shape_cast %111 : vector<1x4x8xbf16> to vector<4x8xbf16>
    %cst_68 = arith.constant dense<0.000000e+00> : vector<64x8xf32>
    %113 = tpu.matmul %110, %112, %cst_68 {dimension_numbers = #tpu.dot_dimension_numbers<[1], [0], [0], [1], [0, 0, 1, 1], [], []>} : vector<64x4xbf16>, vector<4x8xbf16>, vector<64x8xf32> -> vector<64x8xf32>
    %114 = arith.addf %108, %113 : vector<64x8xf32>
    %115 = vector.extract_strided_slice %5 {offsets = [0, 0, 0], sizes = [8, 8, 4], strides = [1, 1, 1]} : vector<10x10x4xbf16> to vector<8x8x4xbf16>
    %116 = vector.shape_cast %115 : vector<8x8x4xbf16> to vector<64x4xbf16>
    %c18 = arith.constant 18 : index
    %c0_69 = arith.constant 0 : index
    %c0_70 = arith.constant 0 : index
    %117 = vector.load %arg5[%c18, %c0_69, %c0_70] : memref<27x4x8xbf16, #tpu.memory_space<vmem>>, vector<1x4x8xbf16>
    %118 = vector.shape_cast %117 : vector<1x4x8xbf16> to vector<4x8xbf16>
    %cst_71 = arith.constant dense<0.000000e+00> : vector<64x8xf32>
    %119 = tpu.matmul %116, %118, %cst_71 {dimension_numbers = #tpu.dot_dimension_numbers<[1], [0], [0], [1], [0, 0, 1, 1], [], []>} : vector<64x4xbf16>, vector<4x8xbf16>, vector<64x8xf32> -> vector<64x8xf32>
    %120 = arith.addf %114, %119 : vector<64x8xf32>
    %121 = vector.extract_strided_slice %5 {offsets = [0, 1, 0], sizes = [8, 8, 4], strides = [1, 1, 1]} : vector<10x10x4xbf16> to vector<8x8x4xbf16>
    %122 = vector.shape_cast %121 : vector<8x8x4xbf16> to vector<64x4xbf16>
    %c19 = arith.constant 19 : index
    %c0_72 = arith.constant 0 : index
    %c0_73 = arith.constant 0 : index
    %123 = vector.load %arg5[%c19, %c0_72, %c0_73] : memref<27x4x8xbf16, #tpu.memory_space<vmem>>, vector<1x4x8xbf16>
    %124 = vector.shape_cast %123 : vector<1x4x8xbf16> to vector<4x8xbf16>
    %cst_74 = arith.constant dense<0.000000e+00> : vector<64x8xf32>
    %125 = tpu.matmul %122, %124, %cst_74 {dimension_numbers = #tpu.dot_dimension_numbers<[1], [0], [0], [1], [0, 0, 1, 1], [], []>} : vector<64x4xbf16>, vector<4x8xbf16>, vector<64x8xf32> -> vector<64x8xf32>
    %126 = arith.addf %120, %125 : vector<64x8xf32>
    %127 = vector.extract_strided_slice %5 {offsets = [0, 2, 0], sizes = [8, 8, 4], strides = [1, 1, 1]} : vector<10x10x4xbf16> to vector<8x8x4xbf16>
    %128 = vector.shape_cast %127 : vector<8x8x4xbf16> to vector<64x4xbf16>
    %c20 = arith.constant 20 : index
    %c0_75 = arith.constant 0 : index
    %c0_76 = arith.constant 0 : index
    %129 = vector.load %arg5[%c20, %c0_75, %c0_76] : memref<27x4x8xbf16, #tpu.memory_space<vmem>>, vector<1x4x8xbf16>
    %130 = vector.shape_cast %129 : vector<1x4x8xbf16> to vector<4x8xbf16>
    %cst_77 = arith.constant dense<0.000000e+00> : vector<64x8xf32>
    %131 = tpu.matmul %128, %130, %cst_77 {dimension_numbers = #tpu.dot_dimension_numbers<[1], [0], [0], [1], [0, 0, 1, 1], [], []>} : vector<64x4xbf16>, vector<4x8xbf16>, vector<64x8xf32> -> vector<64x8xf32>
    %132 = arith.addf %126, %131 : vector<64x8xf32>
    %133 = vector.extract_strided_slice %5 {offsets = [1, 0, 0], sizes = [8, 8, 4], strides = [1, 1, 1]} : vector<10x10x4xbf16> to vector<8x8x4xbf16>
    %134 = vector.shape_cast %133 : vector<8x8x4xbf16> to vector<64x4xbf16>
    %c21 = arith.constant 21 : index
    %c0_78 = arith.constant 0 : index
    %c0_79 = arith.constant 0 : index
    %135 = vector.load %arg5[%c21, %c0_78, %c0_79] : memref<27x4x8xbf16, #tpu.memory_space<vmem>>, vector<1x4x8xbf16>
    %136 = vector.shape_cast %135 : vector<1x4x8xbf16> to vector<4x8xbf16>
    %cst_80 = arith.constant dense<0.000000e+00> : vector<64x8xf32>
    %137 = tpu.matmul %134, %136, %cst_80 {dimension_numbers = #tpu.dot_dimension_numbers<[1], [0], [0], [1], [0, 0, 1, 1], [], []>} : vector<64x4xbf16>, vector<4x8xbf16>, vector<64x8xf32> -> vector<64x8xf32>
    %138 = arith.addf %132, %137 : vector<64x8xf32>
    %139 = vector.extract_strided_slice %5 {offsets = [1, 1, 0], sizes = [8, 8, 4], strides = [1, 1, 1]} : vector<10x10x4xbf16> to vector<8x8x4xbf16>
    %140 = vector.shape_cast %139 : vector<8x8x4xbf16> to vector<64x4xbf16>
    %c22 = arith.constant 22 : index
    %c0_81 = arith.constant 0 : index
    %c0_82 = arith.constant 0 : index
    %141 = vector.load %arg5[%c22, %c0_81, %c0_82] : memref<27x4x8xbf16, #tpu.memory_space<vmem>>, vector<1x4x8xbf16>
    %142 = vector.shape_cast %141 : vector<1x4x8xbf16> to vector<4x8xbf16>
    %cst_83 = arith.constant dense<0.000000e+00> : vector<64x8xf32>
    %143 = tpu.matmul %140, %142, %cst_83 {dimension_numbers = #tpu.dot_dimension_numbers<[1], [0], [0], [1], [0, 0, 1, 1], [], []>} : vector<64x4xbf16>, vector<4x8xbf16>, vector<64x8xf32> -> vector<64x8xf32>
    %144 = arith.addf %138, %143 : vector<64x8xf32>
    %145 = vector.extract_strided_slice %5 {offsets = [1, 2, 0], sizes = [8, 8, 4], strides = [1, 1, 1]} : vector<10x10x4xbf16> to vector<8x8x4xbf16>
    %146 = vector.shape_cast %145 : vector<8x8x4xbf16> to vector<64x4xbf16>
    %c23 = arith.constant 23 : index
    %c0_84 = arith.constant 0 : index
    %c0_85 = arith.constant 0 : index
    %147 = vector.load %arg5[%c23, %c0_84, %c0_85] : memref<27x4x8xbf16, #tpu.memory_space<vmem>>, vector<1x4x8xbf16>
    %148 = vector.shape_cast %147 : vector<1x4x8xbf16> to vector<4x8xbf16>
    %cst_86 = arith.constant dense<0.000000e+00> : vector<64x8xf32>
    %149 = tpu.matmul %146, %148, %cst_86 {dimension_numbers = #tpu.dot_dimension_numbers<[1], [0], [0], [1], [0, 0, 1, 1], [], []>} : vector<64x4xbf16>, vector<4x8xbf16>, vector<64x8xf32> -> vector<64x8xf32>
    %150 = arith.addf %144, %149 : vector<64x8xf32>
    %151 = vector.extract_strided_slice %5 {offsets = [2, 0, 0], sizes = [8, 8, 4], strides = [1, 1, 1]} : vector<10x10x4xbf16> to vector<8x8x4xbf16>
    %152 = vector.shape_cast %151 : vector<8x8x4xbf16> to vector<64x4xbf16>
    %c24 = arith.constant 24 : index
    %c0_87 = arith.constant 0 : index
    %c0_88 = arith.constant 0 : index
    %153 = vector.load %arg5[%c24, %c0_87, %c0_88] : memref<27x4x8xbf16, #tpu.memory_space<vmem>>, vector<1x4x8xbf16>
    %154 = vector.shape_cast %153 : vector<1x4x8xbf16> to vector<4x8xbf16>
    %cst_89 = arith.constant dense<0.000000e+00> : vector<64x8xf32>
    %155 = tpu.matmul %152, %154, %cst_89 {dimension_numbers = #tpu.dot_dimension_numbers<[1], [0], [0], [1], [0, 0, 1, 1], [], []>} : vector<64x4xbf16>, vector<4x8xbf16>, vector<64x8xf32> -> vector<64x8xf32>
    %156 = arith.addf %150, %155 : vector<64x8xf32>
    %157 = vector.extract_strided_slice %5 {offsets = [2, 1, 0], sizes = [8, 8, 4], strides = [1, 1, 1]} : vector<10x10x4xbf16> to vector<8x8x4xbf16>
    %158 = vector.shape_cast %157 : vector<8x8x4xbf16> to vector<64x4xbf16>
    %c25 = arith.constant 25 : index
    %c0_90 = arith.constant 0 : index
    %c0_91 = arith.constant 0 : index
    %159 = vector.load %arg5[%c25, %c0_90, %c0_91] : memref<27x4x8xbf16, #tpu.memory_space<vmem>>, vector<1x4x8xbf16>
    %160 = vector.shape_cast %159 : vector<1x4x8xbf16> to vector<4x8xbf16>
    %cst_92 = arith.constant dense<0.000000e+00> : vector<64x8xf32>
    %161 = tpu.matmul %158, %160, %cst_92 {dimension_numbers = #tpu.dot_dimension_numbers<[1], [0], [0], [1], [0, 0, 1, 1], [], []>} : vector<64x4xbf16>, vector<4x8xbf16>, vector<64x8xf32> -> vector<64x8xf32>
    %162 = arith.addf %156, %161 : vector<64x8xf32>
    %163 = vector.extract_strided_slice %5 {offsets = [2, 2, 0], sizes = [8, 8, 4], strides = [1, 1, 1]} : vector<10x10x4xbf16> to vector<8x8x4xbf16>
    %164 = vector.shape_cast %163 : vector<8x8x4xbf16> to vector<64x4xbf16>
    %c26 = arith.constant 26 : index
    %c0_93 = arith.constant 0 : index
    %c0_94 = arith.constant 0 : index
    %165 = vector.load %arg5[%c26, %c0_93, %c0_94] : memref<27x4x8xbf16, #tpu.memory_space<vmem>>, vector<1x4x8xbf16>
    %166 = vector.shape_cast %165 : vector<1x4x8xbf16> to vector<4x8xbf16>
    %cst_95 = arith.constant dense<0.000000e+00> : vector<64x8xf32>
    %167 = tpu.matmul %164, %166, %cst_95 {dimension_numbers = #tpu.dot_dimension_numbers<[1], [0], [0], [1], [0, 0, 1, 1], [], []>} : vector<64x4xbf16>, vector<4x8xbf16>, vector<64x8xf32> -> vector<64x8xf32>
    %168 = arith.addf %162, %167 : vector<64x8xf32>
    %169 = vector.shape_cast %168 : vector<64x8xf32> to vector<1x1x64x8xf32>
    %c0_96 = arith.constant 0 : index
    %c0_97 = arith.constant 0 : index
    %c0_98 = arith.constant 0 : index
    %c0_99 = arith.constant 0 : index
    %170 = vector.load %arg6[%c0_96, %c0_97, %c0_98, %c0_99] : memref<1x1x64x8xf32, #tpu.memory_space<vmem>>, vector<1x1x64x8xf32>
    tpu.vector_store %arg6[%c0_96, %c0_97, %c0_98, %c0_99], %169 {strides = array<i32>} : memref<1x1x64x8xf32, #tpu.memory_space<vmem>>, vector<1x1x64x8xf32>,
    %cst_100 = arith.constant dense<0.000000e+00> : vector<8xf32>
    %171 = vector.multi_reduction <add>, %168, %cst_100 [0] : vector<64x8xf32> to vector<8xf32>
    %172 = vector.shape_cast %171 : vector<8xf32> to vector<1x8xf32>
    %173 = arith.mulf %168, %168 : vector<64x8xf32>
    %cst_101 = arith.constant dense<0.000000e+00> : vector<8xf32>
    %174 = vector.multi_reduction <add>, %173, %cst_101 [0] : vector<64x8xf32> to vector<8xf32>
    %175 = vector.shape_cast %174 : vector<8xf32> to vector<1x8xf32>
    %176 = tpu.concatenate %172, %175 in 0 : vector<1x8xf32>, vector<1x8xf32> -> vector<2x8xf32>
    %177 = vector.shape_cast %176 : vector<2x8xf32> to vector<1x1x2x8xf32>
    %c0_102 = arith.constant 0 : index
    %c0_103 = arith.constant 0 : index
    %c0_104 = arith.constant 0 : index
    %c0_105 = arith.constant 0 : index
    %178 = vector.load %arg7[%c0_102, %c0_103, %c0_104, %c0_105] : memref<1x1x2x8xf32, #tpu.memory_space<vmem>>, vector<1x1x2x8xf32>
    tpu.vector_store %arg7[%c0_102, %c0_103, %c0_104, %c0_105], %177 {strides = array<i32>} : memref<1x1x2x8xf32, #tpu.memory_space<vmem>>, vector<1x1x2x8xf32>,
    return
  }
  func.func @transform_0(%arg0: i32, %arg1: i32) -> (i32, i32, i32, i32, i32) {
    %c0_i32 = arith.constant 0 : i32
    %0 = arith.addi %arg1, %c0_i32 : i32
    %c0_i32_0 = arith.constant 0 : i32
    %c0_i32_1 = arith.constant 0 : i32
    %c0_i32_2 = arith.constant 0 : i32
    %c0_i32_3 = arith.constant 0 : i32
    return %arg0, %0, %c0_i32_0, %c0_i32_1, %c0_i32_2 : i32, i32, i32, i32, i32
  }
  func.func @transform_1(%arg0: i32, %arg1: i32) -> (i32, i32, i32, i32, i32) {
    %c1_i32 = arith.constant 1 : i32
    %0 = arith.addi %arg1, %c1_i32 : i32
    %c0_i32 = arith.constant 0 : i32
    %c0_i32_0 = arith.constant 0 : i32
    %c0_i32_1 = arith.constant 0 : i32
    %c0_i32_2 = arith.constant 0 : i32
    return %arg0, %0, %c0_i32, %c0_i32_0, %c0_i32_1 : i32, i32, i32, i32, i32
  }
  func.func @transform_2(%arg0: i32, %arg1: i32) -> (i32, i32, i32, i32, i32) {
    %c2_i32 = arith.constant 2 : i32
    %0 = arith.addi %arg1, %c2_i32 : i32
    %c0_i32 = arith.constant 0 : i32
    %c0_i32_0 = arith.constant 0 : i32
    %c0_i32_1 = arith.constant 0 : i32
    %c0_i32_2 = arith.constant 0 : i32
    return %arg0, %0, %c0_i32, %c0_i32_0, %c0_i32_1 : i32, i32, i32, i32, i32
  }
  func.func @transform_3(%arg0: i32, %arg1: i32) -> (i32, i32, i32) {
    %c0_i32 = arith.constant 0 : i32
    %c0_i32_0 = arith.constant 0 : i32
    %c0_i32_1 = arith.constant 0 : i32
    %c0_i32_2 = arith.constant 0 : i32
    return %c0_i32, %c0_i32_0, %c0_i32_1 : i32, i32, i32
  }
  func.func @transform_4(%arg0: i32, %arg1: i32) -> (i32, i32, i32, i32) {
    %c0_i32 = arith.constant 0 : i32
    %c0_i32_0 = arith.constant 0 : i32
    %c0_i32_1 = arith.constant 0 : i32
    return %arg0, %arg1, %c0_i32, %c0_i32_0 : i32, i32, i32, i32
  }
  func.func @transform_5(%arg0: i32, %arg1: i32) -> (i32, i32, i32, i32) {
    %c0_i32 = arith.constant 0 : i32
    %c0_i32_0 = arith.constant 0 : i32
    %c0_i32_1 = arith.constant 0 : i32
    return %arg0, %arg1, %c0_i32, %c0_i32_0 : i32, i32, i32, i32
  }
}

</mosaic_0001>

<llo_original>
// kernel: tpu_custom_call.1
$region0: #{tpu_custom_call.1}
  #allocation0 [shape = 'u32[]', space=smem, size = 0x4, offset = 0x4, fixed_abs, tag = 'smem constant byte address 0x4 - core index']
  #allocation1 [shape = 'u32[144,128]{1,0:T(1,128)}', space=vmem, size = 0x12000, scoped, tag = 'internal scratch']
  %s0 = inlined_call_operand.vmem [shape: bf16[2,10,10,10,4], index: 0, kind: input, shape index: {}]
  %s1 = inlined_call_operand.vmem [shape: bf16[2,10,10,10,4], index: 1, kind: input, shape index: {}]
  %s2 = inlined_call_operand.vmem [shape: bf16[2,10,10,10,4], index: 2, kind: input, shape index: {}]
  %s3 = inlined_call_operand.vmem [shape: bf16[27,4,8], index: 3, kind: input, shape index: {}]
  %s4 = inlined_call_operand.vmem [shape: f32[2,8,64,8], index: 4, kind: output, shape index: {0}]
  %s5 = inlined_call_operand.hbm [shape: f32[2,8,2,8], index: 5, kind: output, shape index: {1}]
  %6 = xla_tuple %s4, %s5
  %s7 = sld [smem:[#allocation0]]
  $region57: #{tpu_custom_call.1} parent=0
    _
  %s9 = ssub.s32 1, %s7
  %s10 = scalar_select 0, %s9, %s7
  $region1: #{tpu_custom_call.1} parent=0
    #allocation2 [shape = 'u8[2048]{0}', space=vmem, size = 0x800, scoped, tag = 'output window, operand 1']
    #allocation3 [shape = 's32[2]{0}', space=sflag, size = 0x8, scoped, tag = 'scoped memory for tpu_custom_call.1']
    %11 = vsyncpa [#allocation3], 0
    %s12 = scalar_lea.sflag [#allocation3], 1
    %13 = vsyncpa %s12, 0
    loop: start=0, step=1, limit=18
    $region2: #{tpu_custom_call.1} parent=1 // loop_pre_header
      _
    $region3: #{tpu_custom_call.1} parent=1 // loop_header
      %s15 = sphi 0, %s19
      %p16 = scmp.ge.s32.totalorder %s15, 18
      %s22 = sphi 0, %s34
      %s23 = sphi 0, %s30
      %s24 = sphi 0, %s22
      %s25 = sphi 0, %s23
      %s26 = sphi 0, %s24
      %s27 = sphi 0, %s25
      %s39 = sphi 0, %s41
      %s42 = sphi 0, %s39
      %s43 = sphi 0, %s42
      %s59 = sphi 0, %s43
      %s69 = sphi 0, %s71
      %s72 = sphi 0, %s69
      %s73 = sphi 0, %s72
      %s89 = sphi 0, %s73
      %s99 = sphi 0, %s101
      %s102 = sphi 0, %s99
      %s103 = sphi 0, %s102
      %s119 = sphi 0, %s103
      %s123 = sphi 0, %s123
      %s125 = sphi 0, %s123
      %s126 = sphi 0, %s125
      %s140 = sphi 0, %s126
      %s148 = sphi 0, %s150
      %s151 = sphi 0, %s148
      %s152 = sphi 0, %s151
      %s168 = sphi 0, %s152
      %s176 = sphi 0, %s178
      %s179 = sphi 0, %s176
      %s180 = sphi 0, %s179
      %s196 = sphi 0, %s180
    $region4: #{tpu_custom_call.1} parent=1 // loop_header_branch
      %18 = sbr.rel (%p16) target = $region8
    $region5: #{tpu_custom_call.1} parent=1 // loop_body
      %s20 = ssub.s32 %s15, 1
      %s21 = ssub.s32 %s15, 2
      %s28 = sadd.s32 1, %s23
      %p29 = scmp.ge.s32.totalorder %s28, 8
      %s30 = scalar_select %p29, 0, %s28
      %s31 = sadd.s32 1, %s22
      %s32 = scalar_select %p29, %s31, %s22
      %p33 = scmp.ge.s32.totalorder %s32, 2
      %s34 = scalar_select %p33, 0, %s32
      %s35 = ssub.s32 %s22, %s34
      %s36 = ssub.s32 %s23, %s30
      %s37 = sor.u32 %s35, %s36
      %p38 = scmp.eq.s32.totalorder %s37, 0
      %s40 = sadd.s32 %s39, 1
      %s41 = scalar_select %p38, %s39, %s40
      %p44 = pneg %p38
      %p45 = scmp.eq.s32.totalorder %s15, 15
      %p46 = por %p44, %p45
      %p47 = scmp.ne.s32.totalorder %s39, %s42
      %p48 = scmp.eq.s32.totalorder %s15, 0
      %p49 = por %p47, %p48
      %p50 = scmp.ne.s32.totalorder %s39, %s42
      %p51 = scmp.eq.s32.totalorder %s20, 15
      %p52 = por %p50, %p51
      %p53 = scmp.ne.s32.totalorder %s42, %s43
      %p54 = scmp.eq.s32.totalorder %s20, 0
      %p55 = por %p53, %p54
      %p56 = scmp.ne.s32.totalorder %s42, %s43
      %p57 = scmp.eq.s32.totalorder %s21, 15
      %p58 = por %p56, %p57
      %p60 = scmp.ne.s32.totalorder %s43, %s59
      %p61 = scmp.eq.s32.totalorder %s21, 0
      %p62 = por %p60, %p61
      %s63 = sadd.s32 %s23, 1
      %s64 = sadd.s32 %s30, 1
      %s65 = ssub.s32 %s22, %s34
      %s66 = ssub.s32 %s63, %s64
      %s67 = sor.u32 %s65, %s66
      %p68 = scmp.eq.s32.totalorder %s67, 0
      %s70 = sadd.s32 %s69, 1
      %s71 = scalar_select %p68, %s69, %s70
      %p74 = pneg %p68
      %p75 = scmp.eq.s32.totalorder %s15, 15
      %p76 = por %p74, %p75
      %p77 = scmp.ne.s32.totalorder %s69, %s72
      %p78 = scmp.eq.s32.totalorder %s15, 0
      %p79 = por %p77, %p78
      %p80 = scmp.ne.s32.totalorder %s69, %s72
      %p81 = scmp.eq.s32.totalorder %s20, 15
      %p82 = por %p80, %p81
      %p83 = scmp.ne.s32.totalorder %s72, %s73
      %p84 = scmp.eq.s32.totalorder %s20, 0
      %p85 = por %p83, %p84
      %p86 = scmp.ne.s32.totalorder %s72, %s73
      %p87 = scmp.eq.s32.totalorder %s21, 15
      %p88 = por %p86, %p87
      %p90 = scmp.ne.s32.totalorder %s73, %s89
      %p91 = scmp.eq.s32.totalorder %s21, 0
      %p92 = por %p90, %p91
      %s93 = sadd.s32 %s23, 2
      %s94 = sadd.s32 %s30, 2
      %s95 = ssub.s32 %s22, %s34
      %s96 = ssub.s32 %s93, %s94
      %s97 = sor.u32 %s95, %s96
      %p98 = scmp.eq.s32.totalorder %s97, 0
      %s100 = sadd.s32 %s99, 1
      %s101 = scalar_select %p98, %s99, %s100
      %p104 = pneg %p98
      %p105 = scmp.eq.s32.totalorder %s15, 15
      %p106 = por %p104, %p105
      %p107 = scmp.ne.s32.totalorder %s99, %s102
      %p108 = scmp.eq.s32.totalorder %s15, 0
      %p109 = por %p107, %p108
      %p110 = scmp.ne.s32.totalorder %s99, %s102
      %p111 = scmp.eq.s32.totalorder %s20, 15
      %p112 = por %p110, %p111
      %p113 = scmp.ne.s32.totalorder %s102, %s103
      %p114 = scmp.eq.s32.totalorder %s20, 0
      %p115 = por %p113, %p114
      %p116 = scmp.ne.s32.totalorder %s102, %s103
      %p117 = scmp.eq.s32.totalorder %s21, 15
      %p118 = por %p116, %p117
      %p120 = scmp.ne.s32.totalorder %s103, %s119
      %p121 = scmp.eq.s32.totalorder %s21, 0
      %p122 = por %p120, %p121
      %s124 = sadd.s32 %s123, 1
      %p127 = scmp.eq.s32.totalorder %s15, 15
      %p128 = scmp.ne.s32.totalorder %s123, %s125
      %p129 = scmp.eq.s32.totalorder %s15, 0
      %p130 = por %p128, %p129
      %p131 = scmp.ne.s32.totalorder %s123, %s125
      %p132 = scmp.eq.s32.totalorder %s20, 15
      %p133 = por %p131, %p132
      %p134 = scmp.ne.s32.totalorder %s125, %s126
      %p135 = scmp.eq.s32.totalorder %s20, 0
      %p136 = por %p134, %p135
      %p137 = scmp.ne.s32.totalorder %s125, %s126
      %p138 = scmp.eq.s32.totalorder %s21, 15
      %p139 = por %p137, %p138
      %p141 = scmp.ne.s32.totalorder %s126, %s140
      %p142 = scmp.eq.s32.totalorder %s21, 0
      %p143 = por %p141, %p142
      %s144 = ssub.s32 %s22, %s34
      %s145 = ssub.s32 %s23, %s30
      %s146 = sor.u32 %s144, %s145
      %p147 = scmp.eq.s32.totalorder %s146, 0
      %s149 = sadd.s32 %s148, 1
      %s150 = scalar_select %p147, %s148, %s149
      %p153 = pneg %p147
      %p154 = scmp.eq.s32.totalorder %s15, 15
      %p155 = por %p153, %p154
      %p156 = scmp.ne.s32.totalorder %s148, %s151
      %p157 = scmp.eq.s32.totalorder %s15, 0
      %p158 = por %p156, %p157
      %p159 = scmp.ne.s32.totalorder %s148, %s151
      %p160 = scmp.eq.s32.totalorder %s20, 15
      %p161 = por %p159, %p160
      %p162 = scmp.ne.s32.totalorder %s151, %s152
      %p163 = scmp.eq.s32.totalorder %s20, 0
      %p164 = por %p162, %p163
      %p165 = scmp.ne.s32.totalorder %s151, %s152
      %p166 = scmp.eq.s32.totalorder %s21, 15
      %p167 = por %p165, %p166
      %p169 = scmp.ne.s32.totalorder %s152, %s168
      %p170 = scmp.eq.s32.totalorder %s21, 0
      %p171 = por %p169, %p170
      %s172 = ssub.s32 %s22, %s34
      %s173 = ssub.s32 %s23, %s30
      %s174 = sor.u32 %s172, %s173
      %p175 = scmp.eq.s32.totalorder %s174, 0
      %s177 = sadd.s32 %s176, 1
      %s178 = scalar_select %p175, %s176, %s177
      %p181 = pneg %p175
      %p182 = scmp.eq.s32.totalorder %s15, 15
      %p183 = por %p181, %p182
      %p184 = scmp.ne.s32.totalorder %s176, %s179
      %p185 = scmp.eq.s32.totalorder %s15, 0
      %p186 = por %p184, %p185
      %p187 = scmp.ne.s32.totalorder %s176, %s179
      %p188 = scmp.eq.s32.totalorder %s20, 15
      %p189 = por %p187, %p188
      %p190 = scmp.ne.s32.totalorder %s179, %s180
      %p191 = scmp.eq.s32.totalorder %s20, 0
      %p192 = por %p190, %p191
      %p193 = scmp.ne.s32.totalorder %s179, %s180
      %p194 = scmp.eq.s32.totalorder %s21, 15
      %p195 = por %p193, %p194
      %p197 = scmp.ne.s32.totalorder %s180, %s196
      %p198 = scmp.eq.s32.totalorder %s21, 0
      %p199 = por %p197, %p198
      %p200 = scmp.le.s32.totalorder 1, %s15
      %p201 = scmp.lt.s32.totalorder %s15, 17
      %p202 = pnand %p200, %p201
      %p203 = pneg %p202
      // Predicated region
      $region9: #{tpu_custom_call.1} parent=5 // pred_check
        _
      $region10: #{tpu_custom_call.1} parent=5 // pred_check_branch
        %205 = sbr.rel (%p202) target = $region12
      $region11: #{tpu_custom_call.1} parent=5 // pred_region
        %s206 = ssub.s32 %s15, 1
        // Predicated region
        $region13: #{tpu_custom_call.1} parent=11 // pred_check
          %p207 = pneg %p136
        $region14: #{tpu_custom_call.1} parent=11 // pred_check_branch
          %209 = sbr.rel (%p207) target = $region16
        $region15: #{tpu_custom_call.1} parent=11 // pred_region
          _
        $region16: #{tpu_custom_call.1} parent=11 // pred_fallthru
          _
      $region12: #{tpu_custom_call.1} parent=5 // pred_fallthru
        _
      %p210 = scmp.lt.s32.totalorder %s15, 16
      // Predicated region
      $region17: #{tpu_custom_call.1} parent=5 // pred_check
        %p211 = pneg %p210
      $region18: #{tpu_custom_call.1} parent=5 // pred_check_branch
        %213 = sbr.rel (%p211) target = $region20
      $region19: #{tpu_custom_call.1} parent=5 // pred_region
        // Predicated region
        $region21: #{tpu_custom_call.1} parent=19 // pred_check
          %p214 = pneg %p49
        $region22: #{tpu_custom_call.1} parent=19 // pred_check_branch
          %216 = sbr.rel (%p214) target = $region24
        $region23: #{tpu_custom_call.1} parent=19 // pred_region
          %p217 = scmp.lt.s32.totalorder %s22, 1
          %s218 = scalar_select %p217, %s22, 1
          %p219 = scmp.lt.s32.totalorder %s23, 9
          %s220 = scalar_select %p219, %s23, 9
          %s221 = smul.addr %s220, 20
          %s222 = smul.addr %s218, 200
          %s223 = sadd.s32 %s221, %s222
          %s224 = smul.addr %s223, 4
          %s225 = scalar_lea.vmem %s0, %s224
        $region24: #{tpu_custom_call.1} parent=19 // pred_fallthru
          _
        // Predicated region
        $region25: #{tpu_custom_call.1} parent=19 // pred_check
          %p226 = pneg %p79
        $region26: #{tpu_custom_call.1} parent=19 // pred_check_branch
          %228 = sbr.rel (%p226) target = $region28
        $region27: #{tpu_custom_call.1} parent=19 // pred_region
          %s229 = sadd.s32 %s23, 1
          %p230 = scmp.lt.s32.totalorder %s22, 1
          %s231 = scalar_select %p230, %s22, 1
          %p232 = scmp.lt.s32.totalorder %s229, 9
          %s233 = scalar_select %p232, %s229, 9
          %s234 = smul.addr %s233, 20
          %s235 = smul.addr %s231, 200
          %s236 = sadd.s32 %s234, %s235
          %s237 = smul.addr %s236, 4
          %s238 = scalar_lea.vmem %s1, %s237
          %s239 = sadd.s32 %s23, 1
        $region28: #{tpu_custom_call.1} parent=19 // pred_fallthru
          _
        // Predicated region
        $region29: #{tpu_custom_call.1} parent=19 // pred_check
          %p240 = pneg %p109
        $region30: #{tpu_custom_call.1} parent=19 // pred_check_branch
          %242 = sbr.rel (%p240) target = $region32
        $region31: #{tpu_custom_call.1} parent=19 // pred_region
          %s243 = sadd.s32 %s23, 2
          %p244 = scmp.lt.s32.totalorder %s22, 1
          %s245 = scalar_select %p244, %s22, 1
          %p246 = scmp.lt.s32.totalorder %s243, 9
          %s247 = scalar_select %p246, %s243, 9
          %s248 = smul.addr %s247, 20
          %s249 = smul.addr %s245, 200
          %s250 = sadd.s32 %s248, %s249
          %s251 = smul.addr %s250, 4
          %s252 = scalar_lea.vmem %s2, %s251
          %s253 = sadd.s32 %s23, 2
        $region32: #{tpu_custom_call.1} parent=19 // pred_fallthru
          _
      $region20: #{tpu_custom_call.1} parent=5 // pred_fallthru
        _
      %p254 = scmp.le.s32.totalorder 1, %s15
      %p255 = scmp.lt.s32.totalorder %s15, 17
      %p256 = pnand %p254, %p255
      %p257 = pneg %p256
      // Predicated region
      $region33: #{tpu_custom_call.1} parent=5 // pred_check
        _
      $region34: #{tpu_custom_call.1} parent=5 // pred_check_branch
        %259 = sbr.rel (%p256) target = $region36
      $region35: #{tpu_custom_call.1} parent=5 // pred_region
        %s260 = ssub.s32 %s15, 1
        %p261 = scmp.lt.s32.totalorder %s24, 1
        %s262 = scalar_select %p261, %s24, 1
        %p263 = scmp.lt.s32.totalorder %s25, 9
        %s264 = scalar_select %p263, %s25, 9
        %s265 = smul.addr %s264, 20
        %s266 = smul.addr %s262, 200
        %s267 = sadd.s32 %s265, %s266
        %s268 = smul.addr %s267, 4
        %s269 = scalar_lea.vmem %s0, %s268
        %p270 = pneg %p55
        %p271 = pneg %p52
        %s272 = sadd.s32 %s25, 1
        %p273 = scmp.lt.s32.totalorder %s24, 1
        %s274 = scalar_select %p273, %s24, 1
        %p275 = scmp.lt.s32.totalorder %s272, 9
        %s276 = scalar_select %p275, %s272, 9
        %s277 = smul.addr %s276, 20
        %s278 = smul.addr %s274, 200
        %s279 = sadd.s32 %s277, %s278
        %s280 = smul.addr %s279, 4
        %s281 = scalar_lea.vmem %s1, %s280
        %p282 = pneg %p85
        %p283 = pneg %p82
        %s284 = sadd.s32 %s25, 2
        %p285 = scmp.lt.s32.totalorder %s24, 1
        %s286 = scalar_select %p285, %s24, 1
        %p287 = scmp.lt.s32.totalorder %s284, 9
        %s288 = scalar_select %p287, %s284, 9
        %s289 = smul.addr %s288, 20
        %s290 = smul.addr %s286, 200
        %s291 = sadd.s32 %s289, %s290
        %s292 = smul.addr %s291, 4
        %s293 = scalar_lea.vmem %s2, %s292
        %p294 = pneg %p115
        %p295 = pneg %p112
        %p296 = pneg %p136
        %p297 = pneg %p133
        %p298 = pneg %p164
        %p299 = pneg %p161
        %p300 = scmp.lt.s32.totalorder %s24, 1
        %s301 = scalar_select %p300, %s24, 1
        %p302 = scmp.lt.s32.totalorder %s25, 7
        %s303 = scalar_select %p302, %s25, 7
        %s304 = smul.addr %s303, 8
        %s305 = smul.addr %s301, 64
        %s306 = sadd.s32 %s304, %s305
        %s307 = smul.addr %s306, 8
        %s308 = scalar_lea.vmem %s4, %s307
        %p309 = pneg %p192
        %p310 = pneg %p189
        %s311 = sand.u32 %s179, 1
        %s312 = scalar_lea.sflag [#allocation3], %s311
        %s313 = sand.u32 %s179, 1
        %s314 = smul.addr %s313, 2
        %s315 = scalar_lea.vmem [#allocation2], %s314
        %p316 = scmp.lt.s32.totalorder %s24, 1
        %s317 = scalar_select %p316, %s24, 1
        %p318 = scmp.lt.s32.totalorder %s25, 9
        %s319 = scalar_select %p318, %s25, 9
        %s320 = smul.addr %s319, 20
        %s321 = smul.addr %s317, 200
        %s322 = sadd.s32 %s320, %s321
        %s323 = smul.addr %s322, 4
        %s324 = scalar_lea.vmem %s0, %s323
        %s325 = sadd.s32 %s25, 1
        %p326 = scmp.lt.s32.totalorder %s24, 1
        %s327 = scalar_select %p326, %s24, 1
        %p328 = scmp.lt.s32.totalorder %s325, 9
        %s329 = scalar_select %p328, %s325, 9
        %s330 = smul.addr %s329, 20
        %s331 = smul.addr %s327, 200
        %s332 = sadd.s32 %s330, %s331
        %s333 = smul.addr %s332, 4
        %s334 = scalar_lea.vmem %s1, %s333
        %s335 = sadd.s32 %s25, 1
        %s336 = sadd.s32 %s25, 2
        %p337 = scmp.lt.s32.totalorder %s24, 1
        %s338 = scalar_select %p337, %s24, 1
        %p339 = scmp.lt.s32.totalorder %s336, 9
        %s340 = scalar_select %p339, %s336, 9
        %s341 = smul.addr %s340, 20
        %s342 = smul.addr %s338, 200
        %s343 = sadd.s32 %s341, %s342
        %s344 = smul.addr %s343, 4
        %s345 = scalar_lea.vmem %s2, %s344
        %s346 = sadd.s32 %s25, 2
        %p347 = scmp.lt.s32.totalorder %s24, 1
        %s348 = scalar_select %p347, %s24, 1
        %p349 = scmp.lt.s32.totalorder %s25, 7
        %s350 = scalar_select %p349, %s25, 7
        %s351 = smul.addr %s350, 8
        %s352 = smul.addr %s348, 64
        %s353 = sadd.s32 %s351, %s352
        %s354 = smul.addr %s353, 8
        %s355 = scalar_lea.vmem %s4, %s354
        %v357 = vld [vmem:[%s324] sm:$0xf]
        %v358 = vld [vmem:[%s324 + $0x4] sm:$0x1]
        %v359 = vld [vmem:[%s324 + $0x8] sm:$0xf]
        %v360 = vld [vmem:[%s324 + $0xc] sm:$0x1]
        %v361 = vld [vmem:[%s324 + $0x10] sm:$0xf]
        %v362 = vld [vmem:[%s324 + $0x14] sm:$0x1]
        %v363 = vld [vmem:[%s324 + $0x18] sm:$0xf]
        %v364 = vld [vmem:[%s324 + $0x1c] sm:$0x1]
        %v365 = vld [vmem:[%s324 + $0x20] sm:$0xf]
        %v366 = vld [vmem:[%s324 + $0x24] sm:$0x1]
        %v367 = vld [vmem:[%s324 + $0x28] sm:$0xf]
        %v368 = vld [vmem:[%s324 + $0x2c] sm:$0x1]
        %v369 = vld [vmem:[%s324 + $0x30] sm:$0xf]
        %v370 = vld [vmem:[%s324 + $0x34] sm:$0x1]
        %v371 = vld [vmem:[%s324 + $0x38] sm:$0xf]
        %v372 = vld [vmem:[%s324 + $0x3c] sm:$0x1]
        %v373 = vld [vmem:[%s324 + $0x40] sm:$0xf]
        %v374 = vld [vmem:[%s324 + $0x44] sm:$0x1]
        %v375 = vld [vmem:[%s324 + $0x48] sm:$0xf]
        %v376 = vld [vmem:[%s324 + $0x4c] sm:$0x1]
        %v377 = vld [vmem:[%s334] sm:$0xf]
        %v378 = vld [vmem:[%s334 + $0x4] sm:$0x1]
        %v379 = vld [vmem:[%s334 + $0x8] sm:$0xf]
        %v380 = vld [vmem:[%s334 + $0xc] sm:$0x1]
        %v381 = vld [vmem:[%s334 + $0x10] sm:$0xf]
        %v382 = vld [vmem:[%s334 + $0x14] sm:$0x1]
        %v383 = vld [vmem:[%s334 + $0x18] sm:$0xf]
        %v384 = vld [vmem:[%s334 + $0x1c] sm:$0x1]
        %v385 = vld [vmem:[%s334 + $0x20] sm:$0xf]
        %v386 = vld [vmem:[%s334 + $0x24] sm:$0x1]
        %v387 = vld [vmem:[%s334 + $0x28] sm:$0xf]
        %v388 = vld [vmem:[%s334 + $0x2c] sm:$0x1]
        %v389 = vld [vmem:[%s334 + $0x30] sm:$0xf]
        %v390 = vld [vmem:[%s334 + $0x34] sm:$0x1]
        %v391 = vld [vmem:[%s334 + $0x38] sm:$0xf]
        %v392 = vld [vmem:[%s334 + $0x3c] sm:$0x1]
        %v393 = vld [vmem:[%s334 + $0x40] sm:$0xf]
        %v394 = vld [vmem:[%s334 + $0x44] sm:$0x1]
        %v395 = vld [vmem:[%s334 + $0x48] sm:$0xf]
        %v396 = vld [vmem:[%s334 + $0x4c] sm:$0x1]
        %v397 = vld [vmem:[%s345] sm:$0xf]
        %v398 = vld [vmem:[%s345 + $0x4] sm:$0x1]
        %v399 = vld [vmem:[%s345 + $0x8] sm:$0xf]
        %v400 = vld [vmem:[%s345 + $0xc] sm:$0x1]
        %v401 = vld [vmem:[%s345 + $0x10] sm:$0xf]
        %v402 = vld [vmem:[%s345 + $0x14] sm:$0x1]
        %v403 = vld [vmem:[%s345 + $0x18] sm:$0xf]
        %v404 = vld [vmem:[%s345 + $0x1c] sm:$0x1]
        %v405 = vld [vmem:[%s345 + $0x20] sm:$0xf]
        %v406 = vld [vmem:[%s345 + $0x24] sm:$0x1]
        %v407 = vld [vmem:[%s345 + $0x28] sm:$0xf]
        %v408 = vld [vmem:[%s345 + $0x2c] sm:$0x1]
        %v409 = vld [vmem:[%s345 + $0x30] sm:$0xf]
        %v410 = vld [vmem:[%s345 + $0x34] sm:$0x1]
        %v411 = vld [vmem:[%s345 + $0x38] sm:$0xf]
        %v412 = vld [vmem:[%s345 + $0x3c] sm:$0x1]
        %v413 = vld [vmem:[%s345 + $0x40] sm:$0xf]
        %v414 = vld [vmem:[%s345 + $0x44] sm:$0x1]
        %v415 = vld [vmem:[%s345 + $0x48] sm:$0xf]
        %v416 = vld [vmem:[%s345 + $0x4c] sm:$0x1]
        %v417 = vld [vmem:[%s3] sm:$0x3]
        %vm418 = vsmask.f32 3328
        %vm419 = vsmask.f32 7440
        %vm420 = vmor %vm418, %vm419
        %v422 = vshrl.u32 %v357, 16
        %v424 = vrot.slane %v422, 4
        %v425 = vshll.u32 %v357, 16
        %v427 = vrot.slane %v425, 5
        %v428 = vor.u32 %v424, %v427
        %v429 = vrot.slane %v428, 4
        %v431 = vshll.u32 %v358, 16
        %v433 = vrot.slane %v431, 5
        %v434 = vsel %vm420, %v429, %v433
        %v436 = vshrl.u32 %v359, 16
        %v438 = vrot.slane %v436, 4
        %v439 = vshll.u32 %v359, 16
        %v441 = vrot.slane %v439, 5
        %v442 = vor.u32 %v438, %v441
        %v443 = vrot.slane %v442, 4
        %v445 = vshll.u32 %v360, 16
        %v447 = vrot.slane %v445, 5
        %v448 = vsel %vm420, %v443, %v447
        %v450 = vshrl.u32 %v361, 16
        %v452 = vrot.slane %v450, 4
        %v453 = vshll.u32 %v361, 16
        %v455 = vrot.slane %v453, 5
        %v456 = vor.u32 %v452, %v455
        %v457 = vrot.slane %v456, 4
        %v459 = vshll.u32 %v362, 16
        %v461 = vrot.slane %v459, 5
        %v462 = vsel %vm420, %v457, %v461
        %v464 = vshrl.u32 %v363, 16
        %v466 = vrot.slane %v464, 4
        %v467 = vshll.u32 %v363, 16
        %v469 = vrot.slane %v467, 5
        %v470 = vor.u32 %v466, %v469
        %v471 = vrot.slane %v470, 4
        %v473 = vshll.u32 %v364, 16
        %v475 = vrot.slane %v473, 5
        %v476 = vsel %vm420, %v471, %v475
        %v478 = vshrl.u32 %v365, 16
        %v480 = vrot.slane %v478, 4
        %v481 = vshll.u32 %v365, 16
        %v483 = vrot.slane %v481, 5
        %v484 = vor.u32 %v480, %v483
        %v485 = vrot.slane %v484, 4
        %v487 = vshll.u32 %v366, 16
        %v489 = vrot.slane %v487, 5
        %v490 = vsel %vm420, %v485, %v489
        %v492 = vshrl.u32 %v367, 16
        %v494 = vrot.slane %v492, 4
        %v495 = vshll.u32 %v367, 16
        %v497 = vrot.slane %v495, 5
        %v498 = vor.u32 %v494, %v497
        %v499 = vrot.slane %v498, 4
        %v501 = vshll.u32 %v368, 16
        %v503 = vrot.slane %v501, 5
        %v504 = vsel %vm420, %v499, %v503
        %v506 = vshrl.u32 %v369, 16
        %v508 = vrot.slane %v506, 4
        %v509 = vshll.u32 %v369, 16
        %v511 = vrot.slane %v509, 5
        %v512 = vor.u32 %v508, %v511
        %v513 = vrot.slane %v512, 4
        %v515 = vshll.u32 %v370, 16
        %v517 = vrot.slane %v515, 5
        %v518 = vsel %vm420, %v513, %v517
        %v520 = vshrl.u32 %v371, 16
        %v522 = vrot.slane %v520, 4
        %v523 = vshll.u32 %v371, 16
        %v525 = vrot.slane %v523, 5
        %v526 = vor.u32 %v522, %v525
        %v527 = vrot.slane %v526, 4
        %v529 = vshll.u32 %v372, 16
        %v531 = vrot.slane %v529, 5
        %v532 = vsel %vm420, %v527, %v531
        %s533 = scalar_lea.vmem %s3, 2
        %v534 = vld [vmem:[%s533] sm:$0x3]
        %v535 = vunpack.c.l.b16 %v434
        %v536 = vunpack.c.l.b16 %v448
        %v537 = vunpack.c.l.b16 %v462
        %v538 = vunpack.c.l.b16 %v476
        %v539 = vunpack.c.l.b16 %v490
        %v540 = vunpack.c.l.b16 %v504
        %v541 = vunpack.c.l.b16 %v518
        %v542 = vunpack.c.l.b16 %v532
        %v543 = vpack.c.b16 %v536, %v535
        %v544 = vpack.c.b16 %v538, %v537
        %v545 = vpack.c.b16 %v540, %v539
        %v546 = vpack.c.b16 %v542, %v541
        %vm547 = vcmask 31744
        %v549 = vsel %vm547, %v543, 0
        %v552 = vsel %vm547, %v544, 0
        %v555 = vsel %vm547, %v545, 0
        %v558 = vsel %vm547, %v546, 0
        %vm560 = vcmask 1041408
        %v562 = vsel %vm560, %v534, 0
        %564 = vmatprep.subr.bf16.mxu0 0
        %565 = vmatpush1.bf16.msra.mxu0 %v562
        %566 = vmatprep.subr.bf16.mxu0 0
        %567 = vmatpush1.bf16.msra.mxu0 0
        %568 = vmatprep.subr.bf16.mxu0 0
        %569 = vmatpush1.bf16.msra.mxu0 0
        %570 = vmatprep.subr.bf16.mxu0 0
        %571 = vmatpush1.bf16.msra.mxu0 0
        %572 = vmatprep.subr.bf16.mxu0 0
        %573 = vmatpush1.bf16.msra.mxu0 0
        %574 = vmatprep.subr.bf16.mxu0 0
        %575 = vmatpush1.bf16.msra.mxu0 0
        %576 = vmatprep.subr.bf16.mxu0 0
        %577 = vmatpush1.bf16.msra.mxu0 0
        %578 = vmatprep.subr.bf16.mxu0 0
        %579 = vmatpush1.bf16.msra.mxu0 0
        %580 = vmatprep.subr.bf16.mxu0 0
        %581 = vmatpush1.bf16.msra.mxu0 0
        %582 = vmatprep.subr.bf16.mxu0 0
        %583 = vmatpush1.bf16.msra.mxu0 0
        %584 = vmatprep.subr.bf16.mxu0 0
        %585 = vmatpush1.bf16.msra.mxu0 0
        %586 = vmatprep.subr.bf16.mxu0 0
        %587 = vmatpush1.bf16.msra.mxu0 0
        %588 = vmatprep.subr.bf16.mxu0 0
        %589 = vmatpush1.bf16.msra.mxu0 0
        %590 = vmatprep.subr.bf16.mxu0 0
        %591 = vmatpush1.bf16.msra.mxu0 0
        %592 = vmatprep.subr.bf16.mxu0 0
        %593 = vmatpush1.bf16.msra.mxu0 0
        %594 = vmatprep.subr.bf16.mxu0 0
        %595 = vmatpush1.bf16.msra.mxu0 0
        %596 = vmatprep.mubr.bf16.mxu0 0
        %597 = vmatmul.mubr.bf16.gmra.mrb[0].mxu0 %v549
        %v598 = vpop.f32.mrb[0].mxu0
        %v599 = vadd.f32 0.0, %v598
        %v600 = vpop.f32.mrb[0].mxu0
        %v601 = vpop.f32.mrb[0].mxu0
        %v602 = vadd.f32 0.0, %v601
        %v603 = vpop.f32.mrb[0].mxu0
        %604 = vmatprep.mubr.bf16.mxu0 0
        %605 = vmatmul.mubr.bf16.gmra.mrb[0].mxu0 %v552
        %v606 = vpop.f32.mrb[0].mxu0
        %v607 = vadd.f32 0.0, %v606
        %v608 = vpop.f32.mrb[0].mxu0
        %v609 = vpop.f32.mrb[0].mxu0
        %v610 = vadd.f32 0.0, %v609
        %v611 = vpop.f32.mrb[0].mxu0
        %612 = vmatprep.mubr.bf16.mxu0 0
        %613 = vmatmul.mubr.bf16.gmra.mrb[0].mxu0 %v555
        %v614 = vpop.f32.mrb[0].mxu0
        %v615 = vadd.f32 0.0, %v614
        %v616 = vpop.f32.mrb[0].mxu0
        %v617 = vpop.f32.mrb[0].mxu0
        %v618 = vadd.f32 0.0, %v617
        %v619 = vpop.f32.mrb[0].mxu0
        %620 = vmatprep.mubr.bf16.mxu0 0
        %621 = vmatmul.mubr.bf16.gmra.mrb[0].mxu0 %v558
        %v622 = vpop.f32.mrb[0].mxu0
        %v623 = vadd.f32 0.0, %v622
        %v624 = vpop.f32.mrb[0].mxu0
        %v625 = vpop.f32.mrb[0].mxu0
        %v626 = vadd.f32 0.0, %v625
        %v627 = vpop.f32.mrb[0].mxu0
        %628 = vdwg.mxu0
        %v637 = vunpack.c.l.b16 %v357
        %v638 = vunpack.c.l.b16 %v359
        %v639 = vunpack.c.l.b16 %v361
        %v640 = vunpack.c.l.b16 %v363
        %v641 = vunpack.c.l.b16 %v365
        %v642 = vunpack.c.l.b16 %v367
        %v643 = vunpack.c.l.b16 %v369
        %v644 = vunpack.c.l.b16 %v371
        %v645 = vpack.c.b16 %v638, %v637
        %v646 = vpack.c.b16 %v640, %v639
        %v647 = vpack.c.b16 %v642, %v641
        %v648 = vpack.c.b16 %v644, %v643
        %v650 = vsel %vm547, %v645, 0
        %v653 = vsel %vm547, %v646, 0
        %v656 = vsel %vm547, %v647, 0
        %v659 = vsel %vm547, %v648, 0
        %v662 = vsel %vm560, %v417, 0
        %664 = vmatprep.subr.bf16.mxu0 0
        %665 = vmatpush1.bf16.msra.mxu0 %v662
        %666 = vmatprep.subr.bf16.mxu0 0
        %667 = vmatpush1.bf16.msra.mxu0 0
        %668 = vmatprep.subr.bf16.mxu0 0
        %669 = vmatpush1.bf16.msra.mxu0 0
        %670 = vmatprep.subr.bf16.mxu0 0
        %671 = vmatpush1.bf16.msra.mxu0 0
        %672 = vmatprep.subr.bf16.mxu0 0
        %673 = vmatpush1.bf16.msra.mxu0 0
        %674 = vmatprep.subr.bf16.mxu0 0
        %675 = vmatpush1.bf16.msra.mxu0 0
        %676 = vmatprep.subr.bf16.mxu0 0
        %677 = vmatpush1.bf16.msra.mxu0 0
        %678 = vmatprep.subr.bf16.mxu0 0
        %679 = vmatpush1.bf16.msra.mxu0 0
        %680 = vmatprep.subr.bf16.mxu0 0
        %681 = vmatpush1.bf16.msra.mxu0 0
        %682 = vmatprep.subr.bf16.mxu0 0
        %683 = vmatpush1.bf16.msra.mxu0 0
        %684 = vmatprep.subr.bf16.mxu0 0
        %685 = vmatpush1.bf16.msra.mxu0 0
        %686 = vmatprep.subr.bf16.mxu0 0
        %687 = vmatpush1.bf16.msra.mxu0 0
        %688 = vmatprep.subr.bf16.mxu0 0
        %689 = vmatpush1.bf16.msra.mxu0 0
        %690 = vmatprep.subr.bf16.mxu0 0
        %691 = vmatpush1.bf16.msra.mxu0 0
        %692 = vmatprep.subr.bf16.mxu0 0
        %693 = vmatpush1.bf16.msra.mxu0 0
        %694 = vmatprep.subr.bf16.mxu0 0
        %695 = vmatpush1.bf16.msra.mxu0 0
        %696 = vmatprep.mubr.bf16.mxu0 0
        %697 = vmatmul.mubr.bf16.gmra.mrb[0].mxu0 %v650
        %v698 = vpop.f32.mrb[0].mxu0
        %v699 = vadd.f32 %v599, %v698
        %v700 = vpop.f32.mrb[0].mxu0
        %v701 = vpop.f32.mrb[0].mxu0
        %v702 = vadd.f32 %v602, %v701
        %v703 = vpop.f32.mrb[0].mxu0
        %704 = vmatprep.mubr.bf16.mxu0 0
        %705 = vmatmul.mubr.bf16.gmra.mrb[0].mxu0 %v653
        %v706 = vpop.f32.mrb[0].mxu0
        %v707 = vadd.f32 %v607, %v706
        %v708 = vpop.f32.mrb[0].mxu0
        %v709 = vpop.f32.mrb[0].mxu0
        %v710 = vadd.f32 %v610, %v709
        %v711 = vpop.f32.mrb[0].mxu0
        %712 = vmatprep.mubr.bf16.mxu0 0
        %713 = vmatmul.mubr.bf16.gmra.mrb[0].mxu0 %v656
        %v714 = vpop.f32.mrb[0].mxu0
        %v715 = vadd.f32 %v615, %v714
        %v716 = vpop.f32.mrb[0].mxu0
        %v717 = vpop.f32.mrb[0].mxu0
        %v718 = vadd.f32 %v618, %v717
        %v719 = vpop.f32.mrb[0].mxu0
        %720 = vmatprep.mubr.bf16.mxu0 0
        %721 = vmatmul.mubr.bf16.gmra.mrb[0].mxu0 %v659
        %v722 = vpop.f32.mrb[0].mxu0
        %v723 = vadd.f32 %v623, %v722
        %v724 = vpop.f32.mrb[0].mxu0
        %v725 = vpop.f32.mrb[0].mxu0
        %v726 = vadd.f32 %v626, %v725
        %v727 = vpop.f32.mrb[0].mxu0
        %728 = vdwg.mxu0
        %vm737 = vcmask 1042432
        %vm738 = vcmask 1046532
        %vm739 = vmor %vm737, %vm738
        %v740 = vrot.slane %v357, 5
        %v741 = vrot.slane %v740, 4
        %v742 = vrot.slane %v358, 5
        %v743 = vsel %vm739, %v741, %v742
        %v744 = vrot.slane %v359, 5
        %v745 = vrot.slane %v744, 4
        %v746 = vrot.slane %v360, 5
        %v747 = vsel %vm739, %v745, %v746
        %v748 = vrot.slane %v361, 5
        %v749 = vrot.slane %v748, 4
        %v750 = vrot.slane %v362, 5
        %v751 = vsel %vm739, %v749, %v750
        %v752 = vrot.slane %v363, 5
        %v753 = vrot.slane %v752, 4
        %v754 = vrot.slane %v364, 5
        %v755 = vsel %vm739, %v753, %v754
        %v756 = vrot.slane %v365, 5
        %v757 = vrot.slane %v756, 4
        %v758 = vrot.slane %v366, 5
        %v759 = vsel %vm739, %v757, %v758
        %v760 = vrot.slane %v367, 5
        %v761 = vrot.slane %v760, 4
        %v762 = vrot.slane %v368, 5
        %v763 = vsel %vm739, %v761, %v762
        %v764 = vrot.slane %v369, 5
        %v765 = vrot.slane %v764, 4
        %v766 = vrot.slane %v370, 5
        %v767 = vsel %vm739, %v765, %v766
        %v768 = vrot.slane %v371, 5
        %v769 = vrot.slane %v768, 4
        %v770 = vrot.slane %v372, 5
        %v771 = vsel %vm739, %v769, %v770
        %s772 = scalar_lea.vmem %s3, 4
        %v773 = vld [vmem:[%s772] sm:$0x3]
        %v774 = vunpack.c.l.b16 %v743
        %v775 = vunpack.c.l.b16 %v747
        %v776 = vunpack.c.l.b16 %v751
        %v777 = vunpack.c.l.b16 %v755
        %v778 = vunpack.c.l.b16 %v759
        %v779 = vunpack.c.l.b16 %v763
        %v780 = vunpack.c.l.b16 %v767
        %v781 = vunpack.c.l.b16 %v771
        %v782 = vpack.c.b16 %v775, %v774
        %v783 = vpack.c.b16 %v777, %v776
        %v784 = vpack.c.b16 %v779, %v778
        %v785 = vpack.c.b16 %v781, %v780
        %v787 = vsel %vm547, %v782, 0
        %v790 = vsel %vm547, %v783, 0
        %v793 = vsel %vm547, %v784, 0
        %v796 = vsel %vm547, %v785, 0
        %v799 = vsel %vm560, %v773, 0
        %801 = vmatprep.subr.bf16.mxu0 0
        %802 = vmatpush1.bf16.msra.mxu0 %v799
        %803 = vmatprep.subr.bf16.mxu0 0
        %804 = vmatpush1.bf16.msra.mxu0 0
        %805 = vmatprep.subr.bf16.mxu0 0
        %806 = vmatpush1.bf16.msra.mxu0 0
        %807 = vmatprep.subr.bf16.mxu0 0
        %808 = vmatpush1.bf16.msra.mxu0 0
        %809 = vmatprep.subr.bf16.mxu0 0
        %810 = vmatpush1.bf16.msra.mxu0 0
        %811 = vmatprep.subr.bf16.mxu0 0
        %812 = vmatpush1.bf16.msra.mxu0 0
        %813 = vmatprep.subr.bf16.mxu0 0
        %814 = vmatpush1.bf16.msra.mxu0 0
        %815 = vmatprep.subr.bf16.mxu0 0
        %816 = vmatpush1.bf16.msra.mxu0 0
        %817 = vmatprep.subr.bf16.mxu0 0
        %818 = vmatpush1.bf16.msra.mxu0 0
        %819 = vmatprep.subr.bf16.mxu0 0
        %820 = vmatpush1.bf16.msra.mxu0 0
        %821 = vmatprep.subr.bf16.mxu0 0
        %822 = vmatpush1.bf16.msra.mxu0 0
        %823 = vmatprep.subr.bf16.mxu0 0
        %824 = vmatpush1.bf16.msra.mxu0 0
        %825 = vmatprep.subr.bf16.mxu0 0
        %826 = vmatpush1.bf16.msra.mxu0 0
        %827 = vmatprep.subr.bf16.mxu0 0
        %828 = vmatpush1.bf16.msra.mxu0 0
        %829 = vmatprep.subr.bf16.mxu0 0
        %830 = vmatpush1.bf16.msra.mxu0 0
        %831 = vmatprep.subr.bf16.mxu0 0
        %832 = vmatpush1.bf16.msra.mxu0 0
        %833 = vmatprep.mubr.bf16.mxu0 0
        %834 = vmatmul.mubr.bf16.gmra.mrb[0].mxu0 %v787
        %v835 = vpop.f32.mrb[0].mxu0
        %v836 = vadd.f32 0.0, %v835
        %v837 = vpop.f32.mrb[0].mxu0
        %v838 = vpop.f32.mrb[0].mxu0
        %v839 = vadd.f32 0.0, %v838
        %v840 = vpop.f32.mrb[0].mxu0
        %841 = vmatprep.mubr.bf16.mxu0 0
        %842 = vmatmul.mubr.bf16.gmra.mrb[0].mxu0 %v790
        %v843 = vpop.f32.mrb[0].mxu0
        %v844 = vadd.f32 0.0, %v843
        %v845 = vpop.f32.mrb[0].mxu0
        %v846 = vpop.f32.mrb[0].mxu0
        %v847 = vadd.f32 0.0, %v846
        %v848 = vpop.f32.mrb[0].mxu0
        %849 = vmatprep.mubr.bf16.mxu0 0
        %850 = vmatmul.mubr.bf16.gmra.mrb[0].mxu0 %v793
        %v851 = vpop.f32.mrb[0].mxu0
        %v852 = vadd.f32 0.0, %v851
        %v853 = vpop.f32.mrb[0].mxu0
        %v854 = vpop.f32.mrb[0].mxu0
        %v855 = vadd.f32 0.0, %v854
        %v856 = vpop.f32.mrb[0].mxu0
        %857 = vmatprep.mubr.bf16.mxu0 0
        %858 = vmatmul.mubr.bf16.gmra.mrb[0].mxu0 %v796
        %v859 = vpop.f32.mrb[0].mxu0
        %v860 = vadd.f32 0.0, %v859
        %v861 = vpop.f32.mrb[0].mxu0
        %v862 = vpop.f32.mrb[0].mxu0
        %v863 = vadd.f32 0.0, %v862
        %v864 = vpop.f32.mrb[0].mxu0
        %865 = vdwg.mxu0
        %v866 = vadd.f32 %v699, %v836
        %v867 = vadd.f32 %v702, %v839
        %v868 = vadd.f32 %v707, %v844
        %v869 = vadd.f32 %v710, %v847
        %v870 = vadd.f32 %v715, %v852
        %v871 = vadd.f32 %v718, %v855
        %v872 = vadd.f32 %v723, %v860
        %v873 = vadd.f32 %v726, %v863
        %s874 = scalar_lea.vmem %s3, 6
        %v875 = vld [vmem:[%s874] sm:$0x3]
        %v877 = vunpack.c.l.b16 %v373
        %v878 = vpack.c.b16 %v639, %v638
        %v879 = vpack.c.b16 %v641, %v640
        %v880 = vpack.c.b16 %v643, %v642
        %v881 = vpack.c.b16 %v877, %v644
        %v883 = vsel %vm547, %v878, 0
        %v886 = vsel %vm547, %v879, 0
        %v889 = vsel %vm547, %v880, 0
        %v892 = vsel %vm547, %v881, 0
        %v895 = vsel %vm560, %v875, 0
        %897 = vmatprep.subr.bf16.mxu0 0
        %898 = vmatpush1.bf16.msra.mxu0 %v895
        %899 = vmatprep.subr.bf16.mxu0 0
        %900 = vmatpush1.bf16.msra.mxu0 0
        %901 = vmatprep.subr.bf16.mxu0 0
        %902 = vmatpush1.bf16.msra.mxu0 0
        %903 = vmatprep.subr.bf16.mxu0 0
        %904 = vmatpush1.bf16.msra.mxu0 0
        %905 = vmatprep.subr.bf16.mxu0 0
        %906 = vmatpush1.bf16.msra.mxu0 0
        %907 = vmatprep.subr.bf16.mxu0 0
        %908 = vmatpush1.bf16.msra.mxu0 0
        %909 = vmatprep.subr.bf16.mxu0 0
        %910 = vmatpush1.bf16.msra.mxu0 0
        %911 = vmatprep.subr.bf16.mxu0 0
        %912 = vmatpush1.bf16.msra.mxu0 0
        %913 = vmatprep.subr.bf16.mxu0 0
        %914 = vmatpush1.bf16.msra.mxu0 0
        %915 = vmatprep.subr.bf16.mxu0 0
        %916 = vmatpush1.bf16.msra.mxu0 0
        %917 = vmatprep.subr.bf16.mxu0 0
        %918 = vmatpush1.bf16.msra.mxu0 0
        %919 = vmatprep.subr.bf16.mxu0 0
        %920 = vmatpush1.bf16.msra.mxu0 0
        %921 = vmatprep.subr.bf16.mxu0 0
        %922 = vmatpush1.bf16.msra.mxu0 0
        %923 = vmatprep.subr.bf16.mxu0 0
        %924 = vmatpush1.bf16.msra.mxu0 0
        %925 = vmatprep.subr.bf16.mxu0 0
        %926 = vmatpush1.bf16.msra.mxu0 0
        %927 = vmatprep.subr.bf16.mxu0 0
        %928 = vmatpush1.bf16.msra.mxu0 0
        %929 = vmatprep.mubr.bf16.mxu0 0
        %930 = vmatmul.mubr.bf16.gmra.mrb[0].mxu0 %v883
        %v931 = vpop.f32.mrb[0].mxu0
        %v932 = vadd.f32 0.0, %v931
        %v933 = vpop.f32.mrb[0].mxu0
        %v934 = vpop.f32.mrb[0].mxu0
        %v935 = vadd.f32 0.0, %v934
        %v936 = vpop.f32.mrb[0].mxu0
        %937 = vmatprep.mubr.bf16.mxu0 0
        %938 = vmatmul.mubr.bf16.gmra.mrb[0].mxu0 %v886
        %v939 = vpop.f32.mrb[0].mxu0
        %v940 = vadd.f32 0.0, %v939
        %v941 = vpop.f32.mrb[0].mxu0
        %v942 = vpop.f32.mrb[0].mxu0
        %v943 = vadd.f32 0.0, %v942
        %v944 = vpop.f32.mrb[0].mxu0
        %945 = vmatprep.mubr.bf16.mxu0 0
        %946 = vmatmul.mubr.bf16.gmra.mrb[0].mxu0 %v889
        %v947 = vpop.f32.mrb[0].mxu0
        %v948 = vadd.f32 0.0, %v947
        %v949 = vpop.f32.mrb[0].mxu0
        %v950 = vpop.f32.mrb[0].mxu0
        %v951 = vadd.f32 0.0, %v950
        %v952 = vpop.f32.mrb[0].mxu0
        %953 = vmatprep.mubr.bf16.mxu0 0
        %954 = vmatmul.mubr.bf16.gmra.mrb[0].mxu0 %v892
        %v955 = vpop.f32.mrb[0].mxu0
        %v956 = vadd.f32 0.0, %v955
        %v957 = vpop.f32.mrb[0].mxu0
        %v958 = vpop.f32.mrb[0].mxu0
        %v959 = vadd.f32 0.0, %v958
        %v960 = vpop.f32.mrb[0].mxu0
        %961 = vdwg.mxu0
        %v962 = vadd.f32 %v866, %v932
        %v963 = vadd.f32 %v867, %v935
        %v964 = vadd.f32 %v868, %v940
        %v965 = vadd.f32 %v869, %v943
        %v966 = vadd.f32 %v870, %v948
        %v967 = vadd.f32 %v871, %v951
        %v968 = vadd.f32 %v872, %v956
        %v969 = vadd.f32 %v873, %v959
        %v971 = vshrl.u32 %v373, 16
        %v973 = vrot.slane %v971, 4
        %v974 = vshll.u32 %v373, 16
        %v976 = vrot.slane %v974, 5
        %v977 = vor.u32 %v973, %v976
        %v978 = vrot.slane %v977, 4
        %v980 = vshll.u32 %v374, 16
        %v982 = vrot.slane %v980, 5
        %v983 = vsel %vm420, %v978, %v982
        %s984 = scalar_lea.vmem %s3, 8
        %v985 = vld [vmem:[%s984] sm:$0x3]
        %v986 = vunpack.c.l.b16 %v983
        %v987 = vpack.c.b16 %v537, %v536
        %v988 = vpack.c.b16 %v539, %v538
        %v989 = vpack.c.b16 %v541, %v540
        %v990 = vpack.c.b16 %v986, %v542
        %v992 = vsel %vm547, %v987, 0
        %v995 = vsel %vm547, %v988, 0
        %v998 = vsel %vm547, %v989, 0
        %v1001 = vsel %vm547, %v990, 0
        %v1004 = vsel %vm560, %v985, 0
        %1006 = vmatprep.subr.bf16.mxu0 0
        %1007 = vmatpush1.bf16.msra.mxu0 %v1004
        %1008 = vmatprep.subr.bf16.mxu0 0
        %1009 = vmatpush1.bf16.msra.mxu0 0
        %1010 = vmatprep.subr.bf16.mxu0 0
        %1011 = vmatpush1.bf16.msra.mxu0 0
        %1012 = vmatprep.subr.bf16.mxu0 0
        %1013 = vmatpush1.bf16.msra.mxu0 0
        %1014 = vmatprep.subr.bf16.mxu0 0
        %1015 = vmatpush1.bf16.msra.mxu0 0
        %1016 = vmatprep.subr.bf16.mxu0 0
        %1017 = vmatpush1.bf16.msra.mxu0 0
        %1018 = vmatprep.subr.bf16.mxu0 0
        %1019 = vmatpush1.bf16.msra.mxu0 0
        %1020 = vmatprep.subr.bf16.mxu0 0
        %1021 = vmatpush1.bf16.msra.mxu0 0
        %1022 = vmatprep.subr.bf16.mxu0 0
        %1023 = vmatpush1.bf16.msra.mxu0 0
        %1024 = vmatprep.subr.bf16.mxu0 0
        %1025 = vmatpush1.bf16.msra.mxu0 0
        %1026 = vmatprep.subr.bf16.mxu0 0
        %1027 = vmatpush1.bf16.msra.mxu0 0
        %1028 = vmatprep.subr.bf16.mxu0 0
        %1029 = vmatpush1.bf16.msra.mxu0 0
        %1030 = vmatprep.subr.bf16.mxu0 0
        %1031 = vmatpush1.bf16.msra.mxu0 0
        %1032 = vmatprep.subr.bf16.mxu0 0
        %1033 = vmatpush1.bf16.msra.mxu0 0
        %1034 = vmatprep.subr.bf16.mxu0 0
        %1035 = vmatpush1.bf16.msra.mxu0 0
        %1036 = vmatprep.subr.bf16.mxu0 0
        %1037 = vmatpush1.bf16.msra.mxu0 0
        %1038 = vmatprep.mubr.bf16.mxu0 0
        %1039 = vmatmul.mubr.bf16.gmra.mrb[0].mxu0 %v992
        %v1040 = vpop.f32.mrb[0].mxu0
        %v1041 = vadd.f32 0.0, %v1040
        %v1042 = vpop.f32.mrb[0].mxu0
        %v1043 = vpop.f32.mrb[0].mxu0
        %v1044 = vadd.f32 0.0, %v1043
        %v1045 = vpop.f32.mrb[0].mxu0
        %1046 = vmatprep.mubr.bf16.mxu0 0
        %1047 = vmatmul.mubr.bf16.gmra.mrb[0].mxu0 %v995
        %v1048 = vpop.f32.mrb[0].mxu0
        %v1049 = vadd.f32 0.0, %v1048
        %v1050 = vpop.f32.mrb[0].mxu0
        %v1051 = vpop.f32.mrb[0].mxu0
        %v1052 = vadd.f32 0.0, %v1051
        %v1053 = vpop.f32.mrb[0].mxu0
        %1054 = vmatprep.mubr.bf16.mxu0 0
        %1055 = vmatmul.mubr.bf16.gmra.mrb[0].mxu0 %v998
        %v1056 = vpop.f32.mrb[0].mxu0
        %v1057 = vadd.f32 0.0, %v1056
        %v1058 = vpop.f32.mrb[0].mxu0
        %v1059 = vpop.f32.mrb[0].mxu0
        %v1060 = vadd.f32 0.0, %v1059
        %v1061 = vpop.f32.mrb[0].mxu0
        %1062 = vmatprep.mubr.bf16.mxu0 0
        %1063 = vmatmul.mubr.bf16.gmra.mrb[0].mxu0 %v1001
        %v1064 = vpop.f32.mrb[0].mxu0
        %v1065 = vadd.f32 0.0, %v1064
        %v1066 = vpop.f32.mrb[0].mxu0
        %v1067 = vpop.f32.mrb[0].mxu0
        %v1068 = vadd.f32 0.0, %v1067
        %v1069 = vpop.f32.mrb[0].mxu0
        %1070 = vdwg.mxu0
        %v1071 = vadd.f32 %v962, %v1041
        %v1072 = vadd.f32 %v963, %v1044
        %v1073 = vadd.f32 %v964, %v1049
        %v1074 = vadd.f32 %v965, %v1052
        %v1075 = vadd.f32 %v966, %v1057
        %v1076 = vadd.f32 %v967, %v1060
        %v1077 = vadd.f32 %v968, %v1065
        %v1078 = vadd.f32 %v969, %v1068
        %v1080 = vrot.slane %v373, 5
        %v1081 = vrot.slane %v1080, 4
        %v1082 = vrot.slane %v374, 5
        %v1083 = vsel %vm739, %v1081, %v1082
        %s1084 = scalar_lea.vmem %s3, 10
        %v1085 = vld [vmem:[%s1084] sm:$0x3]
        %v1086 = vunpack.c.l.b16 %v1083
        %v1087 = vpack.c.b16 %v776, %v775
        %v1088 = vpack.c.b16 %v778, %v777
        %v1089 = vpack.c.b16 %v780, %v779
        %v1090 = vpack.c.b16 %v1086, %v781
        %v1092 = vsel %vm547, %v1087, 0
        %v1095 = vsel %vm547, %v1088, 0
        %v1098 = vsel %vm547, %v1089, 0
        %v1101 = vsel %vm547, %v1090, 0
        %v1104 = vsel %vm560, %v1085, 0
        %1106 = vmatprep.subr.bf16.mxu0 0
        %1107 = vmatpush1.bf16.msra.mxu0 %v1104
        %1108 = vmatprep.subr.bf16.mxu0 0
        %1109 = vmatpush1.bf16.msra.mxu0 0
        %1110 = vmatprep.subr.bf16.mxu0 0
        %1111 = vmatpush1.bf16.msra.mxu0 0
        %1112 = vmatprep.subr.bf16.mxu0 0
        %1113 = vmatpush1.bf16.msra.mxu0 0
        %1114 = vmatprep.subr.bf16.mxu0 0
        %1115 = vmatpush1.bf16.msra.mxu0 0
        %1116 = vmatprep.subr.bf16.mxu0 0
        %1117 = vmatpush1.bf16.msra.mxu0 0
        %1118 = vmatprep.subr.bf16.mxu0 0
        %1119 = vmatpush1.bf16.msra.mxu0 0
        %1120 = vmatprep.subr.bf16.mxu0 0
        %1121 = vmatpush1.bf16.msra.mxu0 0
        %1122 = vmatprep.subr.bf16.mxu0 0
        %1123 = vmatpush1.bf16.msra.mxu0 0
        %1124 = vmatprep.subr.bf16.mxu0 0
        %1125 = vmatpush1.bf16.msra.mxu0 0
        %1126 = vmatprep.subr.bf16.mxu0 0
        %1127 = vmatpush1.bf16.msra.mxu0 0
        %1128 = vmatprep.subr.bf16.mxu0 0
        %1129 = vmatpush1.bf16.msra.mxu0 0
        %1130 = vmatprep.subr.bf16.mxu0 0
        %1131 = vmatpush1.bf16.msra.mxu0 0
        %1132 = vmatprep.subr.bf16.mxu0 0
        %1133 = vmatpush1.bf16.msra.mxu0 0
        %1134 = vmatprep.subr.bf16.mxu0 0
        %1135 = vmatpush1.bf16.msra.mxu0 0
        %1136 = vmatprep.subr.bf16.mxu0 0
        %1137 = vmatpush1.bf16.msra.mxu0 0
        %1138 = vmatprep.mubr.bf16.mxu0 0
        %1139 = vmatmul.mubr.bf16.gmra.mrb[0].mxu0 %v1092
        %v1140 = vpop.f32.mrb[0].mxu0
        %v1141 = vadd.f32 0.0, %v1140
        %v1142 = vpop.f32.mrb[0].mxu0
        %v1143 = vpop.f32.mrb[0].mxu0
        %v1144 = vadd.f32 0.0, %v1143
        %v1145 = vpop.f32.mrb[0].mxu0
        %1146 = vmatprep.mubr.bf16.mxu0 0
        %1147 = vmatmul.mubr.bf16.gmra.mrb[0].mxu0 %v1095
        %v1148 = vpop.f32.mrb[0].mxu0
        %v1149 = vadd.f32 0.0, %v1148
        %v1150 = vpop.f32.mrb[0].mxu0
        %v1151 = vpop.f32.mrb[0].mxu0
        %v1152 = vadd.f32 0.0, %v1151
        %v1153 = vpop.f32.mrb[0].mxu0
        %1154 = vmatprep.mubr.bf16.mxu0 0
        %1155 = vmatmul.mubr.bf16.gmra.mrb[0].mxu0 %v1098
        %v1156 = vpop.f32.mrb[0].mxu0
        %v1157 = vadd.f32 0.0, %v1156
        %v1158 = vpop.f32.mrb[0].mxu0
        %v1159 = vpop.f32.mrb[0].mxu0
        %v1160 = vadd.f32 0.0, %v1159
        %v1161 = vpop.f32.mrb[0].mxu0
        %1162 = vmatprep.mubr.bf16.mxu0 0
        %1163 = vmatmul.mubr.bf16.gmra.mrb[0].mxu0 %v1101
        %v1164 = vpop.f32.mrb[0].mxu0
        %v1165 = vadd.f32 0.0, %v1164
        %v1166 = vpop.f32.mrb[0].mxu0
        %v1167 = vpop.f32.mrb[0].mxu0
        %v1168 = vadd.f32 0.0, %v1167
        %v1169 = vpop.f32.mrb[0].mxu0
        %1170 = vdwg.mxu0
        %v1171 = vadd.f32 %v1071, %v1141
        %v1172 = vadd.f32 %v1072, %v1144
        %v1173 = vadd.f32 %v1073, %v1149
        %v1174 = vadd.f32 %v1074, %v1152
        %v1175 = vadd.f32 %v1075, %v1157
        %v1176 = vadd.f32 %v1076, %v1160
        %v1177 = vadd.f32 %v1077, %v1165
        %v1178 = vadd.f32 %v1078, %v1168
        %s1179 = scalar_lea.vmem %s3, 12
        %v1180 = vld [vmem:[%s1179] sm:$0x3]
        %v1182 = vunpack.c.l.b16 %v375
        %v1183 = vpack.c.b16 %v1182, %v877
        %v1185 = vsel %vm547, %v1183, 0
        %v1188 = vsel %vm560, %v1180, 0
        %1190 = vmatprep.subr.bf16.mxu0 0
        %1191 = vmatpush1.bf16.msra.mxu0 %v1188
        %1192 = vmatprep.subr.bf16.mxu0 0
        %1193 = vmatpush1.bf16.msra.mxu0 0
        %1194 = vmatprep.subr.bf16.mxu0 0
        %1195 = vmatpush1.bf16.msra.mxu0 0
        %1196 = vmatprep.subr.bf16.mxu0 0
        %1197 = vmatpush1.bf16.msra.mxu0 0
        %1198 = vmatprep.subr.bf16.mxu0 0
        %1199 = vmatpush1.bf16.msra.mxu0 0
        %1200 = vmatprep.subr.bf16.mxu0 0
        %1201 = vmatpush1.bf16.msra.mxu0 0
        %1202 = vmatprep.subr.bf16.mxu0 0
        %1203 = vmatpush1.bf16.msra.mxu0 0
        %1204 = vmatprep.subr.bf16.mxu0 0
        %1205 = vmatpush1.bf16.msra.mxu0 0
        %1206 = vmatprep.subr.bf16.mxu0 0
        %1207 = vmatpush1.bf16.msra.mxu0 0
        %1208 = vmatprep.subr.bf16.mxu0 0
        %1209 = vmatpush1.bf16.msra.mxu0 0
        %1210 = vmatprep.subr.bf16.mxu0 0
        %1211 = vmatpush1.bf16.msra.mxu0 0
        %1212 = vmatprep.subr.bf16.mxu0 0
        %1213 = vmatpush1.bf16.msra.mxu0 0
        %1214 = vmatprep.subr.bf16.mxu0 0
        %1215 = vmatpush1.bf16.msra.mxu0 0
        %1216 = vmatprep.subr.bf16.mxu0 0
        %1217 = vmatpush1.bf16.msra.mxu0 0
        %1218 = vmatprep.subr.bf16.mxu0 0
        %1219 = vmatpush1.bf16.msra.mxu0 0
        %1220 = vmatprep.subr.bf16.mxu0 0
        %1221 = vmatpush1.bf16.msra.mxu0 0
        %1222 = vmatprep.mubr.bf16.mxu0 0
        %1223 = vmatmul.mubr.bf16.gmra.mrb[0].mxu0 %v653
        %v1224 = vpop.f32.mrb[0].mxu0
        %v1225 = vadd.f32 0.0, %v1224
        %v1226 = vpop.f32.mrb[0].mxu0
        %v1227 = vpop.f32.mrb[0].mxu0
        %v1228 = vadd.f32 0.0, %v1227
        %v1229 = vpop.f32.mrb[0].mxu0
        %1230 = vmatprep.mubr.bf16.mxu0 0
        %1231 = vmatmul.mubr.bf16.gmra.mrb[0].mxu0 %v656
        %v1232 = vpop.f32.mrb[0].mxu0
        %v1233 = vadd.f32 0.0, %v1232
        %v1234 = vpop.f32.mrb[0].mxu0
        %v1235 = vpop.f32.mrb[0].mxu0
        %v1236 = vadd.f32 0.0, %v1235
        %v1237 = vpop.f32.mrb[0].mxu0
        %1238 = vmatprep.mubr.bf16.mxu0 0
        %1239 = vmatmul.mubr.bf16.gmra.mrb[0].mxu0 %v659
        %v1240 = vpop.f32.mrb[0].mxu0
        %v1241 = vadd.f32 0.0, %v1240
        %v1242 = vpop.f32.mrb[0].mxu0
        %v1243 = vpop.f32.mrb[0].mxu0
        %v1244 = vadd.f32 0.0, %v1243
        %v1245 = vpop.f32.mrb[0].mxu0
        %1246 = vmatprep.mubr.bf16.mxu0 0
        %1247 = vmatmul.mubr.bf16.gmra.mrb[0].mxu0 %v1185
        %v1248 = vpop.f32.mrb[0].mxu0
        %v1249 = vadd.f32 0.0, %v1248
        %v1250 = vpop.f32.mrb[0].mxu0
        %v1251 = vpop.f32.mrb[0].mxu0
        %v1252 = vadd.f32 0.0, %v1251
        %v1253 = vpop.f32.mrb[0].mxu0
        %1254 = vdwg.mxu0
        %v1255 = vadd.f32 %v1171, %v1225
        %v1256 = vadd.f32 %v1172, %v1228
        %v1257 = vadd.f32 %v1173, %v1233
        %v1258 = vadd.f32 %v1174, %v1236
        %v1259 = vadd.f32 %v1175, %v1241
        %v1260 = vadd.f32 %v1176, %v1244
        %v1261 = vadd.f32 %v1177, %v1249
        %v1262 = vadd.f32 %v1178, %v1252
        %v1264 = vshrl.u32 %v375, 16
        %v1266 = vrot.slane %v1264, 4
        %v1267 = vshll.u32 %v375, 16
        %v1269 = vrot.slane %v1267, 5
        %v1270 = vor.u32 %v1266, %v1269
        %v1271 = vrot.slane %v1270, 4
        %v1273 = vshll.u32 %v376, 16
        %v1275 = vrot.slane %v1273, 5
        %v1276 = vsel %vm420, %v1271, %v1275
        %s1277 = scalar_lea.vmem %s3, 14
        %v1278 = vld [vmem:[%s1277] sm:$0x3]
        %v1279 = vunpack.c.l.b16 %v1276
        %v1280 = vpack.c.b16 %v1279, %v986
        %v1282 = vsel %vm547, %v1280, 0
        %v1285 = vsel %vm560, %v1278, 0
        %1287 = vmatprep.subr.bf16.mxu0 0
        %1288 = vmatpush1.bf16.msra.mxu0 %v1285
        %1289 = vmatprep.subr.bf16.mxu0 0
        %1290 = vmatpush1.bf16.msra.mxu0 0
        %1291 = vmatprep.subr.bf16.mxu0 0
        %1292 = vmatpush1.bf16.msra.mxu0 0
        %1293 = vmatprep.subr.bf16.mxu0 0
        %1294 = vmatpush1.bf16.msra.mxu0 0
        %1295 = vmatprep.subr.bf16.mxu0 0
        %1296 = vmatpush1.bf16.msra.mxu0 0
        %1297 = vmatprep.subr.bf16.mxu0 0
        %1298 = vmatpush1.bf16.msra.mxu0 0
        %1299 = vmatprep.subr.bf16.mxu0 0
        %1300 = vmatpush1.bf16.msra.mxu0 0
        %1301 = vmatprep.subr.bf16.mxu0 0
        %1302 = vmatpush1.bf16.msra.mxu0 0
        %1303 = vmatprep.subr.bf16.mxu0 0
        %1304 = vmatpush1.bf16.msra.mxu0 0
        %1305 = vmatprep.subr.bf16.mxu0 0
        %1306 = vmatpush1.bf16.msra.mxu0 0
        %1307 = vmatprep.subr.bf16.mxu0 0
        %1308 = vmatpush1.bf16.msra.mxu0 0
        %1309 = vmatprep.subr.bf16.mxu0 0
        %1310 = vmatpush1.bf16.msra.mxu0 0
        %1311 = vmatprep.subr.bf16.mxu0 0
        %1312 = vmatpush1.bf16.msra.mxu0 0
        %1313 = vmatprep.subr.bf16.mxu0 0
        %1314 = vmatpush1.bf16.msra.mxu0 0
        %1315 = vmatprep.subr.bf16.mxu0 0
        %1316 = vmatpush1.bf16.msra.mxu0 0
        %1317 = vmatprep.subr.bf16.mxu0 0
        %1318 = vmatpush1.bf16.msra.mxu0 0
        %1319 = vmatprep.mubr.bf16.mxu0 0
        %1320 = vmatmul.mubr.bf16.gmra.mrb[0].mxu0 %v552
        %v1321 = vpop.f32.mrb[0].mxu0
        %v1322 = vadd.f32 0.0, %v1321
        %v1323 = vpop.f32.mrb[0].mxu0
        %v1324 = vpop.f32.mrb[0].mxu0
        %v1325 = vadd.f32 0.0, %v1324
        %v1326 = vpop.f32.mrb[0].mxu0
        %1327 = vmatprep.mubr.bf16.mxu0 0
        %1328 = vmatmul.mubr.bf16.gmra.mrb[0].mxu0 %v555
        %v1329 = vpop.f32.mrb[0].mxu0
        %v1330 = vadd.f32 0.0, %v1329
        %v1331 = vpop.f32.mrb[0].mxu0
        %v1332 = vpop.f32.mrb[0].mxu0
        %v1333 = vadd.f32 0.0, %v1332
        %v1334 = vpop.f32.mrb[0].mxu0
        %1335 = vmatprep.mubr.bf16.mxu0 0
        %1336 = vmatmul.mubr.bf16.gmra.mrb[0].mxu0 %v558
        %v1337 = vpop.f32.mrb[0].mxu0
        %v1338 = vadd.f32 0.0, %v1337
        %v1339 = vpop.f32.mrb[0].mxu0
        %v1340 = vpop.f32.mrb[0].mxu0
        %v1341 = vadd.f32 0.0, %v1340
        %v1342 = vpop.f32.mrb[0].mxu0
        %1343 = vmatprep.mubr.bf16.mxu0 0
        %1344 = vmatmul.mubr.bf16.gmra.mrb[0].mxu0 %v1282
        %v1345 = vpop.f32.mrb[0].mxu0
        %v1346 = vadd.f32 0.0, %v1345
        %v1347 = vpop.f32.mrb[0].mxu0
        %v1348 = vpop.f32.mrb[0].mxu0
        %v1349 = vadd.f32 0.0, %v1348
        %v1350 = vpop.f32.mrb[0].mxu0
        %1351 = vdwg.mxu0
        %v1352 = vadd.f32 %v1255, %v1322
        %v1353 = vadd.f32 %v1256, %v1325
        %v1354 = vadd.f32 %v1257, %v1330
        %v1355 = vadd.f32 %v1258, %v1333
        %v1356 = vadd.f32 %v1259, %v1338
        %v1357 = vadd.f32 %v1260, %v1341
        %v1358 = vadd.f32 %v1261, %v1346
        %v1359 = vadd.f32 %v1262, %v1349
        %v1361 = vrot.slane %v375, 5
        %v1362 = vrot.slane %v1361, 4
        %v1363 = vrot.slane %v376, 5
        %v1364 = vsel %vm739, %v1362, %v1363
        %s1365 = scalar_lea.vmem %s3, 16
        %v1366 = vld [vmem:[%s1365] sm:$0x3]
        %v1367 = vunpack.c.l.b16 %v1364
        %v1368 = vpack.c.b16 %v1367, %v1086
        %v1370 = vsel %vm547, %v1368, 0
        %v1373 = vsel %vm560, %v1366, 0
        %1375 = vmatprep.subr.bf16.mxu0 0
        %1376 = vmatpush1.bf16.msra.mxu0 %v1373
        %1377 = vmatprep.subr.bf16.mxu0 0
        %1378 = vmatpush1.bf16.msra.mxu0 0
        %1379 = vmatprep.subr.bf16.mxu0 0
        %1380 = vmatpush1.bf16.msra.mxu0 0
        %1381 = vmatprep.subr.bf16.mxu0 0
        %1382 = vmatpush1.bf16.msra.mxu0 0
        %1383 = vmatprep.subr.bf16.mxu0 0
        %1384 = vmatpush1.bf16.msra.mxu0 0
        %1385 = vmatprep.subr.bf16.mxu0 0
        %1386 = vmatpush1.bf16.msra.mxu0 0
        %1387 = vmatprep.subr.bf16.mxu0 0
        %1388 = vmatpush1.bf16.msra.mxu0 0
        %1389 = vmatprep.subr.bf16.mxu0 0
        %1390 = vmatpush1.bf16.msra.mxu0 0
        %1391 = vmatprep.subr.bf16.mxu0 0
        %1392 = vmatpush1.bf16.msra.mxu0 0
        %1393 = vmatprep.subr.bf16.mxu0 0
        %1394 = vmatpush1.bf16.msra.mxu0 0
        %1395 = vmatprep.subr.bf16.mxu0 0
        %1396 = vmatpush1.bf16.msra.mxu0 0
        %1397 = vmatprep.subr.bf16.mxu0 0
        %1398 = vmatpush1.bf16.msra.mxu0 0
        %1399 = vmatprep.subr.bf16.mxu0 0
        %1400 = vmatpush1.bf16.msra.mxu0 0
        %1401 = vmatprep.subr.bf16.mxu0 0
        %1402 = vmatpush1.bf16.msra.mxu0 0
        %1403 = vmatprep.subr.bf16.mxu0 0
        %1404 = vmatpush1.bf16.msra.mxu0 0
        %1405 = vmatprep.subr.bf16.mxu0 0
        %1406 = vmatpush1.bf16.msra.mxu0 0
        %1407 = vmatprep.mubr.bf16.mxu0 0
        %1408 = vmatmul.mubr.bf16.gmra.mrb[0].mxu0 %v790
        %v1409 = vpop.f32.mrb[0].mxu0
        %v1410 = vadd.f32 0.0, %v1409
        %v1411 = vpop.f32.mrb[0].mxu0
        %v1412 = vpop.f32.mrb[0].mxu0
        %v1413 = vadd.f32 0.0, %v1412
        %v1414 = vpop.f32.mrb[0].mxu0
        %1415 = vmatprep.mubr.bf16.mxu0 0
        %1416 = vmatmul.mubr.bf16.gmra.mrb[0].mxu0 %v793
        %v1417 = vpop.f32.mrb[0].mxu0
        %v1418 = vadd.f32 0.0, %v1417
        %v1419 = vpop.f32.mrb[0].mxu0
        %v1420 = vpop.f32.mrb[0].mxu0
        %v1421 = vadd.f32 0.0, %v1420
        %v1422 = vpop.f32.mrb[0].mxu0
        %1423 = vmatprep.mubr.bf16.mxu0 0
        %1424 = vmatmul.mubr.bf16.gmra.mrb[0].mxu0 %v796
        %v1425 = vpop.f32.mrb[0].mxu0
        %v1426 = vadd.f32 0.0, %v1425
        %v1427 = vpop.f32.mrb[0].mxu0
        %v1428 = vpop.f32.mrb[0].mxu0
        %v1429 = vadd.f32 0.0, %v1428
        %v1430 = vpop.f32.mrb[0].mxu0
        %1431 = vmatprep.mubr.bf16.mxu0 0
        %1432 = vmatmul.mubr.bf16.gmra.mrb[0].mxu0 %v1370
        %v1433 = vpop.f32.mrb[0].mxu0
        %v1434 = vadd.f32 0.0, %v1433
        %v1435 = vpop.f32.mrb[0].mxu0
        %v1436 = vpop.f32.mrb[0].mxu0
        %v1437 = vadd.f32 0.0, %v1436
        %v1438 = vpop.f32.mrb[0].mxu0
        %1439 = vdwg.mxu0
        %v1440 = vadd.f32 %v1352, %v1410
        %v1441 = vadd.f32 %v1353, %v1413
        %v1442 = vadd.f32 %v1354, %v1418
        %v1443 = vadd.f32 %v1355, %v1421
        %v1444 = vadd.f32 %v1356, %v1426
        %v1445 = vadd.f32 %v1357, %v1429
        %v1446 = vadd.f32 %v1358, %v1434
        %v1447 = vadd.f32 %v1359, %v1437
        %s1448 = scalar_lea.vmem %s3, 18
        %v1449 = vld [vmem:[%s1448] sm:$0x3]
        %v1458 = vunpack.c.l.b16 %v377
        %v1459 = vunpack.c.l.b16 %v379
        %v1460 = vunpack.c.l.b16 %v381
        %v1461 = vunpack.c.l.b16 %v383
        %v1462 = vunpack.c.l.b16 %v385
        %v1463 = vunpack.c.l.b16 %v387
        %v1464 = vunpack.c.l.b16 %v389
        %v1465 = vunpack.c.l.b16 %v391
        %v1466 = vpack.c.b16 %v1459, %v1458
        %v1467 = vpack.c.b16 %v1461, %v1460
        %v1468 = vpack.c.b16 %v1463, %v1462
        %v1469 = vpack.c.b16 %v1465, %v1464
        %v1471 = vsel %vm547, %v1466, 0
        %v1474 = vsel %vm547, %v1467, 0
        %v1477 = vsel %vm547, %v1468, 0
        %v1480 = vsel %vm547, %v1469, 0
        %v1483 = vsel %vm560, %v1449, 0
        %1485 = vmatprep.subr.bf16.mxu0 0
        %1486 = vmatpush1.bf16.msra.mxu0 %v1483
        %1487 = vmatprep.subr.bf16.mxu0 0
        %1488 = vmatpush1.bf16.msra.mxu0 0
        %1489 = vmatprep.subr.bf16.mxu0 0
        %1490 = vmatpush1.bf16.msra.mxu0 0
        %1491 = vmatprep.subr.bf16.mxu0 0
        %1492 = vmatpush1.bf16.msra.mxu0 0
        %1493 = vmatprep.subr.bf16.mxu0 0
        %1494 = vmatpush1.bf16.msra.mxu0 0
        %1495 = vmatprep.subr.bf16.mxu0 0
        %1496 = vmatpush1.bf16.msra.mxu0 0
        %1497 = vmatprep.subr.bf16.mxu0 0
        %1498 = vmatpush1.bf16.msra.mxu0 0
        %1499 = vmatprep.subr.bf16.mxu0 0
        %1500 = vmatpush1.bf16.msra.mxu0 0
        %1501 = vmatprep.subr.bf16.mxu0 0
        %1502 = vmatpush1.bf16.msra.mxu0 0
        %1503 = vmatprep.subr.bf16.mxu0 0
        %1504 = vmatpush1.bf16.msra.mxu0 0
        %1505 = vmatprep.subr.bf16.mxu0 0
        %1506 = vmatpush1.bf16.msra.mxu0 0
        %1507 = vmatprep.subr.bf16.mxu0 0
        %1508 = vmatpush1.bf16.msra.mxu0 0
        %1509 = vmatprep.subr.bf16.mxu0 0
        %1510 = vmatpush1.bf16.msra.mxu0 0
        %1511 = vmatprep.subr.bf16.mxu0 0
        %1512 = vmatpush1.bf16.msra.mxu0 0
        %1513 = vmatprep.subr.bf16.mxu0 0
        %1514 = vmatpush1.bf16.msra.mxu0 0
        %1515 = vmatprep.subr.bf16.mxu0 0
        %1516 = vmatpush1.bf16.msra.mxu0 0
        %1517 = vmatprep.mubr.bf16.mxu0 0
        %1518 = vmatmul.mubr.bf16.gmra.mrb[0].mxu0 %v1471
        %v1519 = vpop.f32.mrb[0].mxu0
        %v1520 = vadd.f32 0.0, %v1519
        %v1521 = vpop.f32.mrb[0].mxu0
        %v1522 = vpop.f32.mrb[0].mxu0
        %v1523 = vadd.f32 0.0, %v1522
        %v1524 = vpop.f32.mrb[0].mxu0
        %1525 = vmatprep.mubr.bf16.mxu0 0
        %1526 = vmatmul.mubr.bf16.gmra.mrb[0].mxu0 %v1474
        %v1527 = vpop.f32.mrb[0].mxu0
        %v1528 = vadd.f32 0.0, %v1527
        %v1529 = vpop.f32.mrb[0].mxu0
        %v1530 = vpop.f32.mrb[0].mxu0
        %v1531 = vadd.f32 0.0, %v1530
        %v1532 = vpop.f32.mrb[0].mxu0
        %1533 = vmatprep.mubr.bf16.mxu0 0
        %1534 = vmatmul.mubr.bf16.gmra.mrb[0].mxu0 %v1477
        %v1535 = vpop.f32.mrb[0].mxu0
        %v1536 = vadd.f32 0.0, %v1535
        %v1537 = vpop.f32.mrb[0].mxu0
        %v1538 = vpop.f32.mrb[0].mxu0
        %v1539 = vadd.f32 0.0, %v1538
        %v1540 = vpop.f32.mrb[0].mxu0
        %1541 = vmatprep.mubr.bf16.mxu0 0
        %1542 = vmatmul.mubr.bf16.gmra.mrb[0].mxu0 %v1480
        %v1543 = vpop.f32.mrb[0].mxu0
        %v1544 = vadd.f32 0.0, %v1543
        %v1545 = vpop.f32.mrb[0].mxu0
        %v1546 = vpop.f32.mrb[0].mxu0
        %v1547 = vadd.f32 0.0, %v1546
        %v1548 = vpop.f32.mrb[0].mxu0
        %1549 = vdwg.mxu0
        %v1550 = vadd.f32 %v1440, %v1520
        %v1551 = vadd.f32 %v1441, %v1523
        %v1552 = vadd.f32 %v1442, %v1528
        %v1553 = vadd.f32 %v1443, %v1531
        %v1554 = vadd.f32 %v1444, %v1536
        %v1555 = vadd.f32 %v1445, %v1539
        %v1556 = vadd.f32 %v1446, %v1544
        %v1557 = vadd.f32 %v1447, %v1547
        %v1559 = vshrl.u32 %v377, 16
        %v1561 = vrot.slane %v1559, 4
        %v1562 = vshll.u32 %v377, 16
        %v1564 = vrot.slane %v1562, 5
        %v1565 = vor.u32 %v1561, %v1564
        %v1566 = vrot.slane %v1565, 4
        %v1568 = vshll.u32 %v378, 16
        %v1570 = vrot.slane %v1568, 5
        %v1571 = vsel %vm420, %v1566, %v1570
        %v1573 = vshrl.u32 %v379, 16
        %v1575 = vrot.slane %v1573, 4
        %v1576 = vshll.u32 %v379, 16
        %v1578 = vrot.slane %v1576, 5
        %v1579 = vor.u32 %v1575, %v1578
        %v1580 = vrot.slane %v1579, 4
        %v1582 = vshll.u32 %v380, 16
        %v1584 = vrot.slane %v1582, 5
        %v1585 = vsel %vm420, %v1580, %v1584
        %v1587 = vshrl.u32 %v381, 16
        %v1589 = vrot.slane %v1587, 4
        %v1590 = vshll.u32 %v381, 16
        %v1592 = vrot.slane %v1590, 5
        %v1593 = vor.u32 %v1589, %v1592
        %v1594 = vrot.slane %v1593, 4
        %v1596 = vshll.u32 %v382, 16
        %v1598 = vrot.slane %v1596, 5
        %v1599 = vsel %vm420, %v1594, %v1598
        %v1601 = vshrl.u32 %v383, 16
        %v1603 = vrot.slane %v1601, 4
        %v1604 = vshll.u32 %v383, 16
        %v1606 = vrot.slane %v1604, 5
        %v1607 = vor.u32 %v1603, %v1606
        %v1608 = vrot.slane %v1607, 4
        %v1610 = vshll.u32 %v384, 16
        %v1612 = vrot.slane %v1610, 5
        %v1613 = vsel %vm420, %v1608, %v1612
        %v1615 = vshrl.u32 %v385, 16
        %v1617 = vrot.slane %v1615, 4
        %v1618 = vshll.u32 %v385, 16
        %v1620 = vrot.slane %v1618, 5
        %v1621 = vor.u32 %v1617, %v1620
        %v1622 = vrot.slane %v1621, 4
        %v1624 = vshll.u32 %v386, 16
        %v1626 = vrot.slane %v1624, 5
        %v1627 = vsel %vm420, %v1622, %v1626
        %v1629 = vshrl.u32 %v387, 16
        %v1631 = vrot.slane %v1629, 4
        %v1632 = vshll.u32 %v387, 16
        %v1634 = vrot.slane %v1632, 5
        %v1635 = vor.u32 %v1631, %v1634
        %v1636 = vrot.slane %v1635, 4
        %v1638 = vshll.u32 %v388, 16
        %v1640 = vrot.slane %v1638, 5
        %v1641 = vsel %vm420, %v1636, %v1640
        %v1643 = vshrl.u32 %v389, 16
        %v1645 = vrot.slane %v1643, 4
        %v1646 = vshll.u32 %v389, 16
        %v1648 = vrot.slane %v1646, 5
        %v1649 = vor.u32 %v1645, %v1648
        %v1650 = vrot.slane %v1649, 4
        %v1652 = vshll.u32 %v390, 16
        %v1654 = vrot.slane %v1652, 5
        %v1655 = vsel %vm420, %v1650, %v1654
        %v1657 = vshrl.u32 %v391, 16
        %v1659 = vrot.slane %v1657, 4
        %v1660 = vshll.u32 %v391, 16
        %v1662 = vrot.slane %v1660, 5
        %v1663 = vor.u32 %v1659, %v1662
        %v1664 = vrot.slane %v1663, 4
        %v1666 = vshll.u32 %v392, 16
        %v1668 = vrot.slane %v1666, 5
        %v1669 = vsel %vm420, %v1664, %v1668
        %s1670 = scalar_lea.vmem %s3, 20
        %v1671 = vld [vmem:[%s1670] sm:$0x3]
        %v1672 = vunpack.c.l.b16 %v1571
        %v1673 = vunpack.c.l.b16 %v1585
        %v1674 = vunpack.c.l.b16 %v1599
        %v1675 = vunpack.c.l.b16 %v1613
        %v1676 = vunpack.c.l.b16 %v1627
        %v1677 = vunpack.c.l.b16 %v1641
        %v1678 = vunpack.c.l.b16 %v1655
        %v1679 = vunpack.c.l.b16 %v1669
        %v1680 = vpack.c.b16 %v1673, %v1672
        %v1681 = vpack.c.b16 %v1675, %v1674
        %v1682 = vpack.c.b16 %v1677, %v1676
        %v1683 = vpack.c.b16 %v1679, %v1678
        %v1685 = vsel %vm547, %v1680, 0
        %v1688 = vsel %vm547, %v1681, 0
        %v1691 = vsel %vm547, %v1682, 0
        %v1694 = vsel %vm547, %v1683, 0
        %v1697 = vsel %vm560, %v1671, 0
        %1699 = vmatprep.subr.bf16.mxu0 0
        %1700 = vmatpush1.bf16.msra.mxu0 %v1697
        %1701 = vmatprep.subr.bf16.mxu0 0
        %1702 = vmatpush1.bf16.msra.mxu0 0
        %1703 = vmatprep.subr.bf16.mxu0 0
        %1704 = vmatpush1.bf16.msra.mxu0 0
        %1705 = vmatprep.subr.bf16.mxu0 0
        %1706 = vmatpush1.bf16.msra.mxu0 0
        %1707 = vmatprep.subr.bf16.mxu0 0
        %1708 = vmatpush1.bf16.msra.mxu0 0
        %1709 = vmatprep.subr.bf16.mxu0 0
        %1710 = vmatpush1.bf16.msra.mxu0 0
        %1711 = vmatprep.subr.bf16.mxu0 0
        %1712 = vmatpush1.bf16.msra.mxu0 0
        %1713 = vmatprep.subr.bf16.mxu0 0
        %1714 = vmatpush1.bf16.msra.mxu0 0
        %1715 = vmatprep.subr.bf16.mxu0 0
        %1716 = vmatpush1.bf16.msra.mxu0 0
        %1717 = vmatprep.subr.bf16.mxu0 0
        %1718 = vmatpush1.bf16.msra.mxu0 0
        %1719 = vmatprep.subr.bf16.mxu0 0
        %1720 = vmatpush1.bf16.msra.mxu0 0
        %1721 = vmatprep.subr.bf16.mxu0 0
        %1722 = vmatpush1.bf16.msra.mxu0 0
        %1723 = vmatprep.subr.bf16.mxu0 0
        %1724 = vmatpush1.bf16.msra.mxu0 0
        %1725 = vmatprep.subr.bf16.mxu0 0
        %1726 = vmatpush1.bf16.msra.mxu0 0
        %1727 = vmatprep.subr.bf16.mxu0 0
        %1728 = vmatpush1.bf16.msra.mxu0 0
        %1729 = vmatprep.subr.bf16.mxu0 0
        %1730 = vmatpush1.bf16.msra.mxu0 0
        %1731 = vmatprep.mubr.bf16.mxu0 0
        %1732 = vmatmul.mubr.bf16.gmra.mrb[0].mxu0 %v1685
        %v1733 = vpop.f32.mrb[0].mxu0
        %v1734 = vadd.f32 0.0, %v1733
        %v1735 = vpop.f32.mrb[0].mxu0
        %v1736 = vpop.f32.mrb[0].mxu0
        %v1737 = vadd.f32 0.0, %v1736
        %v1738 = vpop.f32.mrb[0].mxu0
        %1739 = vmatprep.mubr.bf16.mxu0 0
        %1740 = vmatmul.mubr.bf16.gmra.mrb[0].mxu0 %v1688
        %v1741 = vpop.f32.mrb[0].mxu0
        %v1742 = vadd.f32 0.0, %v1741
        %v1743 = vpop.f32.mrb[0].mxu0
        %v1744 = vpop.f32.mrb[0].mxu0
        %v1745 = vadd.f32 0.0, %v1744
        %v1746 = vpop.f32.mrb[0].mxu0
        %1747 = vmatprep.mubr.bf16.mxu0 0
        %1748 = vmatmul.mubr.bf16.gmra.mrb[0].mxu0 %v1691
        %v1749 = vpop.f32.mrb[0].mxu0
        %v1750 = vadd.f32 0.0, %v1749
        %v1751 = vpop.f32.mrb[0].mxu0
        %v1752 = vpop.f32.mrb[0].mxu0
        %v1753 = vadd.f32 0.0, %v1752
        %v1754 = vpop.f32.mrb[0].mxu0
        %1755 = vmatprep.mubr.bf16.mxu0 0
        %1756 = vmatmul.mubr.bf16.gmra.mrb[0].mxu0 %v1694
        %v1757 = vpop.f32.mrb[0].mxu0
        %v1758 = vadd.f32 0.0, %v1757
        %v1759 = vpop.f32.mrb[0].mxu0
        %v1760 = vpop.f32.mrb[0].mxu0
        %v1761 = vadd.f32 0.0, %v1760
        %v1762 = vpop.f32.mrb[0].mxu0
        %1763 = vdwg.mxu0
        %v1764 = vadd.f32 %v1550, %v1734
        %v1765 = vadd.f32 %v1551, %v1737
        %v1766 = vadd.f32 %v1552, %v1742
        %v1767 = vadd.f32 %v1553, %v1745
        %v1768 = vadd.f32 %v1554, %v1750
        %v1769 = vadd.f32 %v1555, %v1753
        %v1770 = vadd.f32 %v1556, %v1758
        %v1771 = vadd.f32 %v1557, %v1761
        %v1780 = vrot.slane %v377, 5
        %v1781 = vrot.slane %v1780, 4
        %v1782 = vrot.slane %v378, 5
        %v1783 = vsel %vm739, %v1781, %v1782
        %v1784 = vrot.slane %v379, 5
        %v1785 = vrot.slane %v1784, 4
        %v1786 = vrot.slane %v380, 5
        %v1787 = vsel %vm739, %v1785, %v1786
        %v1788 = vrot.slane %v381, 5
        %v1789 = vrot.slane %v1788, 4
        %v1790 = vrot.slane %v382, 5
        %v1791 = vsel %vm739, %v1789, %v1790
        %v1792 = vrot.slane %v383, 5
        %v1793 = vrot.slane %v1792, 4
        %v1794 = vrot.slane %v384, 5
        %v1795 = vsel %vm739, %v1793, %v1794
        %v1796 = vrot.slane %v385, 5
        %v1797 = vrot.slane %v1796, 4
        %v1798 = vrot.slane %v386, 5
        %v1799 = vsel %vm739, %v1797, %v1798
        %v1800 = vrot.slane %v387, 5
        %v1801 = vrot.slane %v1800, 4
        %v1802 = vrot.slane %v388, 5
        %v1803 = vsel %vm739, %v1801, %v1802
        %v1804 = vrot.slane %v389, 5
        %v1805 = vrot.slane %v1804, 4
        %v1806 = vrot.slane %v390, 5
        %v1807 = vsel %vm739, %v1805, %v1806
        %v1808 = vrot.slane %v391, 5
        %v1809 = vrot.slane %v1808, 4
        %v1810 = vrot.slane %v392, 5
        %v1811 = vsel %vm739, %v1809, %v1810
        %s1812 = scalar_lea.vmem %s3, 22
        %v1813 = vld [vmem:[%s1812] sm:$0x3]
        %v1814 = vunpack.c.l.b16 %v1783
        %v1815 = vunpack.c.l.b16 %v1787
        %v1816 = vunpack.c.l.b16 %v1791
        %v1817 = vunpack.c.l.b16 %v1795
        %v1818 = vunpack.c.l.b16 %v1799
        %v1819 = vunpack.c.l.b16 %v1803
        %v1820 = vunpack.c.l.b16 %v1807
        %v1821 = vunpack.c.l.b16 %v1811
        %v1822 = vpack.c.b16 %v1815, %v1814
        %v1823 = vpack.c.b16 %v1817, %v1816
        %v1824 = vpack.c.b16 %v1819, %v1818
        %v1825 = vpack.c.b16 %v1821, %v1820
        %v1827 = vsel %vm547, %v1822, 0
        %v1830 = vsel %vm547, %v1823, 0
        %v1833 = vsel %vm547, %v1824, 0
        %v1836 = vsel %vm547, %v1825, 0
        %v1839 = vsel %vm560, %v1813, 0
        %1841 = vmatprep.subr.bf16.mxu0 0
        %1842 = vmatpush1.bf16.msra.mxu0 %v1839
        %1843 = vmatprep.subr.bf16.mxu0 0
        %1844 = vmatpush1.bf16.msra.mxu0 0
        %1845 = vmatprep.subr.bf16.mxu0 0
        %1846 = vmatpush1.bf16.msra.mxu0 0
        %1847 = vmatprep.subr.bf16.mxu0 0
        %1848 = vmatpush1.bf16.msra.mxu0 0
        %1849 = vmatprep.subr.bf16.mxu0 0
        %1850 = vmatpush1.bf16.msra.mxu0 0
        %1851 = vmatprep.subr.bf16.mxu0 0
        %1852 = vmatpush1.bf16.msra.mxu0 0
        %1853 = vmatprep.subr.bf16.mxu0 0
        %1854 = vmatpush1.bf16.msra.mxu0 0
        %1855 = vmatprep.subr.bf16.mxu0 0
        %1856 = vmatpush1.bf16.msra.mxu0 0
        %1857 = vmatprep.subr.bf16.mxu0 0
        %1858 = vmatpush1.bf16.msra.mxu0 0
        %1859 = vmatprep.subr.bf16.mxu0 0
        %1860 = vmatpush1.bf16.msra.mxu0 0
        %1861 = vmatprep.subr.bf16.mxu0 0
        %1862 = vmatpush1.bf16.msra.mxu0 0
        %1863 = vmatprep.subr.bf16.mxu0 0
        %1864 = vmatpush1.bf16.msra.mxu0 0
        %1865 = vmatprep.subr.bf16.mxu0 0
        %1866 = vmatpush1.bf16.msra.mxu0 0
        %1867 = vmatprep.subr.bf16.mxu0 0
        %1868 = vmatpush1.bf16.msra.mxu0 0
        %1869 = vmatprep.subr.bf16.mxu0 0
        %1870 = vmatpush1.bf16.msra.mxu0 0
        %1871 = vmatprep.subr.bf16.mxu0 0
        %1872 = vmatpush1.bf16.msra.mxu0 0
        %1873 = vmatprep.mubr.bf16.mxu0 0
        %1874 = vmatmul.mubr.bf16.gmra.mrb[0].mxu0 %v1827
        %v1875 = vpop.f32.mrb[0].mxu0
        %v1876 = vadd.f32 0.0, %v1875
        %v1877 = vpop.f32.mrb[0].mxu0
        %v1878 = vpop.f32.mrb[0].mxu0
        %v1879 = vadd.f32 0.0, %v1878
        %v1880 = vpop.f32.mrb[0].mxu0
        %1881 = vmatprep.mubr.bf16.mxu0 0
        %1882 = vmatmul.mubr.bf16.gmra.mrb[0].mxu0 %v1830
        %v1883 = vpop.f32.mrb[0].mxu0
        %v1884 = vadd.f32 0.0, %v1883
        %v1885 = vpop.f32.mrb[0].mxu0
        %v1886 = vpop.f32.mrb[0].mxu0
        %v1887 = vadd.f32 0.0, %v1886
        %v1888 = vpop.f32.mrb[0].mxu0
        %1889 = vmatprep.mubr.bf16.mxu0 0
        %1890 = vmatmul.mubr.bf16.gmra.mrb[0].mxu0 %v1833
        %v1891 = vpop.f32.mrb[0].mxu0
        %v1892 = vadd.f32 0.0, %v1891
        %v1893 = vpop.f32.mrb[0].mxu0
        %v1894 = vpop.f32.mrb[0].mxu0
        %v1895 = vadd.f32 0.0, %v1894
        %v1896 = vpop.f32.mrb[0].mxu0
        %1897 = vmatprep.mubr.bf16.mxu0 0
        %1898 = vmatmul.mubr.bf16.gmra.mrb[0].mxu0 %v1836
        %v1899 = vpop.f32.mrb[0].mxu0
        %v1900 = vadd.f32 0.0, %v1899
        %v1901 = vpop.f32.mrb[0].mxu0
        %v1902 = vpop.f32.mrb[0].mxu0
        %v1903 = vadd.f32 0.0, %v1902
        %v1904 = vpop.f32.mrb[0].mxu0
        %1905 = vdwg.mxu0
        %v1906 = vadd.f32 %v1764, %v1876
        %v1907 = vadd.f32 %v1765, %v1879
        %v1908 = vadd.f32 %v1766, %v1884
        %v1909 = vadd.f32 %v1767, %v1887
        %v1910 = vadd.f32 %v1768, %v1892
        %v1911 = vadd.f32 %v1769, %v1895
        %v1912 = vadd.f32 %v1770, %v1900
        %v1913 = vadd.f32 %v1771, %v1903
        %s1914 = scalar_lea.vmem %s3, 24
        %v1915 = vld [vmem:[%s1914] sm:$0x3]
        %v1917 = vunpack.c.l.b16 %v393
        %v1918 = vpack.c.b16 %v1460, %v1459
        %v1919 = vpack.c.b16 %v1462, %v1461
        %v1920 = vpack.c.b16 %v1464, %v1463
        %v1921 = vpack.c.b16 %v1917, %v1465
        %v1923 = vsel %vm547, %v1918, 0
        %v1926 = vsel %vm547, %v1919, 0
        %v1929 = vsel %vm547, %v1920, 0
        %v1932 = vsel %vm547, %v1921, 0
        %v1935 = vsel %vm560, %v1915, 0
        %1937 = vmatprep.subr.bf16.mxu0 0
        %1938 = vmatpush1.bf16.msra.mxu0 %v1935
        %1939 = vmatprep.subr.bf16.mxu0 0
        %1940 = vmatpush1.bf16.msra.mxu0 0
        %1941 = vmatprep.subr.bf16.mxu0 0
        %1942 = vmatpush1.bf16.msra.mxu0 0
        %1943 = vmatprep.subr.bf16.mxu0 0
        %1944 = vmatpush1.bf16.msra.mxu0 0
        %1945 = vmatprep.subr.bf16.mxu0 0
        %1946 = vmatpush1.bf16.msra.mxu0 0
        %1947 = vmatprep.subr.bf16.mxu0 0
        %1948 = vmatpush1.bf16.msra.mxu0 0
        %1949 = vmatprep.subr.bf16.mxu0 0
        %1950 = vmatpush1.bf16.msra.mxu0 0
        %1951 = vmatprep.subr.bf16.mxu0 0
        %1952 = vmatpush1.bf16.msra.mxu0 0
        %1953 = vmatprep.subr.bf16.mxu0 0
        %1954 = vmatpush1.bf16.msra.mxu0 0
        %1955 = vmatprep.subr.bf16.mxu0 0
        %1956 = vmatpush1.bf16.msra.mxu0 0
        %1957 = vmatprep.subr.bf16.mxu0 0
        %1958 = vmatpush1.bf16.msra.mxu0 0
        %1959 = vmatprep.subr.bf16.mxu0 0
        %1960 = vmatpush1.bf16.msra.mxu0 0
        %1961 = vmatprep.subr.bf16.mxu0 0
        %1962 = vmatpush1.bf16.msra.mxu0 0
        %1963 = vmatprep.subr.bf16.mxu0 0
        %1964 = vmatpush1.bf16.msra.mxu0 0
        %1965 = vmatprep.subr.bf16.mxu0 0
        %1966 = vmatpush1.bf16.msra.mxu0 0
        %1967 = vmatprep.subr.bf16.mxu0 0
        %1968 = vmatpush1.bf16.msra.mxu0 0
        %1969 = vmatprep.mubr.bf16.mxu0 0
        %1970 = vmatmul.mubr.bf16.gmra.mrb[0].mxu0 %v1923
        %v1971 = vpop.f32.mrb[0].mxu0
        %v1972 = vadd.f32 0.0, %v1971
        %v1973 = vpop.f32.mrb[0].mxu0
        %v1974 = vpop.f32.mrb[0].mxu0
        %v1975 = vadd.f32 0.0, %v1974
        %v1976 = vpop.f32.mrb[0].mxu0
        %1977 = vmatprep.mubr.bf16.mxu0 0
        %1978 = vmatmul.mubr.bf16.gmra.mrb[0].mxu0 %v1926
        %v1979 = vpop.f32.mrb[0].mxu0
        %v1980 = vadd.f32 0.0, %v1979
        %v1981 = vpop.f32.mrb[0].mxu0
        %v1982 = vpop.f32.mrb[0].mxu0
        %v1983 = vadd.f32 0.0, %v1982
        %v1984 = vpop.f32.mrb[0].mxu0
        %1985 = vmatprep.mubr.bf16.mxu0 0
        %1986 = vmatmul.mubr.bf16.gmra.mrb[0].mxu0 %v1929
        %v1987 = vpop.f32.mrb[0].mxu0
        %v1988 = vadd.f32 0.0, %v1987
        %v1989 = vpop.f32.mrb[0].mxu0
        %v1990 = vpop.f32.mrb[0].mxu0
        %v1991 = vadd.f32 0.0, %v1990
        %v1992 = vpop.f32.mrb[0].mxu0
        %1993 = vmatprep.mubr.bf16.mxu0 0
        %1994 = vmatmul.mubr.bf16.gmra.mrb[0].mxu0 %v1932
        %v1995 = vpop.f32.mrb[0].mxu0
        %v1996 = vadd.f32 0.0, %v1995
        %v1997 = vpop.f32.mrb[0].mxu0
        %v1998 = vpop.f32.mrb[0].mxu0
        %v1999 = vadd.f32 0.0, %v1998
        %v2000 = vpop.f32.mrb[0].mxu0
        %2001 = vdwg.mxu0
        %v2002 = vadd.f32 %v1906, %v1972
        %v2003 = vadd.f32 %v1907, %v1975
        %v2004 = vadd.f32 %v1908, %v1980
        %v2005 = vadd.f32 %v1909, %v1983
        %v2006 = vadd.f32 %v1910, %v1988
        %v2007 = vadd.f32 %v1911, %v1991
        %v2008 = vadd.f32 %v1912, %v1996
        %v2009 = vadd.f32 %v1913, %v1999
        %v2011 = vshrl.u32 %v393, 16
        %v2013 = vrot.slane %v2011, 4
        %v2014 = vshll.u32 %v393, 16
        %v2016 = vrot.slane %v2014, 5
        %v2017 = vor.u32 %v2013, %v2016
        %v2018 = vrot.slane %v2017, 4
        %v2020 = vshll.u32 %v394, 16
        %v2022 = vrot.slane %v2020, 5
        %v2023 = vsel %vm420, %v2018, %v2022
        %s2024 = scalar_lea.vmem %s3, 26
        %v2025 = vld [vmem:[%s2024] sm:$0x3]
        %v2026 = vunpack.c.l.b16 %v2023
        %v2027 = vpack.c.b16 %v1674, %v1673
        %v2028 = vpack.c.b16 %v1676, %v1675
        %v2029 = vpack.c.b16 %v1678, %v1677
        %v2030 = vpack.c.b16 %v2026, %v1679
        %v2032 = vsel %vm547, %v2027, 0
        %v2035 = vsel %vm547, %v2028, 0
        %v2038 = vsel %vm547, %v2029, 0
        %v2041 = vsel %vm547, %v2030, 0
        %v2044 = vsel %vm560, %v2025, 0
        %2046 = vmatprep.subr.bf16.mxu0 0
        %2047 = vmatpush1.bf16.msra.mxu0 %v2044
        %2048 = vmatprep.subr.bf16.mxu0 0
        %2049 = vmatpush1.bf16.msra.mxu0 0
        %2050 = vmatprep.subr.bf16.mxu0 0
        %2051 = vmatpush1.bf16.msra.mxu0 0
        %2052 = vmatprep.subr.bf16.mxu0 0
        %2053 = vmatpush1.bf16.msra.mxu0 0
        %2054 = vmatprep.subr.bf16.mxu0 0
        %2055 = vmatpush1.bf16.msra.mxu0 0
        %2056 = vmatprep.subr.bf16.mxu0 0
        %2057 = vmatpush1.bf16.msra.mxu0 0
        %2058 = vmatprep.subr.bf16.mxu0 0
        %2059 = vmatpush1.bf16.msra.mxu0 0
        %2060 = vmatprep.subr.bf16.mxu0 0
        %2061 = vmatpush1.bf16.msra.mxu0 0
        %2062 = vmatprep.subr.bf16.mxu0 0
        %2063 = vmatpush1.bf16.msra.mxu0 0
        %2064 = vmatprep.subr.bf16.mxu0 0
        %2065 = vmatpush1.bf16.msra.mxu0 0
        %2066 = vmatprep.subr.bf16.mxu0 0
        %2067 = vmatpush1.bf16.msra.mxu0 0
        %2068 = vmatprep.subr.bf16.mxu0 0
        %2069 = vmatpush1.bf16.msra.mxu0 0
        %2070 = vmatprep.subr.bf16.mxu0 0
        %2071 = vmatpush1.bf16.msra.mxu0 0
        %2072 = vmatprep.subr.bf16.mxu0 0
        %2073 = vmatpush1.bf16.msra.mxu0 0
        %2074 = vmatprep.subr.bf16.mxu0 0
        %2075 = vmatpush1.bf16.msra.mxu0 0
        %2076 = vmatprep.subr.bf16.mxu0 0
        %2077 = vmatpush1.bf16.msra.mxu0 0
        %2078 = vmatprep.mubr.bf16.mxu0 0
        %2079 = vmatmul.mubr.bf16.gmra.mrb[0].mxu0 %v2032
        %v2080 = vpop.f32.mrb[0].mxu0
        %v2081 = vadd.f32 0.0, %v2080
        %v2082 = vpop.f32.mrb[0].mxu0
        %v2083 = vpop.f32.mrb[0].mxu0
        %v2084 = vadd.f32 0.0, %v2083
        %v2085 = vpop.f32.mrb[0].mxu0
        %2086 = vmatprep.mubr.bf16.mxu0 0
        %2087 = vmatmul.mubr.bf16.gmra.mrb[0].mxu0 %v2035
        %v2088 = vpop.f32.mrb[0].mxu0
        %v2089 = vadd.f32 0.0, %v2088
        %v2090 = vpop.f32.mrb[0].mxu0
        %v2091 = vpop.f32.mrb[0].mxu0
        %v2092 = vadd.f32 0.0, %v2091
        %v2093 = vpop.f32.mrb[0].mxu0
        %2094 = vmatprep.mubr.bf16.mxu0 0
        %2095 = vmatmul.mubr.bf16.gmra.mrb[0].mxu0 %v2038
        %v2096 = vpop.f32.mrb[0].mxu0
        %v2097 = vadd.f32 0.0, %v2096
        %v2098 = vpop.f32.mrb[0].mxu0
        %v2099 = vpop.f32.mrb[0].mxu0
        %v2100 = vadd.f32 0.0, %v2099
        %v2101 = vpop.f32.mrb[0].mxu0
        %2102 = vmatprep.mubr.bf16.mxu0 0
        %2103 = vmatmul.mubr.bf16.gmra.mrb[0].mxu0 %v2041
        %v2104 = vpop.f32.mrb[0].mxu0
        %v2105 = vadd.f32 0.0, %v2104
        %v2106 = vpop.f32.mrb[0].mxu0
        %v2107 = vpop.f32.mrb[0].mxu0
        %v2108 = vadd.f32 0.0, %v2107
        %v2109 = vpop.f32.mrb[0].mxu0
        %2110 = vdwg.mxu0
        %v2111 = vadd.f32 %v2002, %v2081
        %v2112 = vadd.f32 %v2003, %v2084
        %v2113 = vadd.f32 %v2004, %v2089
        %v2114 = vadd.f32 %v2005, %v2092
        %v2115 = vadd.f32 %v2006, %v2097
        %v2116 = vadd.f32 %v2007, %v2100
        %v2117 = vadd.f32 %v2008, %v2105
        %v2118 = vadd.f32 %v2009, %v2108
        %v2120 = vrot.slane %v393, 5
        %v2121 = vrot.slane %v2120, 4
        %v2122 = vrot.slane %v394, 5
        %v2123 = vsel %vm739, %v2121, %v2122
        %s2124 = scalar_lea.vmem %s3, 28
        %v2125 = vld [vmem:[%s2124] sm:$0x3]
        %v2126 = vunpack.c.l.b16 %v2123
        %v2127 = vpack.c.b16 %v1816, %v1815
        %v2128 = vpack.c.b16 %v1818, %v1817
        %v2129 = vpack.c.b16 %v1820, %v1819
        %v2130 = vpack.c.b16 %v2126, %v1821
        %v2132 = vsel %vm547, %v2127, 0
        %v2135 = vsel %vm547, %v2128, 0
        %v2138 = vsel %vm547, %v2129, 0
        %v2141 = vsel %vm547, %v2130, 0
        %v2144 = vsel %vm560, %v2125, 0
        %2146 = vmatprep.subr.bf16.mxu0 0
        %2147 = vmatpush1.bf16.msra.mxu0 %v2144
        %2148 = vmatprep.subr.bf16.mxu0 0
        %2149 = vmatpush1.bf16.msra.mxu0 0
        %2150 = vmatprep.subr.bf16.mxu0 0
        %2151 = vmatpush1.bf16.msra.mxu0 0
        %2152 = vmatprep.subr.bf16.mxu0 0
        %2153 = vmatpush1.bf16.msra.mxu0 0
        %2154 = vmatprep.subr.bf16.mxu0 0
        %2155 = vmatpush1.bf16.msra.mxu0 0
        %2156 = vmatprep.subr.bf16.mxu0 0
        %2157 = vmatpush1.bf16.msra.mxu0 0
        %2158 = vmatprep.subr.bf16.mxu0 0
        %2159 = vmatpush1.bf16.msra.mxu0 0
        %2160 = vmatprep.subr.bf16.mxu0 0
        %2161 = vmatpush1.bf16.msra.mxu0 0
        %2162 = vmatprep.subr.bf16.mxu0 0
        %2163 = vmatpush1.bf16.msra.mxu0 0
        %2164 = vmatprep.subr.bf16.mxu0 0
        %2165 = vmatpush1.bf16.msra.mxu0 0
        %2166 = vmatprep.subr.bf16.mxu0 0
        %2167 = vmatpush1.bf16.msra.mxu0 0
        %2168 = vmatprep.subr.bf16.mxu0 0
        %2169 = vmatpush1.bf16.msra.mxu0 0
        %2170 = vmatprep.subr.bf16.mxu0 0
        %2171 = vmatpush1.bf16.msra.mxu0 0
        %2172 = vmatprep.subr.bf16.mxu0 0
        %2173 = vmatpush1.bf16.msra.mxu0 0
        %2174 = vmatprep.subr.bf16.mxu0 0
        %2175 = vmatpush1.bf16.msra.mxu0 0
        %2176 = vmatprep.subr.bf16.mxu0 0
        %2177 = vmatpush1.bf16.msra.mxu0 0
        %2178 = vmatprep.mubr.bf16.mxu0 0
        %2179 = vmatmul.mubr.bf16.gmra.mrb[0].mxu0 %v2132
        %v2180 = vpop.f32.mrb[0].mxu0
        %v2181 = vadd.f32 0.0, %v2180
        %v2182 = vpop.f32.mrb[0].mxu0
        %v2183 = vpop.f32.mrb[0].mxu0
        %v2184 = vadd.f32 0.0, %v2183
        %v2185 = vpop.f32.mrb[0].mxu0
        %2186 = vmatprep.mubr.bf16.mxu0 0
        %2187 = vmatmul.mubr.bf16.gmra.mrb[0].mxu0 %v2135
        %v2188 = vpop.f32.mrb[0].mxu0
        %v2189 = vadd.f32 0.0, %v2188
        %v2190 = vpop.f32.mrb[0].mxu0
        %v2191 = vpop.f32.mrb[0].mxu0
        %v2192 = vadd.f32 0.0, %v2191
        %v2193 = vpop.f32.mrb[0].mxu0
        %2194 = vmatprep.mubr.bf16.mxu0 0
        %2195 = vmatmul.mubr.bf16.gmra.mrb[0].mxu0 %v2138
        %v2196 = vpop.f32.mrb[0].mxu0
        %v2197 = vadd.f32 0.0, %v2196
        %v2198 = vpop.f32.mrb[0].mxu0
        %v2199 = vpop.f32.mrb[0].mxu0
        %v2200 = vadd.f32 0.0, %v2199
        %v2201 = vpop.f32.mrb[0].mxu0
        %2202 = vmatprep.mubr.bf16.mxu0 0
        %2203 = vmatmul.mubr.bf16.gmra.mrb[0].mxu0 %v2141
        %v2204 = vpop.f32.mrb[0].mxu0
        %v2205 = vadd.f32 0.0, %v2204
        %v2206 = vpop.f32.mrb[0].mxu0
        %v2207 = vpop.f32.mrb[0].mxu0
        %v2208 = vadd.f32 0.0, %v2207
        %v2209 = vpop.f32.mrb[0].mxu0
        %2210 = vdwg.mxu0
        %v2211 = vadd.f32 %v2111, %v2181
        %v2212 = vadd.f32 %v2112, %v2184
        %v2213 = vadd.f32 %v2113, %v2189
        %v2214 = vadd.f32 %v2114, %v2192
        %v2215 = vadd.f32 %v2115, %v2197
        %v2216 = vadd.f32 %v2116, %v2200
        %v2217 = vadd.f32 %v2117, %v2205
        %v2218 = vadd.f32 %v2118, %v2208
        %s2219 = scalar_lea.vmem %s3, 30
        %v2220 = vld [vmem:[%s2219] sm:$0x3]
        %v2222 = vunpack.c.l.b16 %v395
        %v2223 = vpack.c.b16 %v2222, %v1917
        %v2225 = vsel %vm547, %v2223, 0
        %v2228 = vsel %vm560, %v2220, 0
        %2230 = vmatprep.subr.bf16.mxu0 0
        %2231 = vmatpush1.bf16.msra.mxu0 %v2228
        %2232 = vmatprep.subr.bf16.mxu0 0
        %2233 = vmatpush1.bf16.msra.mxu0 0
        %2234 = vmatprep.subr.bf16.mxu0 0
        %2235 = vmatpush1.bf16.msra.mxu0 0
        %2236 = vmatprep.subr.bf16.mxu0 0
        %2237 = vmatpush1.bf16.msra.mxu0 0
        %2238 = vmatprep.subr.bf16.mxu0 0
        %2239 = vmatpush1.bf16.msra.mxu0 0
        %2240 = vmatprep.subr.bf16.mxu0 0
        %2241 = vmatpush1.bf16.msra.mxu0 0
        %2242 = vmatprep.subr.bf16.mxu0 0
        %2243 = vmatpush1.bf16.msra.mxu0 0
        %2244 = vmatprep.subr.bf16.mxu0 0
        %2245 = vmatpush1.bf16.msra.mxu0 0
        %2246 = vmatprep.subr.bf16.mxu0 0
        %2247 = vmatpush1.bf16.msra.mxu0 0
        %2248 = vmatprep.subr.bf16.mxu0 0
        %2249 = vmatpush1.bf16.msra.mxu0 0
        %2250 = vmatprep.subr.bf16.mxu0 0
        %2251 = vmatpush1.bf16.msra.mxu0 0
        %2252 = vmatprep.subr.bf16.mxu0 0
        %2253 = vmatpush1.bf16.msra.mxu0 0
        %2254 = vmatprep.subr.bf16.mxu0 0
        %2255 = vmatpush1.bf16.msra.mxu0 0
        %2256 = vmatprep.subr.bf16.mxu0 0
        %2257 = vmatpush1.bf16.msra.mxu0 0
        %2258 = vmatprep.subr.bf16.mxu0 0
        %2259 = vmatpush1.bf16.msra.mxu0 0
        %2260 = vmatprep.subr.bf16.mxu0 0
        %2261 = vmatpush1.bf16.msra.mxu0 0
        %2262 = vmatprep.mubr.bf16.mxu0 0
        %2263 = vmatmul.mubr.bf16.gmra.mrb[0].mxu0 %v1474
        %v2264 = vpop.f32.mrb[0].mxu0
        %v2265 = vadd.f32 0.0, %v2264
        %v2266 = vpop.f32.mrb[0].mxu0
        %v2267 = vpop.f32.mrb[0].mxu0
        %v2268 = vadd.f32 0.0, %v2267
        %v2269 = vpop.f32.mrb[0].mxu0
        %2270 = vmatprep.mubr.bf16.mxu0 0
        %2271 = vmatmul.mubr.bf16.gmra.mrb[0].mxu0 %v1477
        %v2272 = vpop.f32.mrb[0].mxu0
        %v2273 = vadd.f32 0.0, %v2272
        %v2274 = vpop.f32.mrb[0].mxu0
        %v2275 = vpop.f32.mrb[0].mxu0
        %v2276 = vadd.f32 0.0, %v2275
        %v2277 = vpop.f32.mrb[0].mxu0
        %2278 = vmatprep.mubr.bf16.mxu0 0
        %2279 = vmatmul.mubr.bf16.gmra.mrb[0].mxu0 %v1480
        %v2280 = vpop.f32.mrb[0].mxu0
        %v2281 = vadd.f32 0.0, %v2280
        %v2282 = vpop.f32.mrb[0].mxu0
        %v2283 = vpop.f32.mrb[0].mxu0
        %v2284 = vadd.f32 0.0, %v2283
        %v2285 = vpop.f32.mrb[0].mxu0
        %2286 = vmatprep.mubr.bf16.mxu0 0
        %2287 = vmatmul.mubr.bf16.gmra.mrb[0].mxu0 %v2225
        %v2288 = vpop.f32.mrb[0].mxu0
        %v2289 = vadd.f32 0.0, %v2288
        %v2290 = vpop.f32.mrb[0].mxu0
        %v2291 = vpop.f32.mrb[0].mxu0
        %v2292 = vadd.f32 0.0, %v2291
        %v2293 = vpop.f32.mrb[0].mxu0
        %2294 = vdwg.mxu0
        %v2295 = vadd.f32 %v2211, %v2265
        %v2296 = vadd.f32 %v2212, %v2268
        %v2297 = vadd.f32 %v2213, %v2273
        %v2298 = vadd.f32 %v2214, %v2276
        %v2299 = vadd.f32 %v2215, %v2281
        %v2300 = vadd.f32 %v2216, %v2284
        %v2301 = vadd.f32 %v2217, %v2289
        %v2302 = vadd.f32 %v2218, %v2292
        %v2304 = vshrl.u32 %v395, 16
        %v2306 = vrot.slane %v2304, 4
        %v2307 = vshll.u32 %v395, 16
        %v2309 = vrot.slane %v2307, 5
        %v2310 = vor.u32 %v2306, %v2309
        %v2311 = vrot.slane %v2310, 4
        %v2313 = vshll.u32 %v396, 16
        %v2315 = vrot.slane %v2313, 5
        %v2316 = vsel %vm420, %v2311, %v2315
        %s2317 = scalar_lea.vmem %s3, 32
        %v2318 = vld [vmem:[%s2317] sm:$0x3]
        %v2319 = vunpack.c.l.b16 %v2316
        %v2320 = vpack.c.b16 %v2319, %v2026
        %v2322 = vsel %vm547, %v2320, 0
        %v2325 = vsel %vm560, %v2318, 0
        %2327 = vmatprep.subr.bf16.mxu0 0
        %2328 = vmatpush1.bf16.msra.mxu0 %v2325
        %2329 = vmatprep.subr.bf16.mxu0 0
        %2330 = vmatpush1.bf16.msra.mxu0 0
        %2331 = vmatprep.subr.bf16.mxu0 0
        %2332 = vmatpush1.bf16.msra.mxu0 0
        %2333 = vmatprep.subr.bf16.mxu0 0
        %2334 = vmatpush1.bf16.msra.mxu0 0
        %2335 = vmatprep.subr.bf16.mxu0 0
        %2336 = vmatpush1.bf16.msra.mxu0 0
        %2337 = vmatprep.subr.bf16.mxu0 0
        %2338 = vmatpush1.bf16.msra.mxu0 0
        %2339 = vmatprep.subr.bf16.mxu0 0
        %2340 = vmatpush1.bf16.msra.mxu0 0
        %2341 = vmatprep.subr.bf16.mxu0 0
        %2342 = vmatpush1.bf16.msra.mxu0 0
        %2343 = vmatprep.subr.bf16.mxu0 0
        %2344 = vmatpush1.bf16.msra.mxu0 0
        %2345 = vmatprep.subr.bf16.mxu0 0
        %2346 = vmatpush1.bf16.msra.mxu0 0
        %2347 = vmatprep.subr.bf16.mxu0 0
        %2348 = vmatpush1.bf16.msra.mxu0 0
        %2349 = vmatprep.subr.bf16.mxu0 0
        %2350 = vmatpush1.bf16.msra.mxu0 0
        %2351 = vmatprep.subr.bf16.mxu0 0
        %2352 = vmatpush1.bf16.msra.mxu0 0
        %2353 = vmatprep.subr.bf16.mxu0 0
        %2354 = vmatpush1.bf16.msra.mxu0 0
        %2355 = vmatprep.subr.bf16.mxu0 0
        %2356 = vmatpush1.bf16.msra.mxu0 0
        %2357 = vmatprep.subr.bf16.mxu0 0
        %2358 = vmatpush1.bf16.msra.mxu0 0
        %2359 = vmatprep.mubr.bf16.mxu0 0
        %2360 = vmatmul.mubr.bf16.gmra.mrb[0].mxu0 %v1688
        %v2361 = vpop.f32.mrb[0].mxu0
        %v2362 = vadd.f32 0.0, %v2361
        %v2363 = vpop.f32.mrb[0].mxu0
        %v2364 = vpop.f32.mrb[0].mxu0
        %v2365 = vadd.f32 0.0, %v2364
        %v2366 = vpop.f32.mrb[0].mxu0
        %2367 = vmatprep.mubr.bf16.mxu0 0
        %2368 = vmatmul.mubr.bf16.gmra.mrb[0].mxu0 %v1691
        %v2369 = vpop.f32.mrb[0].mxu0
        %v2370 = vadd.f32 0.0, %v2369
        %v2371 = vpop.f32.mrb[0].mxu0
        %v2372 = vpop.f32.mrb[0].mxu0
        %v2373 = vadd.f32 0.0, %v2372
        %v2374 = vpop.f32.mrb[0].mxu0
        %2375 = vmatprep.mubr.bf16.mxu0 0
        %2376 = vmatmul.mubr.bf16.gmra.mrb[0].mxu0 %v1694
        %v2377 = vpop.f32.mrb[0].mxu0
        %v2378 = vadd.f32 0.0, %v2377
        %v2379 = vpop.f32.mrb[0].mxu0
        %v2380 = vpop.f32.mrb[0].mxu0
        %v2381 = vadd.f32 0.0, %v2380
        %v2382 = vpop.f32.mrb[0].mxu0
        %2383 = vmatprep.mubr.bf16.mxu0 0
        %2384 = vmatmul.mubr.bf16.gmra.mrb[0].mxu0 %v2322
        %v2385 = vpop.f32.mrb[0].mxu0
        %v2386 = vadd.f32 0.0, %v2385
        %v2387 = vpop.f32.mrb[0].mxu0
        %v2388 = vpop.f32.mrb[0].mxu0
        %v2389 = vadd.f32 0.0, %v2388
        %v2390 = vpop.f32.mrb[0].mxu0
        %2391 = vdwg.mxu0
        %v2392 = vadd.f32 %v2295, %v2362
        %v2393 = vadd.f32 %v2296, %v2365
        %v2394 = vadd.f32 %v2297, %v2370
        %v2395 = vadd.f32 %v2298, %v2373
        %v2396 = vadd.f32 %v2299, %v2378
        %v2397 = vadd.f32 %v2300, %v2381
        %v2398 = vadd.f32 %v2301, %v2386
        %v2399 = vadd.f32 %v2302, %v2389
        %v2401 = vrot.slane %v395, 5
        %v2402 = vrot.slane %v2401, 4
        %v2403 = vrot.slane %v396, 5
        %v2404 = vsel %vm739, %v2402, %v2403
        %s2405 = scalar_lea.vmem %s3, 34
        %v2406 = vld [vmem:[%s2405] sm:$0x3]
        %v2407 = vunpack.c.l.b16 %v2404
        %v2408 = vpack.c.b16 %v2407, %v2126
        %v2410 = vsel %vm547, %v2408, 0
        %v2413 = vsel %vm560, %v2406, 0
        %2415 = vmatprep.subr.bf16.mxu0 0
        %2416 = vmatpush1.bf16.msra.mxu0 %v2413
        %2417 = vmatprep.subr.bf16.mxu0 0
        %2418 = vmatpush1.bf16.msra.mxu0 0
        %2419 = vmatprep.subr.bf16.mxu0 0
        %2420 = vmatpush1.bf16.msra.mxu0 0
        %2421 = vmatprep.subr.bf16.mxu0 0
        %2422 = vmatpush1.bf16.msra.mxu0 0
        %2423 = vmatprep.subr.bf16.mxu0 0
        %2424 = vmatpush1.bf16.msra.mxu0 0
        %2425 = vmatprep.subr.bf16.mxu0 0
        %2426 = vmatpush1.bf16.msra.mxu0 0
        %2427 = vmatprep.subr.bf16.mxu0 0
        %2428 = vmatpush1.bf16.msra.mxu0 0
        %2429 = vmatprep.subr.bf16.mxu0 0
        %2430 = vmatpush1.bf16.msra.mxu0 0
        %2431 = vmatprep.subr.bf16.mxu0 0
        %2432 = vmatpush1.bf16.msra.mxu0 0
        %2433 = vmatprep.subr.bf16.mxu0 0
        %2434 = vmatpush1.bf16.msra.mxu0 0
        %2435 = vmatprep.subr.bf16.mxu0 0
        %2436 = vmatpush1.bf16.msra.mxu0 0
        %2437 = vmatprep.subr.bf16.mxu0 0
        %2438 = vmatpush1.bf16.msra.mxu0 0
        %2439 = vmatprep.subr.bf16.mxu0 0
        %2440 = vmatpush1.bf16.msra.mxu0 0
        %2441 = vmatprep.subr.bf16.mxu0 0
        %2442 = vmatpush1.bf16.msra.mxu0 0
        %2443 = vmatprep.subr.bf16.mxu0 0
        %2444 = vmatpush1.bf16.msra.mxu0 0
        %2445 = vmatprep.subr.bf16.mxu0 0
        %2446 = vmatpush1.bf16.msra.mxu0 0
        %2447 = vmatprep.mubr.bf16.mxu0 0
        %2448 = vmatmul.mubr.bf16.gmra.mrb[0].mxu0 %v1830
        %v2449 = vpop.f32.mrb[0].mxu0
        %v2450 = vadd.f32 0.0, %v2449
        %v2451 = vpop.f32.mrb[0].mxu0
        %v2452 = vpop.f32.mrb[0].mxu0
        %v2453 = vadd.f32 0.0, %v2452
        %v2454 = vpop.f32.mrb[0].mxu0
        %2455 = vmatprep.mubr.bf16.mxu0 0
        %2456 = vmatmul.mubr.bf16.gmra.mrb[0].mxu0 %v1833
        %v2457 = vpop.f32.mrb[0].mxu0
        %v2458 = vadd.f32 0.0, %v2457
        %v2459 = vpop.f32.mrb[0].mxu0
        %v2460 = vpop.f32.mrb[0].mxu0
        %v2461 = vadd.f32 0.0, %v2460
        %v2462 = vpop.f32.mrb[0].mxu0
        %2463 = vmatprep.mubr.bf16.mxu0 0
        %2464 = vmatmul.mubr.bf16.gmra.mrb[0].mxu0 %v1836
        %v2465 = vpop.f32.mrb[0].mxu0
        %v2466 = vadd.f32 0.0, %v2465
        %v2467 = vpop.f32.mrb[0].mxu0
        %v2468 = vpop.f32.mrb[0].mxu0
        %v2469 = vadd.f32 0.0, %v2468
        %v2470 = vpop.f32.mrb[0].mxu0
        %2471 = vmatprep.mubr.bf16.mxu0 0
        %2472 = vmatmul.mubr.bf16.gmra.mrb[0].mxu0 %v2410
        %v2473 = vpop.f32.mrb[0].mxu0
        %v2474 = vadd.f32 0.0, %v2473
        %v2475 = vpop.f32.mrb[0].mxu0
        %v2476 = vpop.f32.mrb[0].mxu0
        %v2477 = vadd.f32 0.0, %v2476
        %v2478 = vpop.f32.mrb[0].mxu0
        %2479 = vdwg.mxu0
        %v2480 = vadd.f32 %v2392, %v2450
        %v2481 = vadd.f32 %v2393, %v2453
        %v2482 = vadd.f32 %v2394, %v2458
        %v2483 = vadd.f32 %v2395, %v2461
        %v2484 = vadd.f32 %v2396, %v2466
        %v2485 = vadd.f32 %v2397, %v2469
        %v2486 = vadd.f32 %v2398, %v2474
        %v2487 = vadd.f32 %v2399, %v2477
        %s2488 = scalar_lea.vmem %s3, 36
        %v2489 = vld [vmem:[%s2488] sm:$0x3]
        %v2498 = vunpack.c.l.b16 %v397
        %v2499 = vunpack.c.l.b16 %v399
        %v2500 = vunpack.c.l.b16 %v401
        %v2501 = vunpack.c.l.b16 %v403
        %v2502 = vunpack.c.l.b16 %v405
        %v2503 = vunpack.c.l.b16 %v407
        %v2504 = vunpack.c.l.b16 %v409
        %v2505 = vunpack.c.l.b16 %v411
        %v2506 = vpack.c.b16 %v2499, %v2498
        %v2507 = vpack.c.b16 %v2501, %v2500
        %v2508 = vpack.c.b16 %v2503, %v2502
        %v2509 = vpack.c.b16 %v2505, %v2504
        %v2511 = vsel %vm547, %v2506, 0
        %v2514 = vsel %vm547, %v2507, 0
        %v2517 = vsel %vm547, %v2508, 0
        %v2520 = vsel %vm547, %v2509, 0
        %v2523 = vsel %vm560, %v2489, 0
        %2525 = vmatprep.subr.bf16.mxu0 0
        %2526 = vmatpush1.bf16.msra.mxu0 %v2523
        %2527 = vmatprep.subr.bf16.mxu0 0
        %2528 = vmatpush1.bf16.msra.mxu0 0
        %2529 = vmatprep.subr.bf16.mxu0 0
        %2530 = vmatpush1.bf16.msra.mxu0 0
        %2531 = vmatprep.subr.bf16.mxu0 0
        %2532 = vmatpush1.bf16.msra.mxu0 0
        %2533 = vmatprep.subr.bf16.mxu0 0
        %2534 = vmatpush1.bf16.msra.mxu0 0
        %2535 = vmatprep.subr.bf16.mxu0 0
        %2536 = vmatpush1.bf16.msra.mxu0 0
        %2537 = vmatprep.subr.bf16.mxu0 0
        %2538 = vmatpush1.bf16.msra.mxu0 0
        %2539 = vmatprep.subr.bf16.mxu0 0
        %2540 = vmatpush1.bf16.msra.mxu0 0
        %2541 = vmatprep.subr.bf16.mxu0 0
        %2542 = vmatpush1.bf16.msra.mxu0 0
        %2543 = vmatprep.subr.bf16.mxu0 0
        %2544 = vmatpush1.bf16.msra.mxu0 0
        %2545 = vmatprep.subr.bf16.mxu0 0
        %2546 = vmatpush1.bf16.msra.mxu0 0
        %2547 = vmatprep.subr.bf16.mxu0 0
        %2548 = vmatpush1.bf16.msra.mxu0 0
        %2549 = vmatprep.subr.bf16.mxu0 0
        %2550 = vmatpush1.bf16.msra.mxu0 0
        %2551 = vmatprep.subr.bf16.mxu0 0
        %2552 = vmatpush1.bf16.msra.mxu0 0
        %2553 = vmatprep.subr.bf16.mxu0 0
        %2554 = vmatpush1.bf16.msra.mxu0 0
        %2555 = vmatprep.subr.bf16.mxu0 0
        %2556 = vmatpush1.bf16.msra.mxu0 0
        %2557 = vmatprep.mubr.bf16.mxu0 0
        %2558 = vmatmul.mubr.bf16.gmra.mrb[0].mxu0 %v2511
        %v2559 = vpop.f32.mrb[0].mxu0
        %v2560 = vadd.f32 0.0, %v2559
        %v2561 = vpop.f32.mrb[0].mxu0
        %v2562 = vpop.f32.mrb[0].mxu0
        %v2563 = vadd.f32 0.0, %v2562
        %v2564 = vpop.f32.mrb[0].mxu0
        %2565 = vmatprep.mubr.bf16.mxu0 0
        %2566 = vmatmul.mubr.bf16.gmra.mrb[0].mxu0 %v2514
        %v2567 = vpop.f32.mrb[0].mxu0
        %v2568 = vadd.f32 0.0, %v2567
        %v2569 = vpop.f32.mrb[0].mxu0
        %v2570 = vpop.f32.mrb[0].mxu0
        %v2571 = vadd.f32 0.0, %v2570
        %v2572 = vpop.f32.mrb[0].mxu0
        %2573 = vmatprep.mubr.bf16.mxu0 0
        %2574 = vmatmul.mubr.bf16.gmra.mrb[0].mxu0 %v2517
        %v2575 = vpop.f32.mrb[0].mxu0
        %v2576 = vadd.f32 0.0, %v2575
        %v2577 = vpop.f32.mrb[0].mxu0
        %v2578 = vpop.f32.mrb[0].mxu0
        %v2579 = vadd.f32 0.0, %v2578
        %v2580 = vpop.f32.mrb[0].mxu0
        %2581 = vmatprep.mubr.bf16.mxu0 0
        %2582 = vmatmul.mubr.bf16.gmra.mrb[0].mxu0 %v2520
        %v2583 = vpop.f32.mrb[0].mxu0
        %v2584 = vadd.f32 0.0, %v2583
        %v2585 = vpop.f32.mrb[0].mxu0
        %v2586 = vpop.f32.mrb[0].mxu0
        %v2587 = vadd.f32 0.0, %v2586
        %v2588 = vpop.f32.mrb[0].mxu0
        %2589 = vdwg.mxu0
        %v2590 = vadd.f32 %v2480, %v2560
        %v2591 = vadd.f32 %v2481, %v2563
        %v2592 = vadd.f32 %v2482, %v2568
        %v2593 = vadd.f32 %v2483, %v2571
        %v2594 = vadd.f32 %v2484, %v2576
        %v2595 = vadd.f32 %v2485, %v2579
        %v2596 = vadd.f32 %v2486, %v2584
        %v2597 = vadd.f32 %v2487, %v2587
        %v2599 = vshrl.u32 %v397, 16
        %v2601 = vrot.slane %v2599, 4
        %v2602 = vshll.u32 %v397, 16
        %v2604 = vrot.slane %v2602, 5
        %v2605 = vor.u32 %v2601, %v2604
        %v2606 = vrot.slane %v2605, 4
        %v2608 = vshll.u32 %v398, 16
        %v2610 = vrot.slane %v2608, 5
        %v2611 = vsel %vm420, %v2606, %v2610
        %v2613 = vshrl.u32 %v399, 16
        %v2615 = vrot.slane %v2613, 4
        %v2616 = vshll.u32 %v399, 16
        %v2618 = vrot.slane %v2616, 5
        %v2619 = vor.u32 %v2615, %v2618
        %v2620 = vrot.slane %v2619, 4
        %v2622 = vshll.u32 %v400, 16
        %v2624 = vrot.slane %v2622, 5
        %v2625 = vsel %vm420, %v2620, %v2624
        %v2627 = vshrl.u32 %v401, 16
        %v2629 = vrot.slane %v2627, 4
        %v2630 = vshll.u32 %v401, 16
        %v2632 = vrot.slane %v2630, 5
        %v2633 = vor.u32 %v2629, %v2632
        %v2634 = vrot.slane %v2633, 4
        %v2636 = vshll.u32 %v402, 16
        %v2638 = vrot.slane %v2636, 5
        %v2639 = vsel %vm420, %v2634, %v2638
        %v2641 = vshrl.u32 %v403, 16
        %v2643 = vrot.slane %v2641, 4
        %v2644 = vshll.u32 %v403, 16
        %v2646 = vrot.slane %v2644, 5
        %v2647 = vor.u32 %v2643, %v2646
        %v2648 = vrot.slane %v2647, 4
        %v2650 = vshll.u32 %v404, 16
        %v2652 = vrot.slane %v2650, 5
        %v2653 = vsel %vm420, %v2648, %v2652
        %v2655 = vshrl.u32 %v405, 16
        %v2657 = vrot.slane %v2655, 4
        %v2658 = vshll.u32 %v405, 16
        %v2660 = vrot.slane %v2658, 5
        %v2661 = vor.u32 %v2657, %v2660
        %v2662 = vrot.slane %v2661, 4
        %v2664 = vshll.u32 %v406, 16
        %v2666 = vrot.slane %v2664, 5
        %v2667 = vsel %vm420, %v2662, %v2666
        %v2669 = vshrl.u32 %v407, 16
        %v2671 = vrot.slane %v2669, 4
        %v2672 = vshll.u32 %v407, 16
        %v2674 = vrot.slane %v2672, 5
        %v2675 = vor.u32 %v2671, %v2674
        %v2676 = vrot.slane %v2675, 4
        %v2678 = vshll.u32 %v408, 16
        %v2680 = vrot.slane %v2678, 5
        %v2681 = vsel %vm420, %v2676, %v2680
        %v2683 = vshrl.u32 %v409, 16
        %v2685 = vrot.slane %v2683, 4
        %v2686 = vshll.u32 %v409, 16
        %v2688 = vrot.slane %v2686, 5
        %v2689 = vor.u32 %v2685, %v2688
        %v2690 = vrot.slane %v2689, 4
        %v2692 = vshll.u32 %v410, 16
        %v2694 = vrot.slane %v2692, 5
        %v2695 = vsel %vm420, %v2690, %v2694
        %v2697 = vshrl.u32 %v411, 16
        %v2699 = vrot.slane %v2697, 4
        %v2700 = vshll.u32 %v411, 16
        %v2702 = vrot.slane %v2700, 5
        %v2703 = vor.u32 %v2699, %v2702
        %v2704 = vrot.slane %v2703, 4
        %v2706 = vshll.u32 %v412, 16
        %v2708 = vrot.slane %v2706, 5
        %v2709 = vsel %vm420, %v2704, %v2708
        %s2710 = scalar_lea.vmem %s3, 38
        %v2711 = vld [vmem:[%s2710] sm:$0x3]
        %v2712 = vunpack.c.l.b16 %v2611
        %v2713 = vunpack.c.l.b16 %v2625
        %v2714 = vunpack.c.l.b16 %v2639
        %v2715 = vunpack.c.l.b16 %v2653
        %v2716 = vunpack.c.l.b16 %v2667
        %v2717 = vunpack.c.l.b16 %v2681
        %v2718 = vunpack.c.l.b16 %v2695
        %v2719 = vunpack.c.l.b16 %v2709
        %v2720 = vpack.c.b16 %v2713, %v2712
        %v2721 = vpack.c.b16 %v2715, %v2714
        %v2722 = vpack.c.b16 %v2717, %v2716
        %v2723 = vpack.c.b16 %v2719, %v2718
        %v2725 = vsel %vm547, %v2720, 0
        %v2728 = vsel %vm547, %v2721, 0
        %v2731 = vsel %vm547, %v2722, 0
        %v2734 = vsel %vm547, %v2723, 0
        %v2737 = vsel %vm560, %v2711, 0
        %2739 = vmatprep.subr.bf16.mxu0 0
        %2740 = vmatpush1.bf16.msra.mxu0 %v2737
        %2741 = vmatprep.subr.bf16.mxu0 0
        %2742 = vmatpush1.bf16.msra.mxu0 0
        %2743 = vmatprep.subr.bf16.mxu0 0
        %2744 = vmatpush1.bf16.msra.mxu0 0
        %2745 = vmatprep.subr.bf16.mxu0 0
        %2746 = vmatpush1.bf16.msra.mxu0 0
        %2747 = vmatprep.subr.bf16.mxu0 0
        %2748 = vmatpush1.bf16.msra.mxu0 0
        %2749 = vmatprep.subr.bf16.mxu0 0
        %2750 = vmatpush1.bf16.msra.mxu0 0
        %2751 = vmatprep.subr.bf16.mxu0 0
        %2752 = vmatpush1.bf16.msra.mxu0 0
        %2753 = vmatprep.subr.bf16.mxu0 0
        %2754 = vmatpush1.bf16.msra.mxu0 0
        %2755 = vmatprep.subr.bf16.mxu0 0
        %2756 = vmatpush1.bf16.msra.mxu0 0
        %2757 = vmatprep.subr.bf16.mxu0 0
        %2758 = vmatpush1.bf16.msra.mxu0 0
        %2759 = vmatprep.subr.bf16.mxu0 0
        %2760 = vmatpush1.bf16.msra.mxu0 0
        %2761 = vmatprep.subr.bf16.mxu0 0
        %2762 = vmatpush1.bf16.msra.mxu0 0
        %2763 = vmatprep.subr.bf16.mxu0 0
        %2764 = vmatpush1.bf16.msra.mxu0 0
        %2765 = vmatprep.subr.bf16.mxu0 0
        %2766 = vmatpush1.bf16.msra.mxu0 0
        %2767 = vmatprep.subr.bf16.mxu0 0
        %2768 = vmatpush1.bf16.msra.mxu0 0
        %2769 = vmatprep.subr.bf16.mxu0 0
        %2770 = vmatpush1.bf16.msra.mxu0 0
        %2771 = vmatprep.mubr.bf16.mxu0 0
        %2772 = vmatmul.mubr.bf16.gmra.mrb[0].mxu0 %v2725
        %v2773 = vpop.f32.mrb[0].mxu0
        %v2774 = vadd.f32 0.0, %v2773
        %v2775 = vpop.f32.mrb[0].mxu0
        %v2776 = vpop.f32.mrb[0].mxu0
        %v2777 = vadd.f32 0.0, %v2776
        %v2778 = vpop.f32.mrb[0].mxu0
        %2779 = vmatprep.mubr.bf16.mxu0 0
        %2780 = vmatmul.mubr.bf16.gmra.mrb[0].mxu0 %v2728
        %v2781 = vpop.f32.mrb[0].mxu0
        %v2782 = vadd.f32 0.0, %v2781
        %v2783 = vpop.f32.mrb[0].mxu0
        %v2784 = vpop.f32.mrb[0].mxu0
        %v2785 = vadd.f32 0.0, %v2784
        %v2786 = vpop.f32.mrb[0].mxu0
        %2787 = vmatprep.mubr.bf16.mxu0 0
        %2788 = vmatmul.mubr.bf16.gmra.mrb[0].mxu0 %v2731
        %v2789 = vpop.f32.mrb[0].mxu0
        %v2790 = vadd.f32 0.0, %v2789
        %v2791 = vpop.f32.mrb[0].mxu0
        %v2792 = vpop.f32.mrb[0].mxu0
        %v2793 = vadd.f32 0.0, %v2792
        %v2794 = vpop.f32.mrb[0].mxu0
        %2795 = vmatprep.mubr.bf16.mxu0 0
        %2796 = vmatmul.mubr.bf16.gmra.mrb[0].mxu0 %v2734
        %v2797 = vpop.f32.mrb[0].mxu0
        %v2798 = vadd.f32 0.0, %v2797
        %v2799 = vpop.f32.mrb[0].mxu0
        %v2800 = vpop.f32.mrb[0].mxu0
        %v2801 = vadd.f32 0.0, %v2800
        %v2802 = vpop.f32.mrb[0].mxu0
        %2803 = vdwg.mxu0
        %v2804 = vadd.f32 %v2590, %v2774
        %v2805 = vadd.f32 %v2591, %v2777
        %v2806 = vadd.f32 %v2592, %v2782
        %v2807 = vadd.f32 %v2593, %v2785
        %v2808 = vadd.f32 %v2594, %v2790
        %v2809 = vadd.f32 %v2595, %v2793
        %v2810 = vadd.f32 %v2596, %v2798
        %v2811 = vadd.f32 %v2597, %v2801
        %v2820 = vrot.slane %v397, 5
        %v2821 = vrot.slane %v2820, 4
        %v2822 = vrot.slane %v398, 5
        %v2823 = vsel %vm739, %v2821, %v2822
        %v2824 = vrot.slane %v399, 5
        %v2825 = vrot.slane %v2824, 4
        %v2826 = vrot.slane %v400, 5
        %v2827 = vsel %vm739, %v2825, %v2826
        %v2828 = vrot.slane %v401, 5
        %v2829 = vrot.slane %v2828, 4
        %v2830 = vrot.slane %v402, 5
        %v2831 = vsel %vm739, %v2829, %v2830
        %v2832 = vrot.slane %v403, 5
        %v2833 = vrot.slane %v2832, 4
        %v2834 = vrot.slane %v404, 5
        %v2835 = vsel %vm739, %v2833, %v2834
        %v2836 = vrot.slane %v405, 5
        %v2837 = vrot.slane %v2836, 4
        %v2838 = vrot.slane %v406, 5
        %v2839 = vsel %vm739, %v2837, %v2838
        %v2840 = vrot.slane %v407, 5
        %v2841 = vrot.slane %v2840, 4
        %v2842 = vrot.slane %v408, 5
        %v2843 = vsel %vm739, %v2841, %v2842
        %v2844 = vrot.slane %v409, 5
        %v2845 = vrot.slane %v2844, 4
        %v2846 = vrot.slane %v410, 5
        %v2847 = vsel %vm739, %v2845, %v2846
        %v2848 = vrot.slane %v411, 5
        %v2849 = vrot.slane %v2848, 4
        %v2850 = vrot.slane %v412, 5
        %v2851 = vsel %vm739, %v2849, %v2850
        %s2852 = scalar_lea.vmem %s3, 40
        %v2853 = vld [vmem:[%s2852] sm:$0x3]
        %v2854 = vunpack.c.l.b16 %v2823
        %v2855 = vunpack.c.l.b16 %v2827
        %v2856 = vunpack.c.l.b16 %v2831
        %v2857 = vunpack.c.l.b16 %v2835
        %v2858 = vunpack.c.l.b16 %v2839
        %v2859 = vunpack.c.l.b16 %v2843
        %v2860 = vunpack.c.l.b16 %v2847
        %v2861 = vunpack.c.l.b16 %v2851
        %v2862 = vpack.c.b16 %v2855, %v2854
        %v2863 = vpack.c.b16 %v2857, %v2856
        %v2864 = vpack.c.b16 %v2859, %v2858
        %v2865 = vpack.c.b16 %v2861, %v2860
        %v2867 = vsel %vm547, %v2862, 0
        %v2870 = vsel %vm547, %v2863, 0
        %v2873 = vsel %vm547, %v2864, 0
        %v2876 = vsel %vm547, %v2865, 0
        %v2879 = vsel %vm560, %v2853, 0
        %2881 = vmatprep.subr.bf16.mxu0 0
        %2882 = vmatpush1.bf16.msra.mxu0 %v2879
        %2883 = vmatprep.subr.bf16.mxu0 0
        %2884 = vmatpush1.bf16.msra.mxu0 0
        %2885 = vmatprep.subr.bf16.mxu0 0
        %2886 = vmatpush1.bf16.msra.mxu0 0
        %2887 = vmatprep.subr.bf16.mxu0 0
        %2888 = vmatpush1.bf16.msra.mxu0 0
        %2889 = vmatprep.subr.bf16.mxu0 0
        %2890 = vmatpush1.bf16.msra.mxu0 0
        %2891 = vmatprep.subr.bf16.mxu0 0
        %2892 = vmatpush1.bf16.msra.mxu0 0
        %2893 = vmatprep.subr.bf16.mxu0 0
        %2894 = vmatpush1.bf16.msra.mxu0 0
        %2895 = vmatprep.subr.bf16.mxu0 0
        %2896 = vmatpush1.bf16.msra.mxu0 0
        %2897 = vmatprep.subr.bf16.mxu0 0
        %2898 = vmatpush1.bf16.msra.mxu0 0
        %2899 = vmatprep.subr.bf16.mxu0 0
        %2900 = vmatpush1.bf16.msra.mxu0 0
        %2901 = vmatprep.subr.bf16.mxu0 0
        %2902 = vmatpush1.bf16.msra.mxu0 0
        %2903 = vmatprep.subr.bf16.mxu0 0
        %2904 = vmatpush1.bf16.msra.mxu0 0
        %2905 = vmatprep.subr.bf16.mxu0 0
        %2906 = vmatpush1.bf16.msra.mxu0 0
        %2907 = vmatprep.subr.bf16.mxu0 0
        %2908 = vmatpush1.bf16.msra.mxu0 0
        %2909 = vmatprep.subr.bf16.mxu0 0
        %2910 = vmatpush1.bf16.msra.mxu0 0
        %2911 = vmatprep.subr.bf16.mxu0 0
        %2912 = vmatpush1.bf16.msra.mxu0 0
        %2913 = vmatprep.mubr.bf16.mxu0 0
        %2914 = vmatmul.mubr.bf16.gmra.mrb[0].mxu0 %v2867
        %v2915 = vpop.f32.mrb[0].mxu0
        %v2916 = vadd.f32 0.0, %v2915
        %v2917 = vpop.f32.mrb[0].mxu0
        %v2918 = vpop.f32.mrb[0].mxu0
        %v2919 = vadd.f32 0.0, %v2918
        %v2920 = vpop.f32.mrb[0].mxu0
        %2921 = vmatprep.mubr.bf16.mxu0 0
        %2922 = vmatmul.mubr.bf16.gmra.mrb[0].mxu0 %v2870
        %v2923 = vpop.f32.mrb[0].mxu0
        %v2924 = vadd.f32 0.0, %v2923
        %v2925 = vpop.f32.mrb[0].mxu0
        %v2926 = vpop.f32.mrb[0].mxu0
        %v2927 = vadd.f32 0.0, %v2926
        %v2928 = vpop.f32.mrb[0].mxu0
        %2929 = vmatprep.mubr.bf16.mxu0 0
        %2930 = vmatmul.mubr.bf16.gmra.mrb[0].mxu0 %v2873
        %v2931 = vpop.f32.mrb[0].mxu0
        %v2932 = vadd.f32 0.0, %v2931
        %v2933 = vpop.f32.mrb[0].mxu0
        %v2934 = vpop.f32.mrb[0].mxu0
        %v2935 = vadd.f32 0.0, %v2934
        %v2936 = vpop.f32.mrb[0].mxu0
        %2937 = vmatprep.mubr.bf16.mxu0 0
        %2938 = vmatmul.mubr.bf16.gmra.mrb[0].mxu0 %v2876
        %v2939 = vpop.f32.mrb[0].mxu0
        %v2940 = vadd.f32 0.0, %v2939
        %v2941 = vpop.f32.mrb[0].mxu0
        %v2942 = vpop.f32.mrb[0].mxu0
        %v2943 = vadd.f32 0.0, %v2942
        %v2944 = vpop.f32.mrb[0].mxu0
        %2945 = vdwg.mxu0
        %v2946 = vadd.f32 %v2804, %v2916
        %v2947 = vadd.f32 %v2805, %v2919
        %v2948 = vadd.f32 %v2806, %v2924
        %v2949 = vadd.f32 %v2807, %v2927
        %v2950 = vadd.f32 %v2808, %v2932
        %v2951 = vadd.f32 %v2809, %v2935
        %v2952 = vadd.f32 %v2810, %v2940
        %v2953 = vadd.f32 %v2811, %v2943
        %s2954 = scalar_lea.vmem %s3, 42
        %v2955 = vld [vmem:[%s2954] sm:$0x3]
        %v2957 = vunpack.c.l.b16 %v413
        %v2958 = vpack.c.b16 %v2500, %v2499
        %v2959 = vpack.c.b16 %v2502, %v2501
        %v2960 = vpack.c.b16 %v2504, %v2503
        %v2961 = vpack.c.b16 %v2957, %v2505
        %v2963 = vsel %vm547, %v2958, 0
        %v2966 = vsel %vm547, %v2959, 0
        %v2969 = vsel %vm547, %v2960, 0
        %v2972 = vsel %vm547, %v2961, 0
        %v2975 = vsel %vm560, %v2955, 0
        %2977 = vmatprep.subr.bf16.mxu0 0
        %2978 = vmatpush1.bf16.msra.mxu0 %v2975
        %2979 = vmatprep.subr.bf16.mxu0 0
        %2980 = vmatpush1.bf16.msra.mxu0 0
        %2981 = vmatprep.subr.bf16.mxu0 0
        %2982 = vmatpush1.bf16.msra.mxu0 0
        %2983 = vmatprep.subr.bf16.mxu0 0
        %2984 = vmatpush1.bf16.msra.mxu0 0
        %2985 = vmatprep.subr.bf16.mxu0 0
        %2986 = vmatpush1.bf16.msra.mxu0 0
        %2987 = vmatprep.subr.bf16.mxu0 0
        %2988 = vmatpush1.bf16.msra.mxu0 0
        %2989 = vmatprep.subr.bf16.mxu0 0
        %2990 = vmatpush1.bf16.msra.mxu0 0
        %2991 = vmatprep.subr.bf16.mxu0 0
        %2992 = vmatpush1.bf16.msra.mxu0 0
        %2993 = vmatprep.subr.bf16.mxu0 0
        %2994 = vmatpush1.bf16.msra.mxu0 0
        %2995 = vmatprep.subr.bf16.mxu0 0
        %2996 = vmatpush1.bf16.msra.mxu0 0
        %2997 = vmatprep.subr.bf16.mxu0 0
        %2998 = vmatpush1.bf16.msra.mxu0 0
        %2999 = vmatprep.subr.bf16.mxu0 0
        %3000 = vmatpush1.bf16.msra.mxu0 0
        %3001 = vmatprep.subr.bf16.mxu0 0
        %3002 = vmatpush1.bf16.msra.mxu0 0
        %3003 = vmatprep.subr.bf16.mxu0 0
        %3004 = vmatpush1.bf16.msra.mxu0 0
        %3005 = vmatprep.subr.bf16.mxu0 0
        %3006 = vmatpush1.bf16.msra.mxu0 0
        %3007 = vmatprep.subr.bf16.mxu0 0
        %3008 = vmatpush1.bf16.msra.mxu0 0
        %3009 = vmatprep.mubr.bf16.mxu0 0
        %3010 = vmatmul.mubr.bf16.gmra.mrb[0].mxu0 %v2963
        %v3011 = vpop.f32.mrb[0].mxu0
        %v3012 = vadd.f32 0.0, %v3011
        %v3013 = vpop.f32.mrb[0].mxu0
        %v3014 = vpop.f32.mrb[0].mxu0
        %v3015 = vadd.f32 0.0, %v3014
        %v3016 = vpop.f32.mrb[0].mxu0
        %3017 = vmatprep.mubr.bf16.mxu0 0
        %3018 = vmatmul.mubr.bf16.gmra.mrb[0].mxu0 %v2966
        %v3019 = vpop.f32.mrb[0].mxu0
        %v3020 = vadd.f32 0.0, %v3019
        %v3021 = vpop.f32.mrb[0].mxu0
        %v3022 = vpop.f32.mrb[0].mxu0
        %v3023 = vadd.f32 0.0, %v3022
        %v3024 = vpop.f32.mrb[0].mxu0
        %3025 = vmatprep.mubr.bf16.mxu0 0
        %3026 = vmatmul.mubr.bf16.gmra.mrb[0].mxu0 %v2969
        %v3027 = vpop.f32.mrb[0].mxu0
        %v3028 = vadd.f32 0.0, %v3027
        %v3029 = vpop.f32.mrb[0].mxu0
        %v3030 = vpop.f32.mrb[0].mxu0
        %v3031 = vadd.f32 0.0, %v3030
        %v3032 = vpop.f32.mrb[0].mxu0
        %3033 = vmatprep.mubr.bf16.mxu0 0
        %3034 = vmatmul.mubr.bf16.gmra.mrb[0].mxu0 %v2972
        %v3035 = vpop.f32.mrb[0].mxu0
        %v3036 = vadd.f32 0.0, %v3035
        %v3037 = vpop.f32.mrb[0].mxu0
        %v3038 = vpop.f32.mrb[0].mxu0
        %v3039 = vadd.f32 0.0, %v3038
        %v3040 = vpop.f32.mrb[0].mxu0
        %3041 = vdwg.mxu0
        %v3042 = vadd.f32 %v2946, %v3012
        %v3043 = vadd.f32 %v2947, %v3015
        %v3044 = vadd.f32 %v2948, %v3020
        %v3045 = vadd.f32 %v2949, %v3023
        %v3046 = vadd.f32 %v2950, %v3028
        %v3047 = vadd.f32 %v2951, %v3031
        %v3048 = vadd.f32 %v2952, %v3036
        %v3049 = vadd.f32 %v2953, %v3039
        %v3051 = vshrl.u32 %v413, 16
        %v3053 = vrot.slane %v3051, 4
        %v3054 = vshll.u32 %v413, 16
        %v3056 = vrot.slane %v3054, 5
        %v3057 = vor.u32 %v3053, %v3056
        %v3058 = vrot.slane %v3057, 4
        %v3060 = vshll.u32 %v414, 16
        %v3062 = vrot.slane %v3060, 5
        %v3063 = vsel %vm420, %v3058, %v3062
        %s3064 = scalar_lea.vmem %s3, 44
        %v3065 = vld [vmem:[%s3064] sm:$0x3]
        %v3066 = vunpack.c.l.b16 %v3063
        %v3067 = vpack.c.b16 %v2714, %v2713
        %v3068 = vpack.c.b16 %v2716, %v2715
        %v3069 = vpack.c.b16 %v2718, %v2717
        %v3070 = vpack.c.b16 %v3066, %v2719
        %v3072 = vsel %vm547, %v3067, 0
        %v3075 = vsel %vm547, %v3068, 0
        %v3078 = vsel %vm547, %v3069, 0
        %v3081 = vsel %vm547, %v3070, 0
        %v3084 = vsel %vm560, %v3065, 0
        %3086 = vmatprep.subr.bf16.mxu0 0
        %3087 = vmatpush1.bf16.msra.mxu0 %v3084
        %3088 = vmatprep.subr.bf16.mxu0 0
        %3089 = vmatpush1.bf16.msra.mxu0 0
        %3090 = vmatprep.subr.bf16.mxu0 0
        %3091 = vmatpush1.bf16.msra.mxu0 0
        %3092 = vmatprep.subr.bf16.mxu0 0
        %3093 = vmatpush1.bf16.msra.mxu0 0
        %3094 = vmatprep.subr.bf16.mxu0 0
        %3095 = vmatpush1.bf16.msra.mxu0 0
        %3096 = vmatprep.subr.bf16.mxu0 0
        %3097 = vmatpush1.bf16.msra.mxu0 0
        %3098 = vmatprep.subr.bf16.mxu0 0
        %3099 = vmatpush1.bf16.msra.mxu0 0
        %3100 = vmatprep.subr.bf16.mxu0 0
        %3101 = vmatpush1.bf16.msra.mxu0 0
        %3102 = vmatprep.subr.bf16.mxu0 0
        %3103 = vmatpush1.bf16.msra.mxu0 0
        %3104 = vmatprep.subr.bf16.mxu0 0
        %3105 = vmatpush1.bf16.msra.mxu0 0
        %3106 = vmatprep.subr.bf16.mxu0 0
        %3107 = vmatpush1.bf16.msra.mxu0 0
        %3108 = vmatprep.subr.bf16.mxu0 0
        %3109 = vmatpush1.bf16.msra.mxu0 0
        %3110 = vmatprep.subr.bf16.mxu0 0
        %3111 = vmatpush1.bf16.msra.mxu0 0
        %3112 = vmatprep.subr.bf16.mxu0 0
        %3113 = vmatpush1.bf16.msra.mxu0 0
        %3114 = vmatprep.subr.bf16.mxu0 0
        %3115 = vmatpush1.bf16.msra.mxu0 0
        %3116 = vmatprep.subr.bf16.mxu0 0
        %3117 = vmatpush1.bf16.msra.mxu0 0
        %3118 = vmatprep.mubr.bf16.mxu0 0
        %3119 = vmatmul.mubr.bf16.gmra.mrb[0].mxu0 %v3072
        %v3120 = vpop.f32.mrb[0].mxu0
        %v3121 = vadd.f32 0.0, %v3120
        %v3122 = vpop.f32.mrb[0].mxu0
        %v3123 = vpop.f32.mrb[0].mxu0
        %v3124 = vadd.f32 0.0, %v3123
        %v3125 = vpop.f32.mrb[0].mxu0
        %3126 = vmatprep.mubr.bf16.mxu0 0
        %3127 = vmatmul.mubr.bf16.gmra.mrb[0].mxu0 %v3075
        %v3128 = vpop.f32.mrb[0].mxu0
        %v3129 = vadd.f32 0.0, %v3128
        %v3130 = vpop.f32.mrb[0].mxu0
        %v3131 = vpop.f32.mrb[0].mxu0
        %v3132 = vadd.f32 0.0, %v3131
        %v3133 = vpop.f32.mrb[0].mxu0
        %3134 = vmatprep.mubr.bf16.mxu0 0
        %3135 = vmatmul.mubr.bf16.gmra.mrb[0].mxu0 %v3078
        %v3136 = vpop.f32.mrb[0].mxu0
        %v3137 = vadd.f32 0.0, %v3136
        %v3138 = vpop.f32.mrb[0].mxu0
        %v3139 = vpop.f32.mrb[0].mxu0
        %v3140 = vadd.f32 0.0, %v3139
        %v3141 = vpop.f32.mrb[0].mxu0
        %3142 = vmatprep.mubr.bf16.mxu0 0
        %3143 = vmatmul.mubr.bf16.gmra.mrb[0].mxu0 %v3081
        %v3144 = vpop.f32.mrb[0].mxu0
        %v3145 = vadd.f32 0.0, %v3144
        %v3146 = vpop.f32.mrb[0].mxu0
        %v3147 = vpop.f32.mrb[0].mxu0
        %v3148 = vadd.f32 0.0, %v3147
        %v3149 = vpop.f32.mrb[0].mxu0
        %3150 = vdwg.mxu0
        %v3151 = vadd.f32 %v3042, %v3121
        %v3152 = vadd.f32 %v3043, %v3124
        %v3153 = vadd.f32 %v3044, %v3129
        %v3154 = vadd.f32 %v3045, %v3132
        %v3155 = vadd.f32 %v3046, %v3137
        %v3156 = vadd.f32 %v3047, %v3140
        %v3157 = vadd.f32 %v3048, %v3145
        %v3158 = vadd.f32 %v3049, %v3148
        %v3160 = vrot.slane %v413, 5
        %v3161 = vrot.slane %v3160, 4
        %v3162 = vrot.slane %v414, 5
        %v3163 = vsel %vm739, %v3161, %v3162
        %s3164 = scalar_lea.vmem %s3, 46
        %v3165 = vld [vmem:[%s3164] sm:$0x3]
        %v3166 = vunpack.c.l.b16 %v3163
        %v3167 = vpack.c.b16 %v2856, %v2855
        %v3168 = vpack.c.b16 %v2858, %v2857
        %v3169 = vpack.c.b16 %v2860, %v2859
        %v3170 = vpack.c.b16 %v3166, %v2861
        %v3172 = vsel %vm547, %v3167, 0
        %v3175 = vsel %vm547, %v3168, 0
        %v3178 = vsel %vm547, %v3169, 0
        %v3181 = vsel %vm547, %v3170, 0
        %v3184 = vsel %vm560, %v3165, 0
        %3186 = vmatprep.subr.bf16.mxu0 0
        %3187 = vmatpush1.bf16.msra.mxu0 %v3184
        %3188 = vmatprep.subr.bf16.mxu0 0
        %3189 = vmatpush1.bf16.msra.mxu0 0
        %3190 = vmatprep.subr.bf16.mxu0 0
        %3191 = vmatpush1.bf16.msra.mxu0 0
        %3192 = vmatprep.subr.bf16.mxu0 0
        %3193 = vmatpush1.bf16.msra.mxu0 0
        %3194 = vmatprep.subr.bf16.mxu0 0
        %3195 = vmatpush1.bf16.msra.mxu0 0
        %3196 = vmatprep.subr.bf16.mxu0 0
        %3197 = vmatpush1.bf16.msra.mxu0 0
        %3198 = vmatprep.subr.bf16.mxu0 0
        %3199 = vmatpush1.bf16.msra.mxu0 0
        %3200 = vmatprep.subr.bf16.mxu0 0
        %3201 = vmatpush1.bf16.msra.mxu0 0
        %3202 = vmatprep.subr.bf16.mxu0 0
        %3203 = vmatpush1.bf16.msra.mxu0 0
        %3204 = vmatprep.subr.bf16.mxu0 0
        %3205 = vmatpush1.bf16.msra.mxu0 0
        %3206 = vmatprep.subr.bf16.mxu0 0
        %3207 = vmatpush1.bf16.msra.mxu0 0
        %3208 = vmatprep.subr.bf16.mxu0 0
        %3209 = vmatpush1.bf16.msra.mxu0 0
        %3210 = vmatprep.subr.bf16.mxu0 0
        %3211 = vmatpush1.bf16.msra.mxu0 0
        %3212 = vmatprep.subr.bf16.mxu0 0
        %3213 = vmatpush1.bf16.msra.mxu0 0
        %3214 = vmatprep.subr.bf16.mxu0 0
        %3215 = vmatpush1.bf16.msra.mxu0 0
        %3216 = vmatprep.subr.bf16.mxu0 0
        %3217 = vmatpush1.bf16.msra.mxu0 0
        %3218 = vmatprep.mubr.bf16.mxu0 0
        %3219 = vmatmul.mubr.bf16.gmra.mrb[0].mxu0 %v3172
        %v3220 = vpop.f32.mrb[0].mxu0
        %v3221 = vadd.f32 0.0, %v3220
        %v3222 = vpop.f32.mrb[0].mxu0
        %v3223 = vpop.f32.mrb[0].mxu0
        %v3224 = vadd.f32 0.0, %v3223
        %v3225 = vpop.f32.mrb[0].mxu0
        %3226 = vmatprep.mubr.bf16.mxu0 0
        %3227 = vmatmul.mubr.bf16.gmra.mrb[0].mxu0 %v3175
        %v3228 = vpop.f32.mrb[0].mxu0
        %v3229 = vadd.f32 0.0, %v3228
        %v3230 = vpop.f32.mrb[0].mxu0
        %v3231 = vpop.f32.mrb[0].mxu0
        %v3232 = vadd.f32 0.0, %v3231
        %v3233 = vpop.f32.mrb[0].mxu0
        %3234 = vmatprep.mubr.bf16.mxu0 0
        %3235 = vmatmul.mubr.bf16.gmra.mrb[0].mxu0 %v3178
        %v3236 = vpop.f32.mrb[0].mxu0
        %v3237 = vadd.f32 0.0, %v3236
        %v3238 = vpop.f32.mrb[0].mxu0
        %v3239 = vpop.f32.mrb[0].mxu0
        %v3240 = vadd.f32 0.0, %v3239
        %v3241 = vpop.f32.mrb[0].mxu0
        %3242 = vmatprep.mubr.bf16.mxu0 0
        %3243 = vmatmul.mubr.bf16.gmra.mrb[0].mxu0 %v3181
        %v3244 = vpop.f32.mrb[0].mxu0
        %v3245 = vadd.f32 0.0, %v3244
        %v3246 = vpop.f32.mrb[0].mxu0
        %v3247 = vpop.f32.mrb[0].mxu0
        %v3248 = vadd.f32 0.0, %v3247
        %v3249 = vpop.f32.mrb[0].mxu0
        %3250 = vdwg.mxu0
        %v3251 = vadd.f32 %v3151, %v3221
        %v3252 = vadd.f32 %v3152, %v3224
        %v3253 = vadd.f32 %v3153, %v3229
        %v3254 = vadd.f32 %v3154, %v3232
        %v3255 = vadd.f32 %v3155, %v3237
        %v3256 = vadd.f32 %v3156, %v3240
        %v3257 = vadd.f32 %v3157, %v3245
        %v3258 = vadd.f32 %v3158, %v3248
        %s3259 = scalar_lea.vmem %s3, 48
        %v3260 = vld [vmem:[%s3259] sm:$0x3]
        %v3262 = vunpack.c.l.b16 %v415
        %v3263 = vpack.c.b16 %v3262, %v2957
        %v3265 = vsel %vm547, %v3263, 0
        %v3268 = vsel %vm560, %v3260, 0
        %3270 = vmatprep.subr.bf16.mxu0 0
        %3271 = vmatpush1.bf16.msra.mxu0 %v3268
        %3272 = vmatprep.subr.bf16.mxu0 0
        %3273 = vmatpush1.bf16.msra.mxu0 0
        %3274 = vmatprep.subr.bf16.mxu0 0
        %3275 = vmatpush1.bf16.msra.mxu0 0
        %3276 = vmatprep.subr.bf16.mxu0 0
        %3277 = vmatpush1.bf16.msra.mxu0 0
        %3278 = vmatprep.subr.bf16.mxu0 0
        %3279 = vmatpush1.bf16.msra.mxu0 0
        %3280 = vmatprep.subr.bf16.mxu0 0
        %3281 = vmatpush1.bf16.msra.mxu0 0
        %3282 = vmatprep.subr.bf16.mxu0 0
        %3283 = vmatpush1.bf16.msra.mxu0 0
        %3284 = vmatprep.subr.bf16.mxu0 0
        %3285 = vmatpush1.bf16.msra.mxu0 0
        %3286 = vmatprep.subr.bf16.mxu0 0
        %3287 = vmatpush1.bf16.msra.mxu0 0
        %3288 = vmatprep.subr.bf16.mxu0 0
        %3289 = vmatpush1.bf16.msra.mxu0 0
        %3290 = vmatprep.subr.bf16.mxu0 0
        %3291 = vmatpush1.bf16.msra.mxu0 0
        %3292 = vmatprep.subr.bf16.mxu0 0
        %3293 = vmatpush1.bf16.msra.mxu0 0
        %3294 = vmatprep.subr.bf16.mxu0 0
        %3295 = vmatpush1.bf16.msra.mxu0 0
        %3296 = vmatprep.subr.bf16.mxu0 0
        %3297 = vmatpush1.bf16.msra.mxu0 0
        %3298 = vmatprep.subr.bf16.mxu0 0
        %3299 = vmatpush1.bf16.msra.mxu0 0
        %3300 = vmatprep.subr.bf16.mxu0 0
        %3301 = vmatpush1.bf16.msra.mxu0 0
        %3302 = vmatprep.mubr.bf16.mxu0 0
        %3303 = vmatmul.mubr.bf16.gmra.mrb[0].mxu0 %v2514
        %v3304 = vpop.f32.mrb[0].mxu0
        %v3305 = vadd.f32 0.0, %v3304
        %v3306 = vpop.f32.mrb[0].mxu0
        %v3307 = vpop.f32.mrb[0].mxu0
        %v3308 = vadd.f32 0.0, %v3307
        %v3309 = vpop.f32.mrb[0].mxu0
        %3310 = vmatprep.mubr.bf16.mxu0 0
        %3311 = vmatmul.mubr.bf16.gmra.mrb[0].mxu0 %v2517
        %v3312 = vpop.f32.mrb[0].mxu0
        %v3313 = vadd.f32 0.0, %v3312
        %v3314 = vpop.f32.mrb[0].mxu0
        %v3315 = vpop.f32.mrb[0].mxu0
        %v3316 = vadd.f32 0.0, %v3315
        %v3317 = vpop.f32.mrb[0].mxu0
        %3318 = vmatprep.mubr.bf16.mxu0 0
        %3319 = vmatmul.mubr.bf16.gmra.mrb[0].mxu0 %v2520
        %v3320 = vpop.f32.mrb[0].mxu0
        %v3321 = vadd.f32 0.0, %v3320
        %v3322 = vpop.f32.mrb[0].mxu0
        %v3323 = vpop.f32.mrb[0].mxu0
        %v3324 = vadd.f32 0.0, %v3323
        %v3325 = vpop.f32.mrb[0].mxu0
        %3326 = vmatprep.mubr.bf16.mxu0 0
        %3327 = vmatmul.mubr.bf16.gmra.mrb[0].mxu0 %v3265
        %v3328 = vpop.f32.mrb[0].mxu0
        %v3329 = vadd.f32 0.0, %v3328
        %v3330 = vpop.f32.mrb[0].mxu0
        %v3331 = vpop.f32.mrb[0].mxu0
        %v3332 = vadd.f32 0.0, %v3331
        %v3333 = vpop.f32.mrb[0].mxu0
        %3334 = vdwg.mxu0
        %v3335 = vadd.f32 %v3251, %v3305
        %v3336 = vadd.f32 %v3252, %v3308
        %v3337 = vadd.f32 %v3253, %v3313
        %v3338 = vadd.f32 %v3254, %v3316
        %v3339 = vadd.f32 %v3255, %v3321
        %v3340 = vadd.f32 %v3256, %v3324
        %v3341 = vadd.f32 %v3257, %v3329
        %v3342 = vadd.f32 %v3258, %v3332
        %v3344 = vshrl.u32 %v415, 16
        %v3346 = vrot.slane %v3344, 4
        %v3347 = vshll.u32 %v415, 16
        %v3349 = vrot.slane %v3347, 5
        %v3350 = vor.u32 %v3346, %v3349
        %v3351 = vrot.slane %v3350, 4
        %v3353 = vshll.u32 %v416, 16
        %v3355 = vrot.slane %v3353, 5
        %v3356 = vsel %vm420, %v3351, %v3355
        %s3357 = scalar_lea.vmem %s3, 50
        %v3358 = vld [vmem:[%s3357] sm:$0x3]
        %v3359 = vunpack.c.l.b16 %v3356
        %v3360 = vpack.c.b16 %v3359, %v3066
        %v3362 = vsel %vm547, %v3360, 0
        %v3365 = vsel %vm560, %v3358, 0
        %3367 = vmatprep.subr.bf16.mxu0 0
        %3368 = vmatpush1.bf16.msra.mxu0 %v3365
        %3369 = vmatprep.subr.bf16.mxu0 0
        %3370 = vmatpush1.bf16.msra.mxu0 0
        %3371 = vmatprep.subr.bf16.mxu0 0
        %3372 = vmatpush1.bf16.msra.mxu0 0
        %3373 = vmatprep.subr.bf16.mxu0 0
        %3374 = vmatpush1.bf16.msra.mxu0 0
        %3375 = vmatprep.subr.bf16.mxu0 0
        %3376 = vmatpush1.bf16.msra.mxu0 0
        %3377 = vmatprep.subr.bf16.mxu0 0
        %3378 = vmatpush1.bf16.msra.mxu0 0
        %3379 = vmatprep.subr.bf16.mxu0 0
        %3380 = vmatpush1.bf16.msra.mxu0 0
        %3381 = vmatprep.subr.bf16.mxu0 0
        %3382 = vmatpush1.bf16.msra.mxu0 0
        %3383 = vmatprep.subr.bf16.mxu0 0
        %3384 = vmatpush1.bf16.msra.mxu0 0
        %3385 = vmatprep.subr.bf16.mxu0 0
        %3386 = vmatpush1.bf16.msra.mxu0 0
        %3387 = vmatprep.subr.bf16.mxu0 0
        %3388 = vmatpush1.bf16.msra.mxu0 0
        %3389 = vmatprep.subr.bf16.mxu0 0
        %3390 = vmatpush1.bf16.msra.mxu0 0
        %3391 = vmatprep.subr.bf16.mxu0 0
        %3392 = vmatpush1.bf16.msra.mxu0 0
        %3393 = vmatprep.subr.bf16.mxu0 0
        %3394 = vmatpush1.bf16.msra.mxu0 0
        %3395 = vmatprep.subr.bf16.mxu0 0
        %3396 = vmatpush1.bf16.msra.mxu0 0
        %3397 = vmatprep.subr.bf16.mxu0 0
        %3398 = vmatpush1.bf16.msra.mxu0 0
        %3399 = vmatprep.mubr.bf16.mxu0 0
        %3400 = vmatmul.mubr.bf16.gmra.mrb[0].mxu0 %v2728
        %v3401 = vpop.f32.mrb[0].mxu0
        %v3402 = vadd.f32 0.0, %v3401
        %v3403 = vpop.f32.mrb[0].mxu0
        %v3404 = vpop.f32.mrb[0].mxu0
        %v3405 = vadd.f32 0.0, %v3404
        %v3406 = vpop.f32.mrb[0].mxu0
        %3407 = vmatprep.mubr.bf16.mxu0 0
        %3408 = vmatmul.mubr.bf16.gmra.mrb[0].mxu0 %v2731
        %v3409 = vpop.f32.mrb[0].mxu0
        %v3410 = vadd.f32 0.0, %v3409
        %v3411 = vpop.f32.mrb[0].mxu0
        %v3412 = vpop.f32.mrb[0].mxu0
        %v3413 = vadd.f32 0.0, %v3412
        %v3414 = vpop.f32.mrb[0].mxu0
        %3415 = vmatprep.mubr.bf16.mxu0 0
        %3416 = vmatmul.mubr.bf16.gmra.mrb[0].mxu0 %v2734
        %v3417 = vpop.f32.mrb[0].mxu0
        %v3418 = vadd.f32 0.0, %v3417
        %v3419 = vpop.f32.mrb[0].mxu0
        %v3420 = vpop.f32.mrb[0].mxu0
        %v3421 = vadd.f32 0.0, %v3420
        %v3422 = vpop.f32.mrb[0].mxu0
        %3423 = vmatprep.mubr.bf16.mxu0 0
        %3424 = vmatmul.mubr.bf16.gmra.mrb[0].mxu0 %v3362
        %v3425 = vpop.f32.mrb[0].mxu0
        %v3426 = vadd.f32 0.0, %v3425
        %v3427 = vpop.f32.mrb[0].mxu0
        %v3428 = vpop.f32.mrb[0].mxu0
        %v3429 = vadd.f32 0.0, %v3428
        %v3430 = vpop.f32.mrb[0].mxu0
        %3431 = vdwg.mxu0
        %v3432 = vadd.f32 %v3335, %v3402
        %v3433 = vadd.f32 %v3336, %v3405
        %v3434 = vadd.f32 %v3337, %v3410
        %v3435 = vadd.f32 %v3338, %v3413
        %v3436 = vadd.f32 %v3339, %v3418
        %v3437 = vadd.f32 %v3340, %v3421
        %v3438 = vadd.f32 %v3341, %v3426
        %v3439 = vadd.f32 %v3342, %v3429
        %v3441 = vrot.slane %v415, 5
        %v3442 = vrot.slane %v3441, 4
        %v3443 = vrot.slane %v416, 5
        %v3444 = vsel %vm739, %v3442, %v3443
        %s3445 = scalar_lea.vmem %s3, 52
        %v3446 = vld [vmem:[%s3445] sm:$0x3]
        %v3447 = vunpack.c.l.b16 %v3444
        %v3448 = vpack.c.b16 %v3447, %v3166
        %v3450 = vsel %vm547, %v3448, 0
        %v3453 = vsel %vm560, %v3446, 0
        %3455 = vmatprep.subr.bf16.mxu0 0
        %3456 = vmatpush1.bf16.msra.mxu0 %v3453
        %3457 = vmatprep.subr.bf16.mxu0 0
        %3458 = vmatpush1.bf16.msra.mxu0 0
        %3459 = vmatprep.subr.bf16.mxu0 0
        %3460 = vmatpush1.bf16.msra.mxu0 0
        %3461 = vmatprep.subr.bf16.mxu0 0
        %3462 = vmatpush1.bf16.msra.mxu0 0
        %3463 = vmatprep.subr.bf16.mxu0 0
        %3464 = vmatpush1.bf16.msra.mxu0 0
        %3465 = vmatprep.subr.bf16.mxu0 0
        %3466 = vmatpush1.bf16.msra.mxu0 0
        %3467 = vmatprep.subr.bf16.mxu0 0
        %3468 = vmatpush1.bf16.msra.mxu0 0
        %3469 = vmatprep.subr.bf16.mxu0 0
        %3470 = vmatpush1.bf16.msra.mxu0 0
        %3471 = vmatprep.subr.bf16.mxu0 0
        %3472 = vmatpush1.bf16.msra.mxu0 0
        %3473 = vmatprep.subr.bf16.mxu0 0
        %3474 = vmatpush1.bf16.msra.mxu0 0
        %3475 = vmatprep.subr.bf16.mxu0 0
        %3476 = vmatpush1.bf16.msra.mxu0 0
        %3477 = vmatprep.subr.bf16.mxu0 0
        %3478 = vmatpush1.bf16.msra.mxu0 0
        %3479 = vmatprep.subr.bf16.mxu0 0
        %3480 = vmatpush1.bf16.msra.mxu0 0
        %3481 = vmatprep.subr.bf16.mxu0 0
        %3482 = vmatpush1.bf16.msra.mxu0 0
        %3483 = vmatprep.subr.bf16.mxu0 0
        %3484 = vmatpush1.bf16.msra.mxu0 0
        %3485 = vmatprep.subr.bf16.mxu0 0
        %3486 = vmatpush1.bf16.msra.mxu0 0
        %3487 = vmatprep.mubr.bf16.mxu0 0
        %3488 = vmatmul.mubr.bf16.gmra.mrb[0].mxu0 %v2870
        %v3489 = vpop.f32.mrb[0].mxu0
        %v3490 = vadd.f32 0.0, %v3489
        %v3491 = vpop.f32.mrb[0].mxu0
        %v3492 = vpop.f32.mrb[0].mxu0
        %v3493 = vadd.f32 0.0, %v3492
        %v3494 = vpop.f32.mrb[0].mxu0
        %3495 = vmatprep.mubr.bf16.mxu0 0
        %3496 = vmatmul.mubr.bf16.gmra.mrb[0].mxu0 %v2873
        %v3497 = vpop.f32.mrb[0].mxu0
        %v3498 = vadd.f32 0.0, %v3497
        %v3499 = vpop.f32.mrb[0].mxu0
        %v3500 = vpop.f32.mrb[0].mxu0
        %v3501 = vadd.f32 0.0, %v3500
        %v3502 = vpop.f32.mrb[0].mxu0
        %3503 = vmatprep.mubr.bf16.mxu0 0
        %3504 = vmatmul.mubr.bf16.gmra.mrb[0].mxu0 %v2876
        %v3505 = vpop.f32.mrb[0].mxu0
        %v3506 = vadd.f32 0.0, %v3505
        %v3507 = vpop.f32.mrb[0].mxu0
        %v3508 = vpop.f32.mrb[0].mxu0
        %v3509 = vadd.f32 0.0, %v3508
        %v3510 = vpop.f32.mrb[0].mxu0
        %3511 = vmatprep.mubr.bf16.mxu0 0
        %3512 = vmatmul.mubr.bf16.gmra.mrb[0].mxu0 %v3450
        %v3513 = vpop.f32.mrb[0].mxu0
        %v3514 = vadd.f32 0.0, %v3513
        %v3515 = vpop.f32.mrb[0].mxu0
        %v3516 = vpop.f32.mrb[0].mxu0
        %v3517 = vadd.f32 0.0, %v3516
        %v3518 = vpop.f32.mrb[0].mxu0
        %3519 = vdwg.mxu0
        %v3520 = vadd.f32 %v3432, %v3490
        %v3521 = vadd.f32 %v3433, %v3493
        %v3522 = vadd.f32 %v3434, %v3498
        %v3523 = vadd.f32 %v3435, %v3501
        %v3524 = vadd.f32 %v3436, %v3506
        %v3525 = vadd.f32 %v3437, %v3509
        %v3526 = vadd.f32 %v3438, %v3514
        %v3527 = vadd.f32 %v3439, %v3517
        %vm3528 = vcmask 64512
        %3529 = vst.msk [vmem:[%s355] sm:$0xff] %vm3528, %v3520
        %3530 = vst.msk [vmem:[%s355 + $0x8] sm:$0xff] %vm3528, %v3521
        %3531 = vst.msk [vmem:[%s355 + $0x10] sm:$0xff] %vm3528, %v3522
        %3532 = vst.msk [vmem:[%s355 + $0x18] sm:$0xff] %vm3528, %v3523
        %3533 = vst.msk [vmem:[%s355 + $0x20] sm:$0xff] %vm3528, %v3524
        %3534 = vst.msk [vmem:[%s355 + $0x28] sm:$0xff] %vm3528, %v3525
        %3535 = vst.msk [vmem:[%s355 + $0x30] sm:$0xff] %vm3528, %v3526
        %3536 = vst.msk [vmem:[%s355 + $0x38] sm:$0xff] %vm3528, %v3527
        %v3537 = vsel %vm3528, %v3520, 0.0
        %v3538 = vsel %vm3528, %v3521, 0.0
        %v3539 = vadd.f32 %v3537, %v3538
        %v3540 = vsel %vm3528, %v3522, 0.0
        %v3541 = vadd.f32 %v3539, %v3540
        %v3542 = vsel %vm3528, %v3523, 0.0
        %v3543 = vadd.f32 %v3541, %v3542
        %v3544 = vsel %vm3528, %v3524, 0.0
        %v3545 = vadd.f32 %v3543, %v3544
        %v3546 = vsel %vm3528, %v3525, 0.0
        %v3547 = vadd.f32 %v3545, %v3546
        %v3548 = vsel %vm3528, %v3526, 0.0
        %v3549 = vadd.f32 %v3547, %v3548
        %v3550 = vsel %vm3528, %v3527, 0.0
        %v3551 = vadd.f32 %v3549, %v3550
        %v3552 = vrot.slane %v3551, 4
        %v3553 = vadd.f32 %v3551, %v3552
        %v3554 = vrot.slane %v3553, 2
        %v3555 = vadd.f32 %v3553, %v3554
        %v3556 = vrot.slane %v3555, 1
        %v3557 = vadd.f32 %v3555, %v3556
        %v3558 = vmul.f32 %v3520, %v3520
        %v3559 = vmul.f32 %v3521, %v3521
        %v3560 = vmul.f32 %v3522, %v3522
        %v3561 = vmul.f32 %v3523, %v3523
        %v3562 = vmul.f32 %v3524, %v3524
        %v3563 = vmul.f32 %v3525, %v3525
        %v3564 = vmul.f32 %v3526, %v3526
        %v3565 = vmul.f32 %v3527, %v3527
        %v3566 = vsel %vm3528, %v3558, 0.0
        %v3567 = vsel %vm3528, %v3559, 0.0
        %v3568 = vadd.f32 %v3566, %v3567
        %v3569 = vsel %vm3528, %v3560, 0.0
        %v3570 = vadd.f32 %v3568, %v3569
        %v3571 = vsel %vm3528, %v3561, 0.0
        %v3572 = vadd.f32 %v3570, %v3571
        %v3573 = vsel %vm3528, %v3562, 0.0
        %v3574 = vadd.f32 %v3572, %v3573
        %v3575 = vsel %vm3528, %v3563, 0.0
        %v3576 = vadd.f32 %v3574, %v3575
        %v3577 = vsel %vm3528, %v3564, 0.0
        %v3578 = vadd.f32 %v3576, %v3577
        %v3579 = vsel %vm3528, %v3565, 0.0
        %v3580 = vadd.f32 %v3578, %v3579
        %v3581 = vrot.slane %v3580, 4
        %v3582 = vadd.f32 %v3580, %v3581
        %v3583 = vrot.slane %v3582, 2
        %v3584 = vadd.f32 %v3582, %v3583
        %v3585 = vrot.slane %v3584, 1
        %v3586 = vadd.f32 %v3584, %v3585
        %vm3587 = vcmask 1040384
        %v3588 = vsel %vm3587, %v3557, %v3586
        %vm3589 = vcmask 58368
        %3590 = vst.msk [vmem:[%s315] sm:$0x3] %vm3589, %v3588
        %p3591 = scmp.lt.s32.totalorder %s24, 1
        %s3592 = scalar_select %p3591, %s24, 1
        %p3593 = scmp.lt.s32.totalorder %s25, 7
        %s3594 = scalar_select %p3593, %s25, 7
        %s3595 = smul.addr %s3594, 8
        %s3596 = smul.addr %s3592, 64
        %s3597 = sadd.s32 %s3595, %s3596
        %s3598 = smul.addr %s3597, 8
        %s3599 = scalar_lea.vmem %s4, %s3598
        %s3600 = sand.u32 %s179, 1
        %s3601 = scalar_lea.sflag [#allocation3], %s3600
        %s3602 = sand.u32 %s179, 1
        %s3603 = smul.addr %s3602, 2
        %s3604 = scalar_lea.vmem [#allocation2], %s3603
        // Predicated region
        $region37: #{tpu_custom_call.1} parent=35 // pred_check
          %p3605 = pneg %p161
        $region38: #{tpu_custom_call.1} parent=35 // pred_check_branch
          %3607 = sbr.rel (%p3605) target = $region40
        $region39: #{tpu_custom_call.1} parent=35 // pred_region
          _
        $region40: #{tpu_custom_call.1} parent=35 // pred_fallthru
          _
        // Predicated region
        $region41: #{tpu_custom_call.1} parent=35 // pred_check
          %p3608 = pneg %p189
        $region42: #{tpu_custom_call.1} parent=35 // pred_check_branch
          %3610 = sbr.rel (%p3608) target = $region44
        $region43: #{tpu_custom_call.1} parent=35 // pred_region
          %s3612 = ssub.s32 32, 32
          %3613 = vsyncadd %s3601, %s3612
          %s3614 = smul.addr %s24, 8
          %s3615 = sadd.s32 %s25, %s3614
          %s3616 = smul.addr %s3615, 32
          %s3617 = scalar_lea.hbm %s5, %s3616
          %s3619 = sshll.u32 %s3604, 4
          %s3620 = int_to_ptr.vmem [resolvable:$true] %s3619
          %3622 = dma.vmem_to_hbm [thread:$0]  %s3620, 32, %s3617, %s3601
        $region44: #{tpu_custom_call.1} parent=35 // pred_fallthru
          _
      $region36: #{tpu_custom_call.1} parent=5 // pred_fallthru
        _
      %p3623 = scmp.le.s32.totalorder 2, %s15
      // Predicated region
      $region45: #{tpu_custom_call.1} parent=5 // pred_check
        %p3624 = pneg %p3623
      $region46: #{tpu_custom_call.1} parent=5 // pred_check_branch
        %3626 = sbr.rel (%p3624) target = $region48
      $region47: #{tpu_custom_call.1} parent=5 // pred_region
        %s3627 = ssub.s32 %s15, 2
        // Predicated region
        $region49: #{tpu_custom_call.1} parent=47 // pred_check
          %p3628 = pneg %p167
        $region50: #{tpu_custom_call.1} parent=47 // pred_check_branch
          %3630 = sbr.rel (%p3628) target = $region52
        $region51: #{tpu_custom_call.1} parent=47 // pred_region
          %p3631 = scmp.lt.s32.totalorder %s26, 1
          %s3632 = scalar_select %p3631, %s26, 1
          %p3633 = scmp.lt.s32.totalorder %s27, 7
          %s3634 = scalar_select %p3633, %s27, 7
          %s3635 = smul.addr %s3634, 8
          %s3636 = smul.addr %s3632, 64
          %s3637 = sadd.s32 %s3635, %s3636
          %s3638 = smul.addr %s3637, 8
          %s3639 = scalar_lea.vmem %s4, %s3638
        $region52: #{tpu_custom_call.1} parent=47 // pred_fallthru
          _
        // Predicated region
        $region53: #{tpu_custom_call.1} parent=47 // pred_check
          %p3640 = pneg %p195
        $region54: #{tpu_custom_call.1} parent=47 // pred_check_branch
          %3642 = sbr.rel (%p3640) target = $region56
        $region55: #{tpu_custom_call.1} parent=47 // pred_region
          %s3643 = sand.u32 %s180, 1
          %s3644 = scalar_lea.sflag [#allocation3], %s3643
          %s3645 = sand.u32 %s180, 1
          %s3646 = smul.addr %s3645, 2
          %s3647 = scalar_lea.vmem [#allocation2], %s3646
          %3648 = dma.done %s3644, 32
        $region56: #{tpu_custom_call.1} parent=47 // pred_fallthru
          _
      $region48: #{tpu_custom_call.1} parent=5 // pred_fallthru
        _
    $region6: #{tpu_custom_call.1} parent=1 // loop_footer
      %s19 = sadd.s32 1, %s15
    $region7: #{tpu_custom_call.1} parent=1 // loop_footer_branch
      %14 = sbr.rel target = $region3
    $region8: #{tpu_custom_call.1} parent=1 // loop_exit
      _
    %3649 = vsyncpa [#allocation3], 1
    %s3650 = scalar_lea.sflag [#allocation3], 1
    %3651 = vsyncpa %s3650, 1

</llo_original>
